<compile_context>
chip_gen: v6e
topology: v6e:2x2x1
jax: 0.10.0
libtpu: 0.0.40
codegen_flags: <defaults>
</compile_context>

<pallas_src>
import functools

import jax
import jax.numpy as jnp
from jax import lax
from jax.experimental import pallas as pl
from jax.experimental.pallas import tpu as pltpu


# ----------------------------------------------------------------------------
# Tile sizing helpers
# ----------------------------------------------------------------------------
def _tile(dim_size, desired, granule):
    """Largest tile <= desired dividing dim_size, multiple of granule, else full."""
    if dim_size <= desired:
        return dim_size
    t = (desired // granule) * granule
    while t >= granule:
        if dim_size % t == 0:
            return t
        t -= granule
    return dim_size  # full-extent block is always legal


def _tile_parallel(dim_size, desired, granule):
    """Like _tile, but prefers >= 2 blocks along the axis (v7x: 2 TensorCores)."""
    t = _tile(dim_size, desired, granule)
    if dim_size // t < 2 and dim_size >= 2 * granule:
        half = _tile(dim_size, max(granule, (dim_size // 2 // granule) * granule),
                     granule)
        if dim_size // half >= 2:
            t = half
    return t


# ----------------------------------------------------------------------------
# Tiled matmul kernel: o = act(x @ w + b), bf16 MXU operands, f32 accumulator,
# output dtype selectable (bf16 for intermediates, f32 for the final head).
# ----------------------------------------------------------------------------
def _matmul_kernel(x_ref, w_ref, b_ref, o_ref, acc_ref, *, activation):
    @pl.when(pl.program_id(2) == 0)
    def _():
        acc_ref[...] = jnp.zeros_like(acc_ref)

    acc_ref[...] += jnp.dot(x_ref[...], w_ref[...],
                            preferred_element_type=jnp.float32)

    @pl.when(pl.program_id(2) == pl.num_programs(2) - 1)
    def _():
        acc = acc_ref[...] + b_ref[...]
        if activation == "softplus":
            # numerically stable softplus in f32 (VPU/EUP)
            acc = jnp.maximum(acc, 0.0) + jnp.log1p(jnp.exp(-jnp.abs(acc)))
        o_ref[...] = acc.astype(o_ref.dtype)


def pallas_matmul(x, w, b, *, activation=None, out_dtype=jnp.bfloat16,
                  tm=256, tn=256, tk=512):
    M, K = x.shape
    K2, N = w.shape
    assert K == K2
    tm = _tile_parallel(M, tm, 8)
    tn = _tile(N, tn, 128)
    tk = _tile(K, tk, 128)
    grid = (M // tm, N // tn, K // tk)

    if x.dtype != jnp.bfloat16:
        x = x.astype(jnp.bfloat16)
    if w.dtype != jnp.bfloat16:
        w = w.astype(jnp.bfloat16)
    b2 = b.reshape(1, N).astype(jnp.float32)

    kernel = functools.partial(_matmul_kernel, activation=activation)
    return pl.pallas_call(
        kernel,
        out_shape=jax.ShapeDtypeStruct((M, N), out_dtype),
        grid=grid,
        in_specs=[
            pl.BlockSpec((tm, tk), lambda i, j, k: (i, k)),
            pl.BlockSpec((tk, tn), lambda i, j, k: (k, j)),
            pl.BlockSpec((1, tn), lambda i, j, k: (0, j)),
        ],
        out_specs=pl.BlockSpec((tm, tn), lambda i, j, k: (i, j)),
        scratch_shapes=[pltpu.VMEM((tm, tn), jnp.float32)],
        compiler_params=pltpu.CompilerParams(
            dimension_semantics=("parallel", "parallel", "arbitrary"),
            vmem_limit_bytes=32 * 1024 * 1024),
    )(x, w, b2)


# ----------------------------------------------------------------------------
# Fused Downsample + AttentionBlock + Upsample kernel (one batch per grid step)
#
#   xr_ref : (1, T, 4*dim)  bf16  2x2-patch rows of the patch-embedded map
#   ds_w   : (4*dim, C)     bf16  Downsample Conv2d(dim, C=2*dim, 2, s=2)
#   qkv_w  : (C, 3*Dp)      bf16  q|k|v, each zero-padded to Dp=128 lanes,
#                                 1/sqrt(C) folded into the q columns
#   wo_w   : (Dp, C)        bf16  output projection (rows C..Dp zero)
#   up_w   : (C, 4*dim)     bf16  Upsample ConvTranspose2d(C, dim, 2, s=2)
#   out    : (1, T, 4*dim)  bf16  upsampled patch rows
# ----------------------------------------------------------------------------
def _attn_block_kernel(xr_ref, dsw_ref, dsb_ref, qkvw_ref, qkvb_ref,
                       wow_ref, wob_ref, upw_ref, upb_ref, o_ref, *, dp):
    xr = xr_ref[0]                                              # (T, 4*dim) bf16

    # Downsample conv (as matmul) -> attention tokens, f32
    tok = jnp.dot(xr, dsw_ref[...], preferred_element_type=jnp.float32)
    tok = tok + dsb_ref[...]                                    # (T, C)

    # Fused QKV projection; 128-lane-aligned splits (no relayout)
    qkv = jnp.dot(tok.astype(jnp.bfloat16), qkvw_ref[...],
                  preferred_element_type=jnp.float32) + qkvb_ref[...]
    q = qkv[:, 0 * dp:1 * dp].astype(jnp.bfloat16)              # scale pre-folded
    k = qkv[:, 1 * dp:2 * dp].astype(jnp.bfloat16)
    v = qkv[:, 2 * dp:3 * dp].astype(jnp.bfloat16)

    # Scores + softmax (padded lanes are zero in both q and k -> no effect)
    s = lax.dot_general(q, k, (((1,), (1,)), ((), ())),
                        preferred_element_type=jnp.float32)     # (T, T)
    s = s - s.max(axis=-1, keepdims=True)
    p = jnp.exp(s)
    p = p * pl.reciprocal(p.sum(axis=-1, keepdims=True), approx=True)

    av = jnp.dot(p.astype(jnp.bfloat16), v,
                 preferred_element_type=jnp.float32)            # (T, Dp)

    # Output projection + residual
    tok2 = jnp.dot(av.astype(jnp.bfloat16), wow_ref[...],
                   preferred_element_type=jnp.float32)
    tok2 = tok2 + wob_ref[...] + tok                            # (T, C)

    # Upsample ConvTranspose (as matmul)
    up = jnp.dot(tok2.astype(jnp.bfloat16), upw_ref[...],
                 preferred_element_type=jnp.float32) + upb_ref[...]
    o_ref[0] = up.astype(o_ref.dtype)


def pallas_attention_block(ds_rows, p, *, dp=128):
    B, T, Kin = ds_rows.shape
    C = p["ds_w"].shape[1]
    Nup = p["up_w"].shape[1]
    kernel = functools.partial(_attn_block_kernel, dp=dp)
    return pl.pallas_call(
        kernel,
        out_shape=jax.ShapeDtypeStruct((B, T, Nup), jnp.bfloat16),
        grid=(B,),
        in_specs=[
            pl.BlockSpec((1, T, Kin), lambda b: (b, 0, 0)),
            pl.BlockSpec(p["ds_w"].shape, lambda b: (0, 0)),
            pl.BlockSpec((1, C), lambda b: (0, 0)),
            pl.BlockSpec(p["qkv_w"].shape, lambda b: (0, 0)),
            pl.BlockSpec((1, 3 * dp), lambda b: (0, 0)),
            pl.BlockSpec(p["wo_w"].shape, lambda b: (0, 0)),
            pl.BlockSpec((1, C), lambda b: (0, 0)),
            pl.BlockSpec(p["up_w"].shape, lambda b: (0, 0)),
            pl.BlockSpec((1, Nup), lambda b: (0, 0)),
        ],
        out_specs=pl.BlockSpec((1, T, Nup), lambda b: (b, 0, 0)),
        compiler_params=pltpu.CompilerParams(
            dimension_semantics=("parallel",),
            vmem_limit_bytes=32 * 1024 * 1024),
    )(ds_rows, p["ds_w"], p["ds_b"], p["qkv_w"], p["qkv_b"],
      p["wo_w"], p["wo_b"], p["up_w"], p["up_b"])


# ----------------------------------------------------------------------------
# NHWC layout glue (pure JAX, single pass — no NCHW round trips)
# ----------------------------------------------------------------------------
def nhwc_patches_as_rows(x, p):
    """Non-overlapping p x p patches of NHWC -> rows with cols (ph, pw, c)."""
    B, H, W, Cc = x.shape
    nH, nW = H // p, W // p
    t = x.reshape(B, nH, p, nW, p, Cc).transpose(0, 1, 3, 2, 4, 5)
    return t.reshape(B * nH * nW, p * p * Cc), (nH, nW)


def nhwc_rows_to_upsampled(y, B, h, w, out_c, p):
    """ConvTranspose(k=s=p) rows (cols ordered (ph, pw, out)) -> NHWC."""
    t = y.reshape(B, h, w, p, p, out_c).transpose(0, 1, 3, 2, 4, 5)
    return t.reshape(B, h * p, w * p, out_c)


# ----------------------------------------------------------------------------
# Parameters (deterministic, PyTorch-layout) and one-time preparation
# ----------------------------------------------------------------------------
def init_params(key, c_in, dim):
    ks = jax.random.split(key, 18)
    C = 2 * dim

    def nrm(k, shape, fan_in):
        return jax.random.normal(k, shape, jnp.float32) / jnp.sqrt(float(fan_in))

    p = {}
    p["pe_w"] = nrm(ks[0], (dim, c_in, 4, 4), c_in * 16)      # Conv2d (out,in,kh,kw)
    p["pe_b"] = nrm(ks[1], (dim,), dim)
    p["ds_w"] = nrm(ks[2], (C, dim, 2, 2), dim * 4)           # Conv2d
    p["ds_b"] = nrm(ks[3], (C,), C)
    p["wq"] = nrm(ks[4], (C, C), C); p["bq"] = nrm(ks[5], (C,), C)   # (in,out)
    p["wk"] = nrm(ks[6], (C, C), C); p["bk"] = nrm(ks[7], (C,), C)
    p["wv"] = nrm(ks[8], (C, C), C); p["bv"] = nrm(ks[9], (C,), C)
    p["wo"] = nrm(ks[10], (C, C), C); p["bo"] = nrm(ks[11], (C,), C)
    p["up_w"] = nrm(ks[12], (C, dim, 2, 2), C)                # ConvT (in,out,kh,kw)
    p["up_b"] = nrm(ks[13], (dim,), dim)
    p["pr_w"] = nrm(ks[14], (C, dim, 4, 4), C)                # ConvT (in,out,kh,kw)
    p["pr_b"] = nrm(ks[15], (dim,), dim)
    p["head_w"] = nrm(ks[16], (2, dim, 5, 5), dim * 25)       # alpha+beta stacked
    p["head_b"] = nrm(ks[17], (2,), dim)
    return p


def prepare_params(p, dim, dp=128, head_pad=128):
    """One-time weight re-layout (outside jit): matmul-ready bf16 weights,
    128-lane-padded QKV with the attention scale folded in."""
    C = 2 * dim
    scale = float(C) ** -0.5
    pad_n = dp - C
    q = {}
    # PatchEmbedding Conv2d k=s=4: (out,in,kh,kw) -> (kh*kw*in, out)
    q["pe_w"] = p["pe_w"].transpose(2, 3, 1, 0).reshape(-1, dim).astype(jnp.bfloat16)
    q["pe_b"] = p["pe_b"].astype(jnp.float32)
    # Downsample Conv2d k=s=2
    q["ds_w"] = p["ds_w"].transpose(2, 3, 1, 0).reshape(-1, C).astype(jnp.bfloat16)
    q["ds_b"] = p["ds_b"].reshape(1, C).astype(jnp.float32)
    # Fused QKV: each projection zero-padded C -> dp lanes; 1/sqrt(C) folded into q
    wq = p["wq"] * scale
    bq = p["bq"] * scale
    q["qkv_w"] = jnp.concatenate([
        jnp.pad(wq, ((0, 0), (0, pad_n))),
        jnp.pad(p["wk"], ((0, 0), (0, pad_n))),
        jnp.pad(p["wv"], ((0, 0), (0, pad_n)))], axis=1).astype(jnp.bfloat16)
    q["qkv_b"] = jnp.concatenate([
        jnp.pad(bq, (0, pad_n)),
        jnp.pad(p["bk"], (0, pad_n)),
        jnp.pad(p["bv"], (0, pad_n))]).reshape(1, 3 * dp).astype(jnp.float32)
    # Output projection: zero-pad the contraction dim C -> dp
    q["wo_w"] = jnp.pad(p["wo"], ((0, pad_n), (0, 0))).astype(jnp.bfloat16)
    q["wo_b"] = p["bo"].reshape(1, C).astype(jnp.float32)
    # Upsample ConvT k=s=2: (in,out,kh,kw) -> (in, kh*kw*out); bias tiled (out fastest)
    q["up_w"] = p["up_w"].transpose(0, 2, 3, 1).reshape(C, -1).astype(jnp.bfloat16)
    q["up_b"] = jnp.tile(p["up_b"], 4).reshape(1, -1).astype(jnp.float32)
    # PatchRecovery ConvT k=s=4
    q["pr_w"] = p["pr_w"].transpose(0, 2, 3, 1).reshape(C, -1).astype(jnp.bfloat16)
    q["pr_b"] = jnp.tile(p["pr_b"], 16).astype(jnp.float32)
    # alpha/beta heads fused: (out,in,kh,kw) -> (kh*kw*in, out), out lane-padded 2 -> 128
    hw = p["head_w"].transpose(2, 3, 1, 0).reshape(25 * dim, 2)
    q["head_w"] = jnp.pad(hw, ((0, 0), (0, head_pad - 2))).astype(jnp.bfloat16)
    q["head_b"] = jnp.pad(p["head_b"], (0, head_pad - 2)).astype(jnp.float32)
    return q


# ----------------------------------------------------------------------------
# SimpleNet forward (NHWC internally; NCHW at the PyTorch-facing boundary)
# ----------------------------------------------------------------------------
def simplenet_forward(x, p, dim=32):
    B = x.shape[0]
    xh = x.transpose(0, 2, 3, 1).astype(jnp.bfloat16)             # NCHW -> NHWC, once

    # PatchEmbedding: Conv2d(C_in, dim, 4, stride=4)
    rows, (nH, nW) = nhwc_patches_as_rows(xh, 4)
    x1 = pallas_matmul(rows, p["pe_w"], p["pe_b"]).reshape(B, nH, nW, dim)
    x_skip = x1

    # Downsample + AttentionBlock + Upsample: ONE fused pallas_call (grid over B)
    ds_rows, (h2, w2) = nhwc_patches_as_rows(x1, 2)
    T = h2 * w2
    ds_rows = ds_rows.reshape(B, T, 4 * dim)
    up_rows = pallas_attention_block(ds_rows, p)                  # (B, T, 4*dim) bf16
    x4 = nhwc_rows_to_upsampled(up_rows.reshape(B * T, 4 * dim), B, h2, w2, dim, 2)

    # Skip concat (channels-last == torch.cat(dim=1) in NCHW)
    x5 = jnp.concatenate([x4, x_skip], axis=-1)                   # (B, H/4, W/4, 2*dim)

    # PatchRecovery: ConvTranspose2d(2*dim, dim, 4, stride=4)
    y = pallas_matmul(x5.reshape(B * nH * nW, 2 * dim), p["pr_w"], p["pr_b"])
    x6 = nhwc_rows_to_upsampled(y, B, nH, nW, dim, 4)             # (B, H, W, dim) bf16

    # alpha/beta heads: Conv2d(dim, 1, 5, pad=2) + Softplus as one K=25*dim matmul
    Hh, Wh = x6.shape[1], x6.shape[2]
    xp = jnp.pad(x6, ((0, 0), (2, 2), (2, 2), (0, 0)))
    cols = [xp[:, dh:dh + Hh, dw:dw + Wh, :]
            for dh in range(5) for dw in range(5)]
    im2col = jnp.concatenate(cols, axis=-1).reshape(B * Hh * Wh, 25 * dim)
    heads = pallas_matmul(im2col, p["head_w"], p["head_b"],
                          activation="softplus", out_dtype=jnp.float32)
    heads = heads.reshape(B, Hh, Wh, -1)
    alpha = heads[..., 0:1].transpose(0, 3, 1, 2)                 # NCHW outputs
    beta = heads[..., 1:2].transpose(0, 3, 1, 2)
    return alpha, beta


if __name__ == "__main__":
    dim = 32
    key = jax.random.PRNGKey(0)
    pkey, xkey = jax.random.split(key)
    raw_params = init_params(pkey, c_in=4, dim=dim)
    params = prepare_params(raw_params, dim)                      # one-time, outside jit
    x = jax.random.normal(xkey, (2, 4, 16, 16), jnp.float32)      # NCHW, small

    fwd = jax.jit(functools.partial(simplenet_forward, dim=dim))
    alpha, beta = fwd(x, params)
    jax.block_until_ready((alpha, beta))

    assert alpha.shape == (2, 1, 16, 16) and beta.shape == (2, 1, 16, 16)
    assert bool(jnp.all(alpha >= 0.0)) and bool(jnp.all(beta >= 0.0))  # softplus > 0
    print("KERNEL_OK")
</pallas_src>

<mosaic_0001>
module attributes {stable_mosaic.version = 11 : i64} {
  func.func @_matmul_kernel(%arg0: i32, %arg1: i32, %arg2: i32, %arg3: memref<16x64xbf16, #tpu.memory_space<vmem>>, %arg4: memref<64x32xbf16, #tpu.memory_space<vmem>>, %arg5: memref<1x32xf32, #tpu.memory_space<vmem>>, %arg6: memref<16x32xbf16, #tpu.memory_space<vmem>>, %arg7: memref<16x32xf32, #tpu.memory_space<vmem>>) attributes {dimension_semantics = [#tpu.dimension_semantics<parallel>, #tpu.dimension_semantics<parallel>, #tpu.dimension_semantics<arbitrary>], iteration_bounds = array<i64: 2, 1, 1>, scalar_prefetch = 0 : i64, scratch_operands = 1 : i64, tpu.core_type = #tpu.core_type<tc>, window_params = [{transform_indices = @transform_0, window_bounds = array<i64: 16, 64>}, {transform_indices = @transform_1, window_bounds = array<i64: 64, 32>}, {transform_indices = @transform_2, window_bounds = array<i64: 1, 32>}, {transform_indices = @transform_3, window_bounds = array<i64: 16, 32>}]} {
    %c0_i32 = arith.constant 0 : i32
    %0 = arith.cmpi eq, %arg2, %c0_i32 : i32
    %1 = arith.extui %0 : i1 to i32
    %c0_i32_0 = arith.constant 0 : i32
    %2 = arith.cmpi ne, %1, %c0_i32_0 : i32
    scf.if %2 {
      %cst_10 = arith.constant 0.000000e+00 : f32
      %12 = vector.broadcast %cst_10 : f32 to vector<16x32xf32>
      %c0_11 = arith.constant 0 : index
      %c0_12 = arith.constant 0 : index
      %13 = vector.load %arg7[%c0_11, %c0_12] : memref<16x32xf32, #tpu.memory_space<vmem>>, vector<16x32xf32>
      tpu.vector_store %arg7[%c0_11, %c0_12], %12 {strides = array<i32>} : memref<16x32xf32, #tpu.memory_space<vmem>>, vector<16x32xf32>,
    } else {
    }
    %c0 = arith.constant 0 : index
    %c0_1 = arith.constant 0 : index
    %3 = vector.load %arg7[%c0, %c0_1] : memref<16x32xf32, #tpu.memory_space<vmem>>, vector<16x32xf32>
    %c0_2 = arith.constant 0 : index
    %c0_3 = arith.constant 0 : index
    %4 = vector.load %arg3[%c0_2, %c0_3] : memref<16x64xbf16, #tpu.memory_space<vmem>>, vector<16x64xbf16>
    %c0_4 = arith.constant 0 : index
    %c0_5 = arith.constant 0 : index
    %5 = vector.load %arg4[%c0_4, %c0_5] : memref<64x32xbf16, #tpu.memory_space<vmem>>, vector<64x32xbf16>
    %cst = arith.constant dense<0.000000e+00> : vector<16x32xf32>
    %6 = tpu.matmul %4, %5, %cst {dimension_numbers = #tpu.dot_dimension_numbers<[1], [0], [0], [1], [0, 0, 1, 1], [], []>} : vector<16x64xbf16>, vector<64x32xbf16>, vector<16x32xf32> -> vector<16x32xf32>
    %7 = arith.addf %3, %6 : vector<16x32xf32>
    %c0_6 = arith.constant 0 : index
    %c0_7 = arith.constant 0 : index
    %8 = vector.load %arg7[%c0_6, %c0_7] : memref<16x32xf32, #tpu.memory_space<vmem>>, vector<16x32xf32>
    tpu.vector_store %arg7[%c0_6, %c0_7], %7 {strides = array<i32>} : memref<16x32xf32, #tpu.memory_space<vmem>>, vector<16x32xf32>,
    %c0_i32_8 = arith.constant 0 : i32
    %9 = arith.cmpi eq, %arg2, %c0_i32_8 : i32
    %10 = arith.extui %9 : i1 to i32
    %c0_i32_9 = arith.constant 0 : i32
    %11 = arith.cmpi ne, %10, %c0_i32_9 : i32
    scf.if %11 {
      %c0_10 = arith.constant 0 : index
      %c0_11 = arith.constant 0 : index
      %12 = vector.load %arg7[%c0_10, %c0_11] : memref<16x32xf32, #tpu.memory_space<vmem>>, vector<16x32xf32>
      %c0_12 = arith.constant 0 : index
      %c0_13 = arith.constant 0 : index
      %13 = vector.load %arg5[%c0_12, %c0_13] : memref<1x32xf32, #tpu.memory_space<vmem>>, vector<1x32xf32>
      %14 = vector.broadcast %13 : vector<1x32xf32> to vector<16x32xf32>
      %15 = arith.addf %12, %14 : vector<16x32xf32>
      %16 = arith.truncf %15 : vector<16x32xf32> to vector<16x32xbf16>
      %c0_14 = arith.constant 0 : index
      %c0_15 = arith.constant 0 : index
      %17 = vector.load %arg6[%c0_14, %c0_15] : memref<16x32xbf16, #tpu.memory_space<vmem>>, vector<16x32xbf16>
      tpu.vector_store %arg6[%c0_14, %c0_15], %16 {strides = array<i32>} : memref<16x32xbf16, #tpu.memory_space<vmem>>, vector<16x32xbf16>,
    } else {
    }
    return
  }
  func.func @transform_0(%arg0: i32, %arg1: i32, %arg2: i32) -> (i32, i32) {
    %c0_i32 = arith.constant 0 : i32
    return %arg0, %arg2 : i32, i32
  }
  func.func @transform_1(%arg0: i32, %arg1: i32, %arg2: i32) -> (i32, i32) {
    %c0_i32 = arith.constant 0 : i32
    return %arg2, %arg1 : i32, i32
  }
  func.func @transform_2(%arg0: i32, %arg1: i32, %arg2: i32) -> (i32, i32) {
    %c0_i32 = arith.constant 0 : i32
    %c0_i32_0 = arith.constant 0 : i32
    return %c0_i32, %arg1 : i32, i32
  }
  func.func @transform_3(%arg0: i32, %arg1: i32, %arg2: i32) -> (i32, i32) {
    %c0_i32 = arith.constant 0 : i32
    return %arg0, %arg1 : i32, i32
  }
}

module attributes {stable_mosaic.version = 11 : i64} {
  func.func @_attn_block_kernel(%arg0: i32, %arg1: memref<1x4x128xbf16, #tpu.memory_space<vmem>>, %arg2: memref<128x64xbf16, #tpu.memory_space<vmem>>, %arg3: memref<1x64xf32, #tpu.memory_space<vmem>>, %arg4: memref<64x384xbf16, #tpu.memory_space<vmem>>, %arg5: memref<1x384xf32, #tpu.memory_space<vmem>>, %arg6: memref<128x64xbf16, #tpu.memory_space<vmem>>, %arg7: memref<1x64xf32, #tpu.memory_space<vmem>>, %arg8: memref<64x128xbf16, #tpu.memory_space<vmem>>, %arg9: memref<1x128xf32, #tpu.memory_space<vmem>>, %arg10: memref<1x4x128xbf16, #tpu.memory_space<vmem>>) attributes {dimension_semantics = [#tpu.dimension_semantics<parallel>], iteration_bounds = array<i64: 2>, scalar_prefetch = 0 : i64, scratch_operands = 0 : i64, tpu.core_type = #tpu.core_type<tc>, window_params = [{transform_indices = @transform_0, window_bounds = array<i64: 1, 4, 128>}, {pipeline_mode = #tpu.pipeline_mode<synchronous>, transform_indices = @transform_1, window_bounds = array<i64: 128, 64>}, {pipeline_mode = #tpu.pipeline_mode<synchronous>, transform_indices = @transform_2, window_bounds = array<i64: 1, 64>}, {pipeline_mode = #tpu.pipeline_mode<synchronous>, transform_indices = @transform_3, window_bounds = array<i64: 64, 384>}, {pipeline_mode = #tpu.pipeline_mode<synchronous>, transform_indices = @transform_4, window_bounds = array<i64: 1, 384>}, {pipeline_mode = #tpu.pipeline_mode<synchronous>, transform_indices = @transform_5, window_bounds = array<i64: 128, 64>}, {pipeline_mode = #tpu.pipeline_mode<synchronous>, transform_indices = @transform_6, window_bounds = array<i64: 1, 64>}, {pipeline_mode = #tpu.pipeline_mode<synchronous>, transform_indices = @transform_7, window_bounds = array<i64: 64, 128>}, {pipeline_mode = #tpu.pipeline_mode<synchronous>, transform_indices = @transform_8, window_bounds = array<i64: 1, 128>}, {transform_indices = @transform_9, window_bounds = array<i64: 1, 4, 128>}]} {
    %c0 = arith.constant 0 : index
    %c0_0 = arith.constant 0 : index
    %c0_1 = arith.constant 0 : index
    %0 = vector.load %arg1[%c0, %c0_0, %c0_1] : memref<1x4x128xbf16, #tpu.memory_space<vmem>>, vector<1x4x128xbf16>
    %1 = vector.shape_cast %0 : vector<1x4x128xbf16> to vector<4x128xbf16>
    %c0_2 = arith.constant 0 : index
    %c0_3 = arith.constant 0 : index
    %2 = vector.load %arg2[%c0_2, %c0_3] : memref<128x64xbf16, #tpu.memory_space<vmem>>, vector<128x64xbf16>
    %cst = arith.constant dense<0.000000e+00> : vector<4x64xf32>
    %3 = tpu.matmul %1, %2, %cst {dimension_numbers = #tpu.dot_dimension_numbers<[1], [0], [0], [1], [0, 0, 1, 1], [], []>} : vector<4x128xbf16>, vector<128x64xbf16>, vector<4x64xf32> -> vector<4x64xf32>
    %c0_4 = arith.constant 0 : index
    %c0_5 = arith.constant 0 : index
    %4 = vector.load %arg3[%c0_4, %c0_5] : memref<1x64xf32, #tpu.memory_space<vmem>>, vector<1x64xf32>
    %5 = vector.broadcast %4 : vector<1x64xf32> to vector<4x64xf32>
    %6 = arith.addf %3, %5 : vector<4x64xf32>
    %7 = arith.truncf %6 : vector<4x64xf32> to vector<4x64xbf16>
    %c0_6 = arith.constant 0 : index
    %c0_7 = arith.constant 0 : index
    %8 = vector.load %arg4[%c0_6, %c0_7] : memref<64x384xbf16, #tpu.memory_space<vmem>>, vector<64x384xbf16>
    %cst_8 = arith.constant dense<0.000000e+00> : vector<4x384xf32>
    %9 = tpu.matmul %7, %8, %cst_8 {dimension_numbers = #tpu.dot_dimension_numbers<[1], [0], [0], [1], [0, 0, 1, 1], [], []>} : vector<4x64xbf16>, vector<64x384xbf16>, vector<4x384xf32> -> vector<4x384xf32>
    %c0_9 = arith.constant 0 : index
    %c0_10 = arith.constant 0 : index
    %10 = vector.load %arg5[%c0_9, %c0_10] : memref<1x384xf32, #tpu.memory_space<vmem>>, vector<1x384xf32>
    %11 = vector.broadcast %10 : vector<1x384xf32> to vector<4x384xf32>
    %12 = arith.addf %9, %11 : vector<4x384xf32>
    %13 = vector.extract_strided_slice %12 {offsets = [0, 0], sizes = [4, 128], strides = [1, 1]} : vector<4x384xf32> to vector<4x128xf32>
    %14 = arith.truncf %13 : vector<4x128xf32> to vector<4x128xbf16>
    %15 = vector.extract_strided_slice %12 {offsets = [0, 128], sizes = [4, 128], strides = [1, 1]} : vector<4x384xf32> to vector<4x128xf32>
    %16 = arith.truncf %15 : vector<4x128xf32> to vector<4x128xbf16>
    %17 = vector.extract_strided_slice %12 {offsets = [0, 256], sizes = [4, 128], strides = [1, 1]} : vector<4x384xf32> to vector<4x128xf32>
    %18 = arith.truncf %17 : vector<4x128xf32> to vector<4x128xbf16>
    %cst_11 = arith.constant dense<0.000000e+00> : vector<4x4xf32>
    %19 = tpu.matmul %14, %16, %cst_11 {dimension_numbers = #tpu.dot_dimension_numbers<[1], [1], [0], [0], [0, 0, 1, 0], [], []>} : vector<4x128xbf16>, vector<4x128xbf16>, vector<4x4xf32> -> vector<4x4xf32>
    %cst_12 = arith.constant dense<0xFF800000> : vector<4xf32>
    %20 = vector.multi_reduction <maximumf>, %19, %cst_12 [1] : vector<4x4xf32> to vector<4xf32>
    %21 = vector.shape_cast %20 : vector<4xf32> to vector<4x1xf32>
    %22 = vector.broadcast %21 : vector<4x1xf32> to vector<4x4xf32>
    %23 = arith.subf %19, %22 : vector<4x4xf32>
    %24 = math.exp %23 : vector<4x4xf32>
    %cst_13 = arith.constant dense<0.000000e+00> : vector<4xf32>
    %25 = vector.multi_reduction <add>, %24, %cst_13 [1] : vector<4x4xf32> to vector<4xf32>
    %26 = vector.shape_cast %25 : vector<4xf32> to vector<4x1xf32>
    %27 = tpu.reciprocal %26 {approx = true} : vector<4x1xf32> -> vector<4x1xf32>
    %28 = vector.broadcast %27 : vector<4x1xf32> to vector<4x4xf32>
    %29 = arith.mulf %24, %28 : vector<4x4xf32>
    %30 = arith.truncf %29 : vector<4x4xf32> to vector<4x4xbf16>
    %cst_14 = arith.constant dense<0.000000e+00> : vector<4x128xf32>
    %31 = tpu.matmul %30, %18, %cst_14 {dimension_numbers = #tpu.dot_dimension_numbers<[1], [0], [0], [1], [0, 0, 1, 1], [], []>} : vector<4x4xbf16>, vector<4x128xbf16>, vector<4x128xf32> -> vector<4x128xf32>
    %32 = arith.truncf %31 : vector<4x128xf32> to vector<4x128xbf16>
    %c0_15 = arith.constant 0 : index
    %c0_16 = arith.constant 0 : index
    %33 = vector.load %arg6[%c0_15, %c0_16] : memref<128x64xbf16, #tpu.memory_space<vmem>>, vector<128x64xbf16>
    %cst_17 = arith.constant dense<0.000000e+00> : vector<4x64xf32>
    %34 = tpu.matmul %32, %33, %cst_17 {dimension_numbers = #tpu.dot_dimension_numbers<[1], [0], [0], [1], [0, 0, 1, 1], [], []>} : vector<4x128xbf16>, vector<128x64xbf16>, vector<4x64xf32> -> vector<4x64xf32>
    %c0_18 = arith.constant 0 : index
    %c0_19 = arith.constant 0 : index
    %35 = vector.load %arg7[%c0_18, %c0_19] : memref<1x64xf32, #tpu.memory_space<vmem>>, vector<1x64xf32>
    %36 = vector.broadcast %35 : vector<1x64xf32> to vector<4x64xf32>
    %37 = arith.addf %34, %36 : vector<4x64xf32>
    %38 = arith.addf %37, %6 : vector<4x64xf32>
    %39 = arith.truncf %38 : vector<4x64xf32> to vector<4x64xbf16>
    %c0_20 = arith.constant 0 : index
    %c0_21 = arith.constant 0 : index
    %40 = vector.load %arg8[%c0_20, %c0_21] : memref<64x128xbf16, #tpu.memory_space<vmem>>, vector<64x128xbf16>
    %cst_22 = arith.constant dense<0.000000e+00> : vector<4x128xf32>
    %41 = tpu.matmul %39, %40, %cst_22 {dimension_numbers = #tpu.dot_dimension_numbers<[1], [0], [0], [1], [0, 0, 1, 1], [], []>} : vector<4x64xbf16>, vector<64x128xbf16>, vector<4x128xf32> -> vector<4x128xf32>
    %c0_23 = arith.constant 0 : index
    %c0_24 = arith.constant 0 : index
    %42 = vector.load %arg9[%c0_23, %c0_24] : memref<1x128xf32, #tpu.memory_space<vmem>>, vector<1x128xf32>
    %43 = vector.broadcast %42 : vector<1x128xf32> to vector<4x128xf32>
    %44 = arith.addf %41, %43 : vector<4x128xf32>
    %45 = arith.truncf %44 : vector<4x128xf32> to vector<4x128xbf16>
    %c0_25 = arith.constant 0 : index
    %c0_26 = arith.constant 0 : index
    %c0_27 = arith.constant 0 : index
    %46 = vector.load %arg10[%c0_25, %c0_26, %c0_27] : memref<1x4x128xbf16, #tpu.memory_space<vmem>>, vector<1x4x128xbf16>
    %47 = vector.shape_cast %46 : vector<1x4x128xbf16> to vector<4x128xbf16>
    %48 = vector.shape_cast %45 : vector<4x128xbf16> to vector<1x4x128xbf16>
    tpu.vector_store %arg10[%c0_25, %c0_26, %c0_27], %48 {strides = array<i32>} : memref<1x4x128xbf16, #tpu.memory_space<vmem>>, vector<1x4x128xbf16>,
    return
  }
  func.func @transform_0(%arg0: i32) -> (i32, i32, i32) {
    %c0_i32 = arith.constant 0 : i32
    %c0_i32_0 = arith.constant 0 : i32
    %c0_i32_1 = arith.constant 0 : i32
    return %arg0, %c0_i32, %c0_i32_0 : i32, i32, i32
  }
  func.func @transform_1(%arg0: i32) -> (i32, i32) {
    %c0_i32 = arith.constant 0 : i32
    %c0_i32_0 = arith.constant 0 : i32
    %c0_i32_1 = arith.constant 0 : i32
    return %c0_i32, %c0_i32_0 : i32, i32
  }
  func.func @transform_2(%arg0: i32) -> (i32, i32) {
    %c0_i32 = arith.constant 0 : i32
    %c0_i32_0 = arith.constant 0 : i32
    %c0_i32_1 = arith.constant 0 : i32
    return %c0_i32, %c0_i32_0 : i32, i32
  }
  func.func @transform_3(%arg0: i32) -> (i32, i32) {
    %c0_i32 = arith.constant 0 : i32
    %c0_i32_0 = arith.constant 0 : i32
    %c0_i32_1 = arith.constant 0 : i32
    return %c0_i32, %c0_i32_0 : i32, i32
  }
  func.func @transform_4(%arg0: i32) -> (i32, i32) {
    %c0_i32 = arith.constant 0 : i32
    %c0_i32_0 = arith.constant 0 : i32
    %c0_i32_1 = arith.constant 0 : i32
    return %c0_i32, %c0_i32_0 : i32, i32
  }
  func.func @transform_5(%arg0: i32) -> (i32, i32) {
    %c0_i32 = arith.constant 0 : i32
    %c0_i32_0 = arith.constant 0 : i32
    %c0_i32_1 = arith.constant 0 : i32
    return %c0_i32, %c0_i32_0 : i32, i32
  }
  func.func @transform_6(%arg0: i32) -> (i32, i32) {
    %c0_i32 = arith.constant 0 : i32
    %c0_i32_0 = arith.constant 0 : i32
    %c0_i32_1 = arith.constant 0 : i32
    return %c0_i32, %c0_i32_0 : i32, i32
  }
  func.func @transform_7(%arg0: i32) -> (i32, i32) {
    %c0_i32 = arith.constant 0 : i32
    %c0_i32_0 = arith.constant 0 : i32
    %c0_i32_1 = arith.constant 0 : i32
    return %c0_i32, %c0_i32_0 : i32, i32
  }
  func.func @transform_8(%arg0: i32) -> (i32, i32) {
    %c0_i32 = arith.constant 0 : i32
    %c0_i32_0 = arith.constant 0 : i32
    %c0_i32_1 = arith.constant 0 : i32
    return %c0_i32, %c0_i32_0 : i32, i32
  }
  func.func @transform_9(%arg0: i32) -> (i32, i32, i32) {
    %c0_i32 = arith.constant 0 : i32
    %c0_i32_0 = arith.constant 0 : i32
    %c0_i32_1 = arith.constant 0 : i32
    return %arg0, %c0_i32, %c0_i32_0 : i32, i32, i32
  }
}

module attributes {stable_mosaic.version = 11 : i64} {
  func.func @_matmul_kernel(%arg0: i32, %arg1: i32, %arg2: i32, %arg3: memref<16x64xbf16, #tpu.memory_space<vmem>>, %arg4: memref<64x256xbf16, #tpu.memory_space<vmem>>, %arg5: memref<1x256xf32, #tpu.memory_space<vmem>>, %arg6: memref<16x256xbf16, #tpu.memory_space<vmem>>, %arg7: memref<16x256xf32, #tpu.memory_space<vmem>>) attributes {dimension_semantics = [#tpu.dimension_semantics<parallel>, #tpu.dimension_semantics<parallel>, #tpu.dimension_semantics<arbitrary>], iteration_bounds = array<i64: 2, 2, 1>, scalar_prefetch = 0 : i64, scratch_operands = 1 : i64, tpu.core_type = #tpu.core_type<tc>, window_params = [{transform_indices = @transform_0, window_bounds = array<i64: 16, 64>}, {transform_indices = @transform_1, window_bounds = array<i64: 64, 256>}, {transform_indices = @transform_2, window_bounds = array<i64: 1, 256>}, {transform_indices = @transform_3, window_bounds = array<i64: 16, 256>}]} {
    %c0_i32 = arith.constant 0 : i32
    %0 = arith.cmpi eq, %arg2, %c0_i32 : i32
    %1 = arith.extui %0 : i1 to i32
    %c0_i32_0 = arith.constant 0 : i32
    %2 = arith.cmpi ne, %1, %c0_i32_0 : i32
    scf.if %2 {
      %cst_10 = arith.constant 0.000000e+00 : f32
      %12 = vector.broadcast %cst_10 : f32 to vector<16x256xf32>
      %c0_11 = arith.constant 0 : index
      %c0_12 = arith.constant 0 : index
      %13 = vector.load %arg7[%c0_11, %c0_12] : memref<16x256xf32, #tpu.memory_space<vmem>>, vector<16x256xf32>
      tpu.vector_store %arg7[%c0_11, %c0_12], %12 {strides = array<i32>} : memref<16x256xf32, #tpu.memory_space<vmem>>, vector<16x256xf32>,
    } else {
    }
    %c0 = arith.constant 0 : index
    %c0_1 = arith.constant 0 : index
    %3 = vector.load %arg7[%c0, %c0_1] : memref<16x256xf32, #tpu.memory_space<vmem>>, vector<16x256xf32>
    %c0_2 = arith.constant 0 : index
    %c0_3 = arith.constant 0 : index
    %4 = vector.load %arg3[%c0_2, %c0_3] : memref<16x64xbf16, #tpu.memory_space<vmem>>, vector<16x64xbf16>
    %c0_4 = arith.constant 0 : index
    %c0_5 = arith.constant 0 : index
    %5 = vector.load %arg4[%c0_4, %c0_5] : memref<64x256xbf16, #tpu.memory_space<vmem>>, vector<64x256xbf16>
    %cst = arith.constant dense<0.000000e+00> : vector<16x256xf32>
    %6 = tpu.matmul %4, %5, %cst {dimension_numbers = #tpu.dot_dimension_numbers<[1], [0], [0], [1], [0, 0, 1, 1], [], []>} : vector<16x64xbf16>, vector<64x256xbf16>, vector<16x256xf32> -> vector<16x256xf32>
    %7 = arith.addf %3, %6 : vector<16x256xf32>
    %c0_6 = arith.constant 0 : index
    %c0_7 = arith.constant 0 : index
    %8 = vector.load %arg7[%c0_6, %c0_7] : memref<16x256xf32, #tpu.memory_space<vmem>>, vector<16x256xf32>
    tpu.vector_store %arg7[%c0_6, %c0_7], %7 {strides = array<i32>} : memref<16x256xf32, #tpu.memory_space<vmem>>, vector<16x256xf32>,
    %c0_i32_8 = arith.constant 0 : i32
    %9 = arith.cmpi eq, %arg2, %c0_i32_8 : i32
    %10 = arith.extui %9 : i1 to i32
    %c0_i32_9 = arith.constant 0 : i32
    %11 = arith.cmpi ne, %10, %c0_i32_9 : i32
    scf.if %11 {
      %c0_10 = arith.constant 0 : index
      %c0_11 = arith.constant 0 : index
      %12 = vector.load %arg7[%c0_10, %c0_11] : memref<16x256xf32, #tpu.memory_space<vmem>>, vector<16x256xf32>
      %c0_12 = arith.constant 0 : index
      %c0_13 = arith.constant 0 : index
      %13 = vector.load %arg5[%c0_12, %c0_13] : memref<1x256xf32, #tpu.memory_space<vmem>>, vector<1x256xf32>
      %14 = vector.broadcast %13 : vector<1x256xf32> to vector<16x256xf32>
      %15 = arith.addf %12, %14 : vector<16x256xf32>
      %16 = arith.truncf %15 : vector<16x256xf32> to vector<16x256xbf16>
      %c0_14 = arith.constant 0 : index
      %c0_15 = arith.constant 0 : index
      %17 = vector.load %arg6[%c0_14, %c0_15] : memref<16x256xbf16, #tpu.memory_space<vmem>>, vector<16x256xbf16>
      tpu.vector_store %arg6[%c0_14, %c0_15], %16 {strides = array<i32>} : memref<16x256xbf16, #tpu.memory_space<vmem>>, vector<16x256xbf16>,
    } else {
    }
    return
  }
  func.func @transform_0(%arg0: i32, %arg1: i32, %arg2: i32) -> (i32, i32) {
    %c0_i32 = arith.constant 0 : i32
    return %arg0, %arg2 : i32, i32
  }
  func.func @transform_1(%arg0: i32, %arg1: i32, %arg2: i32) -> (i32, i32) {
    %c0_i32 = arith.constant 0 : i32
    return %arg2, %arg1 : i32, i32
  }
  func.func @transform_2(%arg0: i32, %arg1: i32, %arg2: i32) -> (i32, i32) {
    %c0_i32 = arith.constant 0 : i32
    %c0_i32_0 = arith.constant 0 : i32
    return %c0_i32, %arg1 : i32, i32
  }
  func.func @transform_3(%arg0: i32, %arg1: i32, %arg2: i32) -> (i32, i32) {
    %c0_i32 = arith.constant 0 : i32
    return %arg0, %arg1 : i32, i32
  }
}

module attributes {stable_mosaic.version = 11 : i64} {
  func.func @_matmul_kernel(%arg0: i32, %arg1: i32, %arg2: i32, %arg3: memref<256x800xbf16, #tpu.memory_space<vmem>>, %arg4: memref<800x128xbf16, #tpu.memory_space<vmem>>, %arg5: memref<1x128xf32, #tpu.memory_space<vmem>>, %arg6: memref<256x128xf32, #tpu.memory_space<vmem>>, %arg7: memref<256x128xf32, #tpu.memory_space<vmem>>) attributes {dimension_semantics = [#tpu.dimension_semantics<parallel>, #tpu.dimension_semantics<parallel>, #tpu.dimension_semantics<arbitrary>], iteration_bounds = array<i64: 2, 1, 1>, scalar_prefetch = 0 : i64, scratch_operands = 1 : i64, tpu.core_type = #tpu.core_type<tc>, window_params = [{transform_indices = @transform_0, window_bounds = array<i64: 256, 800>}, {transform_indices = @transform_1, window_bounds = array<i64: 800, 128>}, {transform_indices = @transform_2, window_bounds = array<i64: 1, 128>}, {transform_indices = @transform_3, window_bounds = array<i64: 256, 128>}]} {
    %c0_i32 = arith.constant 0 : i32
    %0 = arith.cmpi eq, %arg2, %c0_i32 : i32
    %1 = arith.extui %0 : i1 to i32
    %c0_i32_0 = arith.constant 0 : i32
    %2 = arith.cmpi ne, %1, %c0_i32_0 : i32
    scf.if %2 {
      %cst_10 = arith.constant 0.000000e+00 : f32
      %12 = vector.broadcast %cst_10 : f32 to vector<256x128xf32>
      %c0_11 = arith.constant 0 : index
      %c0_12 = arith.constant 0 : index
      %13 = vector.load %arg7[%c0_11, %c0_12] : memref<256x128xf32, #tpu.memory_space<vmem>>, vector<256x128xf32>
      tpu.vector_store %arg7[%c0_11, %c0_12], %12 {strides = array<i32>} : memref<256x128xf32, #tpu.memory_space<vmem>>, vector<256x128xf32>,
    } else {
    }
    %c0 = arith.constant 0 : index
    %c0_1 = arith.constant 0 : index
    %3 = vector.load %arg7[%c0, %c0_1] : memref<256x128xf32, #tpu.memory_space<vmem>>, vector<256x128xf32>
    %c0_2 = arith.constant 0 : index
    %c0_3 = arith.constant 0 : index
    %4 = vector.load %arg3[%c0_2, %c0_3] : memref<256x800xbf16, #tpu.memory_space<vmem>>, vector<256x800xbf16>
    %c0_4 = arith.constant 0 : index
    %c0_5 = arith.constant 0 : index
    %5 = vector.load %arg4[%c0_4, %c0_5] : memref<800x128xbf16, #tpu.memory_space<vmem>>, vector<800x128xbf16>
    %cst = arith.constant dense<0.000000e+00> : vector<256x128xf32>
    %6 = tpu.matmul %4, %5, %cst {dimension_numbers = #tpu.dot_dimension_numbers<[1], [0], [0], [1], [0, 0, 1, 1], [], []>} : vector<256x800xbf16>, vector<800x128xbf16>, vector<256x128xf32> -> vector<256x128xf32>
    %7 = arith.addf %3, %6 : vector<256x128xf32>
    %c0_6 = arith.constant 0 : index
    %c0_7 = arith.constant 0 : index
    %8 = vector.load %arg7[%c0_6, %c0_7] : memref<256x128xf32, #tpu.memory_space<vmem>>, vector<256x128xf32>
    tpu.vector_store %arg7[%c0_6, %c0_7], %7 {strides = array<i32>} : memref<256x128xf32, #tpu.memory_space<vmem>>, vector<256x128xf32>,
    %c0_i32_8 = arith.constant 0 : i32
    %9 = arith.cmpi eq, %arg2, %c0_i32_8 : i32
    %10 = arith.extui %9 : i1 to i32
    %c0_i32_9 = arith.constant 0 : i32
    %11 = arith.cmpi ne, %10, %c0_i32_9 : i32
    scf.if %11 {
      %c0_10 = arith.constant 0 : index
      %c0_11 = arith.constant 0 : index
      %12 = vector.load %arg7[%c0_10, %c0_11] : memref<256x128xf32, #tpu.memory_space<vmem>>, vector<256x128xf32>
      %c0_12 = arith.constant 0 : index
      %c0_13 = arith.constant 0 : index
      %13 = vector.load %arg5[%c0_12, %c0_13] : memref<1x128xf32, #tpu.memory_space<vmem>>, vector<1x128xf32>
      %14 = vector.broadcast %13 : vector<1x128xf32> to vector<256x128xf32>
      %15 = arith.addf %12, %14 : vector<256x128xf32>
      %cst_14 = arith.constant 0.000000e+00 : f32
      %16 = vector.broadcast %cst_14 : f32 to vector<256x128xf32>
      %17 = arith.maximumf %15, %16 : vector<256x128xf32>
      %18 = math.absf %15 : vector<256x128xf32>
      %cst_15 = arith.constant 0.000000e+00 : f32
      %19 = vector.broadcast %cst_15 : f32 to vector<256x128xf32>
      %20 = arith.subf %19, %18 : vector<256x128xf32>
      %21 = math.exp %20 : vector<256x128xf32>
      %22 = math.log1p %21 : vector<256x128xf32>
      %23 = arith.addf %17, %22 : vector<256x128xf32>
      %c0_16 = arith.constant 0 : index
      %c0_17 = arith.constant 0 : index
      %24 = vector.load %arg6[%c0_16, %c0_17] : memref<256x128xf32, #tpu.memory_space<vmem>>, vector<256x128xf32>
      tpu.vector_store %arg6[%c0_16, %c0_17], %23 {strides = array<i32>} : memref<256x128xf32, #tpu.memory_space<vmem>>, vector<256x128xf32>,
    } else {
    }
    return
  }
  func.func @transform_0(%arg0: i32, %arg1: i32, %arg2: i32) -> (i32, i32) {
    %c0_i32 = arith.constant 0 : i32
    return %arg0, %arg2 : i32, i32
  }
  func.func @transform_1(%arg0: i32, %arg1: i32, %arg2: i32) -> (i32, i32) {
    %c0_i32 = arith.constant 0 : i32
    return %arg2, %arg1 : i32, i32
  }
  func.func @transform_2(%arg0: i32, %arg1: i32, %arg2: i32) -> (i32, i32) {
    %c0_i32 = arith.constant 0 : i32
    %c0_i32_0 = arith.constant 0 : i32
    return %c0_i32, %arg1 : i32, i32
  }
  func.func @transform_3(%arg0: i32, %arg1: i32, %arg2: i32) -> (i32, i32) {
    %c0_i32 = arith.constant 0 : i32
    return %arg0, %arg1 : i32, i32
  }
}

</mosaic_0001>

<llo_original>
// kernel: simplenet_forward.4
$region0: #{simplenet_forward.4}
  #allocation0 [shape = 'u32[]', space=smem, size = 0x4, offset = 0x4, fixed_abs, tag = 'smem constant byte address 0x4 - core index']
  #allocation1 [shape = 'u32[144,128]{1,0:T(1,128)}', space=vmem, size = 0x12000, scoped, tag = 'internal scratch']
  #allocation2 [shape = 'f32[16,32]{1,0:T(8,128)}', space=vmem, size = 0x2000, scoped, tag = 'scratch operand']
  %s0 = inlined_call_operand.vmem [shape: bf16[32,64], index: 0, kind: input, shape index: {}]
  %s1 = inlined_call_operand.vmem [shape: bf16[64,32], index: 1, kind: input, shape index: {}]
  %s2 = inlined_call_operand.vmem [shape: f32[1,32], index: 2, kind: input, shape index: {}]
  %s3 = inlined_call_operand.vmem [shape: bf16[32,32], index: 3, kind: output, shape index: {}]
  %s4 = sld [smem:[#allocation0]]
  $region53: #{simplenet_forward.4} parent=0
    _
  %s6 = ssub.s32 1, %s4
  %s7 = scalar_select 0, %s6, %s4
  loop: start=0, step=1, limit=4
  $region2: #{simplenet_forward.4} parent=0 // loop_pre_header
    _
  $region3: #{simplenet_forward.4} parent=0 // loop_header
    %s9 = sphi 0, %s13
    %p10 = scmp.ge.s32.totalorder %s9, 4
    %s16 = sphi 0, %s35
    %s17 = sphi 0, %s31
    %s18 = sphi 0, %s27
    %s19 = sphi 0, %s16
    %s20 = sphi 0, %s17
    %s21 = sphi 0, %s18
    %s22 = sphi 0, %s19
    %s23 = sphi 0, %s20
    %s24 = sphi 0, %s21
    %s40 = sphi 0, %s42
    %s43 = sphi 0, %s40
    %s44 = sphi 0, %s43
    %s60 = sphi 0, %s44
    %s68 = sphi 0, %s70
    %s71 = sphi 0, %s68
    %s72 = sphi 0, %s71
    %s88 = sphi 0, %s72
    %s94 = sphi 0, %s96
    %s97 = sphi 0, %s94
    %s98 = sphi 0, %s97
    %s114 = sphi 0, %s98
    %s122 = sphi 0, %s124
    %s125 = sphi 0, %s122
    %s126 = sphi 0, %s125
    %s142 = sphi 0, %s126
  $region4: #{simplenet_forward.4} parent=0 // loop_header_branch
    %12 = sbr.rel (%p10) target = $region8
  $region5: #{simplenet_forward.4} parent=0 // loop_body
    %s14 = ssub.s32 %s9, 1
    %s15 = ssub.s32 %s9, 2
    %s25 = sadd.s32 1, %s18
    %p26 = scmp.ge.s32.totalorder %s25, 1
    %s27 = scalar_select %p26, 0, %s25
    %s28 = sadd.s32 1, %s17
    %s29 = scalar_select %p26, %s28, %s17
    %p30 = scmp.ge.s32.totalorder %s29, 1
    %s31 = scalar_select %p30, 0, %s29
    %s32 = sadd.s32 1, %s16
    %s33 = scalar_select %p30, %s32, %s16
    %p34 = scmp.ge.s32.totalorder %s33, 2
    %s35 = scalar_select %p34, 0, %s33
    %s36 = ssub.s32 %s16, %s35
    %s37 = ssub.s32 %s18, %s27
    %s38 = sor.u32 %s36, %s37
    %p39 = scmp.eq.s32.totalorder %s38, 0
    %s41 = sadd.s32 %s40, 1
    %s42 = scalar_select %p39, %s40, %s41
    %p45 = pneg %p39
    %p46 = scmp.eq.s32.totalorder %s9, 1
    %p47 = por %p45, %p46
    %p48 = scmp.ne.s32.totalorder %s40, %s43
    %p49 = scmp.eq.s32.totalorder %s9, 0
    %p50 = por %p48, %p49
    %p51 = scmp.ne.s32.totalorder %s40, %s43
    %p52 = scmp.eq.s32.totalorder %s14, 1
    %p53 = por %p51, %p52
    %p54 = scmp.ne.s32.totalorder %s43, %s44
    %p55 = scmp.eq.s32.totalorder %s14, 0
    %p56 = por %p54, %p55
    %p57 = scmp.ne.s32.totalorder %s43, %s44
    %p58 = scmp.eq.s32.totalorder %s15, 1
    %p59 = por %p57, %p58
    %p61 = scmp.ne.s32.totalorder %s44, %s60
    %p62 = scmp.eq.s32.totalorder %s15, 0
    %p63 = por %p61, %p62
    %s64 = ssub.s32 %s18, %s27
    %s65 = ssub.s32 %s17, %s31
    %s66 = sor.u32 %s64, %s65
    %p67 = scmp.eq.s32.totalorder %s66, 0
    %s69 = sadd.s32 %s68, 1
    %s70 = scalar_select %p67, %s68, %s69
    %p73 = pneg %p67
    %p74 = scmp.eq.s32.totalorder %s9, 1
    %p75 = por %p73, %p74
    %p76 = scmp.ne.s32.totalorder %s68, %s71
    %p77 = scmp.eq.s32.totalorder %s9, 0
    %p78 = por %p76, %p77
    %p79 = scmp.ne.s32.totalorder %s68, %s71
    %p80 = scmp.eq.s32.totalorder %s14, 1
    %p81 = por %p79, %p80
    %p82 = scmp.ne.s32.totalorder %s71, %s72
    %p83 = scmp.eq.s32.totalorder %s14, 0
    %p84 = por %p82, %p83
    %p85 = scmp.ne.s32.totalorder %s71, %s72
    %p86 = scmp.eq.s32.totalorder %s15, 1
    %p87 = por %p85, %p86
    %p89 = scmp.ne.s32.totalorder %s72, %s88
    %p90 = scmp.eq.s32.totalorder %s15, 0
    %p91 = por %p89, %p90
    %s92 = ssub.s32 %s17, %s31
    %p93 = scmp.eq.s32.totalorder %s92, 0
    %s95 = sadd.s32 %s94, 1
    %s96 = scalar_select %p93, %s94, %s95
    %p99 = pneg %p93
    %p100 = scmp.eq.s32.totalorder %s9, 1
    %p101 = por %p99, %p100
    %p102 = scmp.ne.s32.totalorder %s94, %s97
    %p103 = scmp.eq.s32.totalorder %s9, 0
    %p104 = por %p102, %p103
    %p105 = scmp.ne.s32.totalorder %s94, %s97
    %p106 = scmp.eq.s32.totalorder %s14, 1
    %p107 = por %p105, %p106
    %p108 = scmp.ne.s32.totalorder %s97, %s98
    %p109 = scmp.eq.s32.totalorder %s14, 0
    %p110 = por %p108, %p109
    %p111 = scmp.ne.s32.totalorder %s97, %s98
    %p112 = scmp.eq.s32.totalorder %s15, 1
    %p113 = por %p111, %p112
    %p115 = scmp.ne.s32.totalorder %s98, %s114
    %p116 = scmp.eq.s32.totalorder %s15, 0
    %p117 = por %p115, %p116
    %s118 = ssub.s32 %s16, %s35
    %s119 = ssub.s32 %s17, %s31
    %s120 = sor.u32 %s118, %s119
    %p121 = scmp.eq.s32.totalorder %s120, 0
    %s123 = sadd.s32 %s122, 1
    %s124 = scalar_select %p121, %s122, %s123
    %p127 = pneg %p121
    %p128 = scmp.eq.s32.totalorder %s9, 1
    %p129 = por %p127, %p128
    %p130 = scmp.ne.s32.totalorder %s122, %s125
    %p131 = scmp.eq.s32.totalorder %s9, 0
    %p132 = por %p130, %p131
    %p133 = scmp.ne.s32.totalorder %s122, %s125
    %p134 = scmp.eq.s32.totalorder %s14, 1
    %p135 = por %p133, %p134
    %p136 = scmp.ne.s32.totalorder %s125, %s126
    %p137 = scmp.eq.s32.totalorder %s14, 0
    %p138 = por %p136, %p137
    %p139 = scmp.ne.s32.totalorder %s125, %s126
    %p140 = scmp.eq.s32.totalorder %s15, 1
    %p141 = por %p139, %p140
    %p143 = scmp.ne.s32.totalorder %s126, %s142
    %p144 = scmp.eq.s32.totalorder %s15, 0
    %p145 = por %p143, %p144
    %p146 = scmp.le.s32.totalorder 1, %s9
    %p147 = scmp.lt.s32.totalorder %s9, 3
    %p148 = pnand %p146, %p147
    %p149 = pneg %p148
    // Predicated region
    $region9: #{simplenet_forward.4} parent=5 // pred_check
      _
    $region10: #{simplenet_forward.4} parent=5 // pred_check_branch
      %151 = sbr.rel (%p148) target = $region12
    $region11: #{simplenet_forward.4} parent=5 // pred_region
      %s152 = ssub.s32 %s9, 1
      // Predicated region
      $region13: #{simplenet_forward.4} parent=11 // pred_check
        %p153 = pneg %p84
      $region14: #{simplenet_forward.4} parent=11 // pred_check_branch
        %155 = sbr.rel (%p153) target = $region16
      $region15: #{simplenet_forward.4} parent=11 // pred_region
        %s156 = smul.u32 8, %s21
        %p157 = scmp.lt.s32.totalorder %s156, 7
        %s158 = scalar_select %p157, %s156, 7
        %p159 = scmp.lt.s32.totalorder %s20, 0
        %s160 = scalar_select %p159, %s20, 0
        %s161 = sadd.s32 %s160, %s158
        %s162 = smul.addr %s161, 4
        %s163 = scalar_lea.vmem %s1, %s162
        %s164 = smul.u32 8, %s21
      $region16: #{simplenet_forward.4} parent=11 // pred_fallthru
        _
      // Predicated region
      $region17: #{simplenet_forward.4} parent=11 // pred_check
        %p165 = pneg %p110
      $region18: #{simplenet_forward.4} parent=11 // pred_check_branch
        %167 = sbr.rel (%p165) target = $region20
      $region19: #{simplenet_forward.4} parent=11 // pred_region
        %p168 = scmp.lt.s32.totalorder %s20, 0
        %s169 = scalar_select %p168, %s20, 0
        %s170 = scalar_lea.vmem %s2, %s169
      $region20: #{simplenet_forward.4} parent=11 // pred_fallthru
        _
    $region12: #{simplenet_forward.4} parent=5 // pred_fallthru
      _
    %p171 = scmp.lt.s32.totalorder %s9, 2
    // Predicated region
    $region21: #{simplenet_forward.4} parent=5 // pred_check
      %p172 = pneg %p171
    $region22: #{simplenet_forward.4} parent=5 // pred_check_branch
      %174 = sbr.rel (%p172) target = $region24
    $region23: #{simplenet_forward.4} parent=5 // pred_region
      // Predicated region
      $region25: #{simplenet_forward.4} parent=23 // pred_check
        %p175 = pneg %p50
      $region26: #{simplenet_forward.4} parent=23 // pred_check_branch
        %177 = sbr.rel (%p175) target = $region28
      $region27: #{simplenet_forward.4} parent=23 // pred_region
        %s178 = smul.u32 2, %s16
        %p179 = scmp.lt.s32.totalorder %s178, 3
        %s180 = scalar_select %p179, %s178, 3
        %p181 = scmp.lt.s32.totalorder %s18, 0
        %s182 = scalar_select %p181, %s18, 0
        %s183 = sadd.s32 %s182, %s180
        %s184 = smul.addr %s183, 4
        %s185 = scalar_lea.vmem %s0, %s184
        %s186 = smul.u32 2, %s16
      $region28: #{simplenet_forward.4} parent=23 // pred_fallthru
        _
    $region24: #{simplenet_forward.4} parent=5 // pred_fallthru
      _
    %p187 = scmp.le.s32.totalorder 1, %s9
    %p188 = scmp.lt.s32.totalorder %s9, 3
    %p189 = pnand %p187, %p188
    %p190 = pneg %p189
    // Predicated region
    $region29: #{simplenet_forward.4} parent=5 // pred_check
      _
    $region30: #{simplenet_forward.4} parent=5 // pred_check_branch
      %192 = sbr.rel (%p189) target = $region32
    $region31: #{simplenet_forward.4} parent=5 // pred_region
      %s193 = ssub.s32 %s9, 1
      %s194 = smul.u32 2, %s19
      %p195 = scmp.lt.s32.totalorder %s194, 3
      %s196 = scalar_select %p195, %s194, 3
      %p197 = scmp.lt.s32.totalorder %s21, 0
      %s198 = scalar_select %p197, %s21, 0
      %s199 = sadd.s32 %s198, %s196
      %s200 = smul.addr %s199, 4
      %s201 = scalar_lea.vmem %s0, %s200
      %p202 = pneg %p56
      %p203 = pneg %p53
      %s204 = smul.u32 8, %s21
      %p205 = scmp.lt.s32.totalorder %s204, 7
      %s206 = scalar_select %p205, %s204, 7
      %p207 = scmp.lt.s32.totalorder %s20, 0
      %s208 = scalar_select %p207, %s20, 0
      %s209 = sadd.s32 %s208, %s206
      %s210 = smul.addr %s209, 4
      %s211 = scalar_lea.vmem %s1, %s210
      %p212 = pneg %p84
      %p213 = pneg %p81
      %p214 = scmp.lt.s32.totalorder %s20, 0
      %s215 = scalar_select %p214, %s20, 0
      %s216 = scalar_lea.vmem %s2, %s215
      %p217 = pneg %p110
      %p218 = pneg %p107
      %p219 = pneg %p138
      %p220 = pneg %p135
      %s221 = smul.u32 2, %s19
      %p222 = scmp.lt.s32.totalorder %s221, 3
      %s223 = scalar_select %p222, %s221, 3
      %p224 = scmp.lt.s32.totalorder %s20, 0
      %s225 = scalar_select %p224, %s20, 0
      %s226 = sadd.s32 %s225, %s223
      %s227 = smul.addr %s226, 4
      %s228 = scalar_lea.vmem %s3, %s227
      %s229 = smul.u32 2, %s19
      %p230 = scmp.lt.s32.totalorder %s229, 3
      %s231 = scalar_select %p230, %s229, 3
      %p232 = scmp.lt.s32.totalorder %s21, 0
      %s233 = scalar_select %p232, %s21, 0
      %s234 = sadd.s32 %s233, %s231
      %s235 = smul.addr %s234, 4
      %s236 = scalar_lea.vmem %s0, %s235
      %s237 = smul.u32 2, %s19
      %s238 = smul.u32 8, %s21
      %p239 = scmp.lt.s32.totalorder %s238, 7
      %s240 = scalar_select %p239, %s238, 7
      %p241 = scmp.lt.s32.totalorder %s20, 0
      %s242 = scalar_select %p241, %s20, 0
      %s243 = sadd.s32 %s242, %s240
      %s244 = smul.addr %s243, 4
      %s245 = scalar_lea.vmem %s1, %s244
      %s246 = smul.u32 8, %s21
      %p247 = scmp.lt.s32.totalorder %s20, 0
      %s248 = scalar_select %p247, %s20, 0
      %s249 = scalar_lea.vmem %s2, %s248
      %s250 = smul.u32 2, %s19
      %p251 = scmp.lt.s32.totalorder %s250, 3
      %s252 = scalar_select %p251, %s250, 3
      %p253 = scmp.lt.s32.totalorder %s20, 0
      %s254 = scalar_select %p253, %s20, 0
      %s255 = sadd.s32 %s254, %s252
      %s256 = smul.addr %s255, 4
      %s257 = scalar_lea.vmem %s3, %s256
      %s258 = smul.u32 2, %s19
      %p260 = scmp.eq.s32.totalorder %s21, 0
      // Predicated region
      $region33: #{simplenet_forward.4} parent=31 // pred_check
        %p261 = pneg %p260
      $region34: #{simplenet_forward.4} parent=31 // pred_check_branch
        %263 = sbr.rel (%p261) target = $region36
      $region35: #{simplenet_forward.4} parent=31 // pred_region
        %vm264 = vcmask 261120
        %265 = vst.msk [vmem:[#allocation2] sm:$0xff] %vm264, 0.0
        %266 = vst.msk [vmem:[#allocation2 + $0x8] sm:$0xff] %vm264, 0.0
      $region36: #{simplenet_forward.4} parent=31 // pred_fallthru
        _
      %v267 = vld [vmem:[#allocation2] sm:$0xff]
      %v268 = vld [vmem:[#allocation2 + $0x8] sm:$0xff]
      %v269 = vld [vmem:[%s236] sm:$0xf]
      %v270 = vld [vmem:[%s236 + $0x4] sm:$0xf]
      %v271 = vld [vmem:[%s245] sm:$0xf]
      %v272 = vld [vmem:[%s245 + $0x4] sm:$0xf]
      %v273 = vld [vmem:[%s245 + $0x8] sm:$0xf]
      %v274 = vld [vmem:[%s245 + $0xc] sm:$0xf]
      %v275 = vld [vmem:[%s245 + $0x10] sm:$0xf]
      %v276 = vld [vmem:[%s245 + $0x14] sm:$0xf]
      %v277 = vld [vmem:[%s245 + $0x18] sm:$0xf]
      %v278 = vld [vmem:[%s245 + $0x1c] sm:$0xf]
      %v281 = vunpack.c.l.b16 %v269
      %v282 = vunpack.c.l.b16 %v270
      %v283 = vpack.c.b16 %v282, %v281
      %v292 = vunpack.c.l.b16 %v271
      %v293 = vunpack.c.l.b16 %v272
      %v294 = vunpack.c.l.b16 %v273
      %v295 = vunpack.c.l.b16 %v274
      %v296 = vunpack.c.l.b16 %v275
      %v297 = vunpack.c.l.b16 %v276
      %v298 = vunpack.c.l.b16 %v277
      %v299 = vunpack.c.l.b16 %v278
      %v300 = vpack.c.b16 %v293, %v292
      %v301 = vpack.c.b16 %v295, %v294
      %v302 = vpack.c.b16 %v297, %v296
      %v303 = vpack.c.b16 %v299, %v298
      %vm308 = vcmask 523264
      %v310 = vsel %vm308, %v283, 0
      %312 = vmatprep.subr.bf16.mxu0 0
      %313 = vmatpush1.bf16.msra.mxu0 0
      %314 = vmatprep.subr.bf16.mxu0 0
      %315 = vmatpush1.bf16.msra.mxu0 0
      %316 = vmatprep.subr.bf16.mxu0 0
      %317 = vmatpush1.bf16.msra.mxu0 0
      %318 = vmatprep.subr.bf16.mxu0 0
      %319 = vmatpush1.bf16.msra.mxu0 0
      %320 = vmatprep.subr.bf16.mxu0 0
      %321 = vmatpush1.bf16.msra.mxu0 %v303
      %322 = vmatprep.subr.bf16.mxu0 0
      %323 = vmatpush1.bf16.msra.mxu0 %v302
      %324 = vmatprep.subr.bf16.mxu0 0
      %325 = vmatpush1.bf16.msra.mxu0 %v301
      %326 = vmatprep.subr.bf16.mxu0 0
      %327 = vmatpush1.bf16.msra.mxu0 %v300
      %328 = vmatprep.subr.bf16.mxu0 0
      %329 = vmatpush2.bf16.msra.mxu0 0
      %330 = vmatprep.subr.bf16.mxu0 0
      %331 = vmatpush2.bf16.msra.mxu0 0
      %332 = vmatprep.subr.bf16.mxu0 0
      %333 = vmatpush2.bf16.msra.mxu0 0
      %334 = vmatprep.subr.bf16.mxu0 0
      %335 = vmatpush2.bf16.msra.mxu0 0
      %336 = vmatprep.subr.bf16.mxu0 0
      %337 = vmatpush2.bf16.msra.mxu0 0
      %338 = vmatprep.subr.bf16.mxu0 0
      %339 = vmatpush2.bf16.msra.mxu0 0
      %340 = vmatprep.subr.bf16.mxu0 0
      %341 = vmatpush2.bf16.msra.mxu0 0
      %342 = vmatprep.subr.bf16.mxu0 0
      %343 = vmatpush2.bf16.msra.mxu0 0
      %344 = vmatprep.mubr.bf16.mxu0 0
      %345 = vmatmul.mubr.bf16.gmra.mxu0 %v310
      %v346 = vpop.f32.mrf.mxu0
      %v347 = vadd.f32 0.0, %v346
      %v348 = vpop.f32.mrf.mxu0
      %v349 = vpop.f32.mrf.mxu0
      %v350 = vadd.f32 0.0, %v349
      %v351 = vpop.f32.mrf.mxu0
      %352 = vdwg.mxu0
      %v353 = vadd.f32 %v267, %v347
      %v354 = vadd.f32 %v268, %v350
      %vm355 = vcmask 261120
      %356 = vst.msk [vmem:[#allocation2] sm:$0xff] %vm355, %v353
      %357 = vst.msk [vmem:[#allocation2 + $0x8] sm:$0xff] %vm355, %v354
      // Predicated region
      $region37: #{simplenet_forward.4} parent=31 // pred_check
        %p358 = pneg %p260
      $region38: #{simplenet_forward.4} parent=31 // pred_check_branch
        %360 = sbr.rel (%p358) target = $region40
      $region39: #{simplenet_forward.4} parent=31 // pred_region
        %v361 = vld [vmem:[#allocation2] sm:$0xff]
        %v362 = vld [vmem:[#allocation2 + $0x8] sm:$0xff]
        %v363 = vld [vmem:[%s249] sm:$0x1]
        %v365 = vlaneseq
        %v366 = vshrl.u32 %v365, 7
        %v367 = vsub.s32 0, %v366
        %v368 = vrot.slane %v363, %v367
        %v370 = vadd.f32 %v361, %v368
        %v371 = vadd.f32 %v362, %v368
        %v372 = vpack.c.bf16 %v371, %v370
        %v374 = vunpack.c.l.b16 %v372
        %v375 = vunpack.c.h.b16 %v372
        %v376 = vpack.c.b16 %v374, %v374
        %v377 = vpack.c.b16 %v375, %v375
        %vm380 = vcmask 257024
        %381 = vst.msk [vmem:[%s257] sm:$0xf] %vm380, %v376
        %382 = vst.msk [vmem:[%s257 + $0x4] sm:$0xf] %vm380, %v377
      $region40: #{simplenet_forward.4} parent=31 // pred_fallthru
        _
      %s383 = smul.u32 2, %s19
      %p384 = scmp.lt.s32.totalorder %s383, 3
      %s385 = scalar_select %p384, %s383, 3
      %p386 = scmp.lt.s32.totalorder %s20, 0
      %s387 = scalar_select %p386, %s20, 0
      %s388 = sadd.s32 %s387, %s385
      %s389 = smul.addr %s388, 4
      %s390 = scalar_lea.vmem %s3, %s389
      // Predicated region
      $region41: #{simplenet_forward.4} parent=31 // pred_check
        %p391 = pneg %p135
      $region42: #{simplenet_forward.4} parent=31 // pred_check_branch
        %393 = sbr.rel (%p391) target = $region44
      $region43: #{simplenet_forward.4} parent=31 // pred_region
        %s394 = smul.u32 2, %s19
      $region44: #{simplenet_forward.4} parent=31 // pred_fallthru
        _
    $region32: #{simplenet_forward.4} parent=5 // pred_fallthru
      _
    %p395 = scmp.le.s32.totalorder 2, %s9
    // Predicated region
    $region45: #{simplenet_forward.4} parent=5 // pred_check
      %p396 = pneg %p395
    $region46: #{simplenet_forward.4} parent=5 // pred_check_branch
      %398 = sbr.rel (%p396) target = $region48
    $region47: #{simplenet_forward.4} parent=5 // pred_region
      %s399 = ssub.s32 %s9, 2
      // Predicated region
      $region49: #{simplenet_forward.4} parent=47 // pred_check
        %p400 = pneg %p141
      $region50: #{simplenet_forward.4} parent=47 // pred_check_branch
        %402 = sbr.rel (%p400) target = $region52
      $region51: #{simplenet_forward.4} parent=47 // pred_region
        %s403 = smul.u32 2, %s22
        %p404 = scmp.lt.s32.totalorder %s403, 3
        %s405 = scalar_select %p404, %s403, 3
        %p406 = scmp.lt.s32.totalorder %s23, 0
        %s407 = scalar_select %p406, %s23, 0
        %s408 = sadd.s32 %s407, %s405
        %s409 = smul.addr %s408, 4
        %s410 = scalar_lea.vmem %s3, %s409
      $region52: #{simplenet_forward.4} parent=47 // pred_fallthru
        _
    $region48: #{simplenet_forward.4} parent=5 // pred_fallthru
      _
  $region6: #{simplenet_forward.4} parent=0 // loop_footer
    %s13 = sadd.s32 1, %s9
  $region7: #{simplenet_forward.4} parent=0 // loop_footer_branch
    %8 = sbr.rel target = $region3
  $region8: #{simplenet_forward.4} parent=0 // loop_exit
    _

// kernel: simplenet_forward.5
$region0: #{simplenet_forward.5}
  #allocation0 [shape = 'u32[]', space=smem, size = 0x4, offset = 0x4, fixed_abs, tag = 'smem constant byte address 0x4 - core index']
  #allocation1 [shape = 'u32[144,128]{1,0:T(1,128)}', space=vmem, size = 0x12000, scoped, tag = 'internal scratch']
  %s0 = inlined_call_operand.vmem [shape: bf16[2,4,128], index: 0, kind: input, shape index: {}]
  %s1 = inlined_call_operand.vmem [shape: bf16[128,64], index: 1, kind: input, shape index: {}]
  %s2 = inlined_call_operand.vmem [shape: f32[1,64], index: 2, kind: input, shape index: {}]
  %s3 = inlined_call_operand.vmem [shape: bf16[64,384], index: 3, kind: input, shape index: {}]
  %s4 = inlined_call_operand.vmem [shape: f32[1,384], index: 4, kind: input, shape index: {}]
  %s5 = inlined_call_operand.vmem [shape: bf16[128,64], index: 5, kind: input, shape index: {}]
  %s6 = inlined_call_operand.vmem [shape: f32[1,64], index: 6, kind: input, shape index: {}]
  %s7 = inlined_call_operand.vmem [shape: bf16[64,128], index: 7, kind: input, shape index: {}]
  %s8 = inlined_call_operand.vmem [shape: f32[1,128], index: 8, kind: input, shape index: {}]
  %s9 = inlined_call_operand.vmem [shape: bf16[2,4,128], index: 9, kind: output, shape index: {}]
  %s10 = sld [smem:[#allocation0]]
  $region69: #{simplenet_forward.5} parent=0
    _
  %s12 = ssub.s32 1, %s10
  %s13 = scalar_select 0, %s12, %s10
  loop: start=0, step=1, limit=4
  $region2: #{simplenet_forward.5} parent=0 // loop_pre_header
    _
  $region3: #{simplenet_forward.5} parent=0 // loop_header
    %s15 = sphi 0, %s19
    %p16 = scmp.ge.s32.totalorder %s15, 4
    %s25 = sphi 0, %s27
    %s28 = sphi 0, %s25
    %s29 = sphi 0, %s28
    %s45 = sphi 0, %s29
    %s49 = sphi 0, %s49
    %s51 = sphi 0, %s49
    %s52 = sphi 0, %s51
    %s66 = sphi 0, %s52
    %s70 = sphi 0, %s70
    %s72 = sphi 0, %s70
    %s73 = sphi 0, %s72
    %s87 = sphi 0, %s73
    %s91 = sphi 0, %s91
    %s93 = sphi 0, %s91
    %s94 = sphi 0, %s93
    %s108 = sphi 0, %s94
    %s112 = sphi 0, %s112
    %s114 = sphi 0, %s112
    %s115 = sphi 0, %s114
    %s129 = sphi 0, %s115
    %s133 = sphi 0, %s133
    %s135 = sphi 0, %s133
    %s136 = sphi 0, %s135
    %s150 = sphi 0, %s136
    %s154 = sphi 0, %s154
    %s156 = sphi 0, %s154
    %s157 = sphi 0, %s156
    %s171 = sphi 0, %s157
    %s175 = sphi 0, %s175
    %s177 = sphi 0, %s175
    %s178 = sphi 0, %s177
    %s192 = sphi 0, %s178
    %s196 = sphi 0, %s196
    %s198 = sphi 0, %s196
    %s199 = sphi 0, %s198
    %s213 = sphi 0, %s199
    %s219 = sphi 0, %s221
    %s222 = sphi 0, %s219
    %s223 = sphi 0, %s222
    %s239 = sphi 0, %s223
  $region4: #{simplenet_forward.5} parent=0 // loop_header_branch
    %18 = sbr.rel (%p16) target = $region8
  $region5: #{simplenet_forward.5} parent=0 // loop_body
    %s20 = ssub.s32 %s15, 1
    %s21 = ssub.s32 %s15, 2
    %s22 = sadd.s32 %s15, 1
    %s23 = ssub.s32 %s15, %s22
    %p24 = scmp.eq.s32.totalorder %s23, 0
    %s26 = sadd.s32 %s25, 1
    %s27 = scalar_select %p24, %s25, %s26
    %p30 = pneg %p24
    %p31 = scmp.eq.s32.totalorder %s15, 1
    %p32 = por %p30, %p31
    %p33 = scmp.ne.s32.totalorder %s25, %s28
    %p34 = scmp.eq.s32.totalorder %s15, 0
    %p35 = por %p33, %p34
    %p36 = scmp.ne.s32.totalorder %s25, %s28
    %p37 = scmp.eq.s32.totalorder %s20, 1
    %p38 = por %p36, %p37
    %p39 = scmp.ne.s32.totalorder %s28, %s29
    %p40 = scmp.eq.s32.totalorder %s20, 0
    %p41 = por %p39, %p40
    %p42 = scmp.ne.s32.totalorder %s28, %s29
    %p43 = scmp.eq.s32.totalorder %s21, 1
    %p44 = por %p42, %p43
    %p46 = scmp.ne.s32.totalorder %s29, %s45
    %p47 = scmp.eq.s32.totalorder %s21, 0
    %p48 = por %p46, %p47
    %s50 = sadd.s32 %s49, 1
    %p53 = scmp.eq.s32.totalorder %s15, 1
    %p54 = scmp.ne.s32.totalorder %s49, %s51
    %p55 = scmp.eq.s32.totalorder %s15, 0
    %p56 = por %p54, %p55
    %p57 = scmp.ne.s32.totalorder %s49, %s51
    %p58 = scmp.eq.s32.totalorder %s20, 1
    %p59 = por %p57, %p58
    %p60 = scmp.ne.s32.totalorder %s51, %s52
    %p61 = scmp.eq.s32.totalorder %s20, 0
    %p62 = por %p60, %p61
    %p63 = scmp.ne.s32.totalorder %s51, %s52
    %p64 = scmp.eq.s32.totalorder %s21, 1
    %p65 = por %p63, %p64
    %p67 = scmp.ne.s32.totalorder %s52, %s66
    %p68 = scmp.eq.s32.totalorder %s21, 0
    %p69 = por %p67, %p68
    %s71 = sadd.s32 %s70, 1
    %p74 = scmp.eq.s32.totalorder %s15, 1
    %p75 = scmp.ne.s32.totalorder %s70, %s72
    %p76 = scmp.eq.s32.totalorder %s15, 0
    %p77 = por %p75, %p76
    %p78 = scmp.ne.s32.totalorder %s70, %s72
    %p79 = scmp.eq.s32.totalorder %s20, 1
    %p80 = por %p78, %p79
    %p81 = scmp.ne.s32.totalorder %s72, %s73
    %p82 = scmp.eq.s32.totalorder %s20, 0
    %p83 = por %p81, %p82
    %p84 = scmp.ne.s32.totalorder %s72, %s73
    %p85 = scmp.eq.s32.totalorder %s21, 1
    %p86 = por %p84, %p85
    %p88 = scmp.ne.s32.totalorder %s73, %s87
    %p89 = scmp.eq.s32.totalorder %s21, 0
    %p90 = por %p88, %p89
    %s92 = sadd.s32 %s91, 1
    %p95 = scmp.eq.s32.totalorder %s15, 1
    %p96 = scmp.ne.s32.totalorder %s91, %s93
    %p97 = scmp.eq.s32.totalorder %s15, 0
    %p98 = por %p96, %p97
    %p99 = scmp.ne.s32.totalorder %s91, %s93
    %p100 = scmp.eq.s32.totalorder %s20, 1
    %p101 = por %p99, %p100
    %p102 = scmp.ne.s32.totalorder %s93, %s94
    %p103 = scmp.eq.s32.totalorder %s20, 0
    %p104 = por %p102, %p103
    %p105 = scmp.ne.s32.totalorder %s93, %s94
    %p106 = scmp.eq.s32.totalorder %s21, 1
    %p107 = por %p105, %p106
    %p109 = scmp.ne.s32.totalorder %s94, %s108
    %p110 = scmp.eq.s32.totalorder %s21, 0
    %p111 = por %p109, %p110
    %s113 = sadd.s32 %s112, 1
    %p116 = scmp.eq.s32.totalorder %s15, 1
    %p117 = scmp.ne.s32.totalorder %s112, %s114
    %p118 = scmp.eq.s32.totalorder %s15, 0
    %p119 = por %p117, %p118
    %p120 = scmp.ne.s32.totalorder %s112, %s114
    %p121 = scmp.eq.s32.totalorder %s20, 1
    %p122 = por %p120, %p121
    %p123 = scmp.ne.s32.totalorder %s114, %s115
    %p124 = scmp.eq.s32.totalorder %s20, 0
    %p125 = por %p123, %p124
    %p126 = scmp.ne.s32.totalorder %s114, %s115
    %p127 = scmp.eq.s32.totalorder %s21, 1
    %p128 = por %p126, %p127
    %p130 = scmp.ne.s32.totalorder %s115, %s129
    %p131 = scmp.eq.s32.totalorder %s21, 0
    %p132 = por %p130, %p131
    %s134 = sadd.s32 %s133, 1
    %p137 = scmp.eq.s32.totalorder %s15, 1
    %p138 = scmp.ne.s32.totalorder %s133, %s135
    %p139 = scmp.eq.s32.totalorder %s15, 0
    %p140 = por %p138, %p139
    %p141 = scmp.ne.s32.totalorder %s133, %s135
    %p142 = scmp.eq.s32.totalorder %s20, 1
    %p143 = por %p141, %p142
    %p144 = scmp.ne.s32.totalorder %s135, %s136
    %p145 = scmp.eq.s32.totalorder %s20, 0
    %p146 = por %p144, %p145
    %p147 = scmp.ne.s32.totalorder %s135, %s136
    %p148 = scmp.eq.s32.totalorder %s21, 1
    %p149 = por %p147, %p148
    %p151 = scmp.ne.s32.totalorder %s136, %s150
    %p152 = scmp.eq.s32.totalorder %s21, 0
    %p153 = por %p151, %p152
    %s155 = sadd.s32 %s154, 1
    %p158 = scmp.eq.s32.totalorder %s15, 1
    %p159 = scmp.ne.s32.totalorder %s154, %s156
    %p160 = scmp.eq.s32.totalorder %s15, 0
    %p161 = por %p159, %p160
    %p162 = scmp.ne.s32.totalorder %s154, %s156
    %p163 = scmp.eq.s32.totalorder %s20, 1
    %p164 = por %p162, %p163
    %p165 = scmp.ne.s32.totalorder %s156, %s157
    %p166 = scmp.eq.s32.totalorder %s20, 0
    %p167 = por %p165, %p166
    %p168 = scmp.ne.s32.totalorder %s156, %s157
    %p169 = scmp.eq.s32.totalorder %s21, 1
    %p170 = por %p168, %p169
    %p172 = scmp.ne.s32.totalorder %s157, %s171
    %p173 = scmp.eq.s32.totalorder %s21, 0
    %p174 = por %p172, %p173
    %s176 = sadd.s32 %s175, 1
    %p179 = scmp.eq.s32.totalorder %s15, 1
    %p180 = scmp.ne.s32.totalorder %s175, %s177
    %p181 = scmp.eq.s32.totalorder %s15, 0
    %p182 = por %p180, %p181
    %p183 = scmp.ne.s32.totalorder %s175, %s177
    %p184 = scmp.eq.s32.totalorder %s20, 1
    %p185 = por %p183, %p184
    %p186 = scmp.ne.s32.totalorder %s177, %s178
    %p187 = scmp.eq.s32.totalorder %s20, 0
    %p188 = por %p186, %p187
    %p189 = scmp.ne.s32.totalorder %s177, %s178
    %p190 = scmp.eq.s32.totalorder %s21, 1
    %p191 = por %p189, %p190
    %p193 = scmp.ne.s32.totalorder %s178, %s192
    %p194 = scmp.eq.s32.totalorder %s21, 0
    %p195 = por %p193, %p194
    %s197 = sadd.s32 %s196, 1
    %p200 = scmp.eq.s32.totalorder %s15, 1
    %p201 = scmp.ne.s32.totalorder %s196, %s198
    %p202 = scmp.eq.s32.totalorder %s15, 0
    %p203 = por %p201, %p202
    %p204 = scmp.ne.s32.totalorder %s196, %s198
    %p205 = scmp.eq.s32.totalorder %s20, 1
    %p206 = por %p204, %p205
    %p207 = scmp.ne.s32.totalorder %s198, %s199
    %p208 = scmp.eq.s32.totalorder %s20, 0
    %p209 = por %p207, %p208
    %p210 = scmp.ne.s32.totalorder %s198, %s199
    %p211 = scmp.eq.s32.totalorder %s21, 1
    %p212 = por %p210, %p211
    %p214 = scmp.ne.s32.totalorder %s199, %s213
    %p215 = scmp.eq.s32.totalorder %s21, 0
    %p216 = por %p214, %p215
    %s217 = ssub.s32 %s15, %s22
    %p218 = scmp.eq.s32.totalorder %s217, 0
    %s220 = sadd.s32 %s219, 1
    %s221 = scalar_select %p218, %s219, %s220
    %p224 = pneg %p218
    %p225 = scmp.eq.s32.totalorder %s15, 1
    %p226 = por %p224, %p225
    %p227 = scmp.ne.s32.totalorder %s219, %s222
    %p228 = scmp.eq.s32.totalorder %s15, 0
    %p229 = por %p227, %p228
    %p230 = scmp.ne.s32.totalorder %s219, %s222
    %p231 = scmp.eq.s32.totalorder %s20, 1
    %p232 = por %p230, %p231
    %p233 = scmp.ne.s32.totalorder %s222, %s223
    %p234 = scmp.eq.s32.totalorder %s20, 0
    %p235 = por %p233, %p234
    %p236 = scmp.ne.s32.totalorder %s222, %s223
    %p237 = scmp.eq.s32.totalorder %s21, 1
    %p238 = por %p236, %p237
    %p240 = scmp.ne.s32.totalorder %s223, %s239
    %p241 = scmp.eq.s32.totalorder %s21, 0
    %p242 = por %p240, %p241
    %p243 = scmp.le.s32.totalorder 1, %s15
    %p244 = scmp.lt.s32.totalorder %s15, 3
    %p245 = pnand %p243, %p244
    %p246 = pneg %p245
    // Predicated region
    $region9: #{simplenet_forward.5} parent=5 // pred_check
      _
    $region10: #{simplenet_forward.5} parent=5 // pred_check_branch
      %248 = sbr.rel (%p245) target = $region12
    $region11: #{simplenet_forward.5} parent=5 // pred_region
      %s249 = ssub.s32 %s15, 1
      // Predicated region
      $region13: #{simplenet_forward.5} parent=11 // pred_check
        %p250 = pneg %p62
      $region14: #{simplenet_forward.5} parent=11 // pred_check_branch
        %252 = sbr.rel (%p250) target = $region16
      $region15: #{simplenet_forward.5} parent=11 // pred_region
        _
      $region16: #{simplenet_forward.5} parent=11 // pred_fallthru
        _
      // Predicated region
      $region17: #{simplenet_forward.5} parent=11 // pred_check
        %p253 = pneg %p83
      $region18: #{simplenet_forward.5} parent=11 // pred_check_branch
        %255 = sbr.rel (%p253) target = $region20
      $region19: #{simplenet_forward.5} parent=11 // pred_region
        _
      $region20: #{simplenet_forward.5} parent=11 // pred_fallthru
        _
      // Predicated region
      $region21: #{simplenet_forward.5} parent=11 // pred_check
        %p256 = pneg %p104
      $region22: #{simplenet_forward.5} parent=11 // pred_check_branch
        %258 = sbr.rel (%p256) target = $region24
      $region23: #{simplenet_forward.5} parent=11 // pred_region
        _
      $region24: #{simplenet_forward.5} parent=11 // pred_fallthru
        _
      // Predicated region
      $region25: #{simplenet_forward.5} parent=11 // pred_check
        %p259 = pneg %p125
      $region26: #{simplenet_forward.5} parent=11 // pred_check_branch
        %261 = sbr.rel (%p259) target = $region28
      $region27: #{simplenet_forward.5} parent=11 // pred_region
        _
      $region28: #{simplenet_forward.5} parent=11 // pred_fallthru
        _
      // Predicated region
      $region29: #{simplenet_forward.5} parent=11 // pred_check
        %p262 = pneg %p146
      $region30: #{simplenet_forward.5} parent=11 // pred_check_branch
        %264 = sbr.rel (%p262) target = $region32
      $region31: #{simplenet_forward.5} parent=11 // pred_region
        _
      $region32: #{simplenet_forward.5} parent=11 // pred_fallthru
        _
      // Predicated region
      $region33: #{simplenet_forward.5} parent=11 // pred_check
        %p265 = pneg %p167
      $region34: #{simplenet_forward.5} parent=11 // pred_check_branch
        %267 = sbr.rel (%p265) target = $region36
      $region35: #{simplenet_forward.5} parent=11 // pred_region
        _
      $region36: #{simplenet_forward.5} parent=11 // pred_fallthru
        _
      // Predicated region
      $region37: #{simplenet_forward.5} parent=11 // pred_check
        %p268 = pneg %p188
      $region38: #{simplenet_forward.5} parent=11 // pred_check_branch
        %270 = sbr.rel (%p268) target = $region40
      $region39: #{simplenet_forward.5} parent=11 // pred_region
        _
      $region40: #{simplenet_forward.5} parent=11 // pred_fallthru
        _
      // Predicated region
      $region41: #{simplenet_forward.5} parent=11 // pred_check
        %p271 = pneg %p209
      $region42: #{simplenet_forward.5} parent=11 // pred_check_branch
        %273 = sbr.rel (%p271) target = $region44
      $region43: #{simplenet_forward.5} parent=11 // pred_region
        _
      $region44: #{simplenet_forward.5} parent=11 // pred_fallthru
        _
    $region12: #{simplenet_forward.5} parent=5 // pred_fallthru
      _
    %p274 = scmp.lt.s32.totalorder %s15, 2
    // Predicated region
    $region45: #{simplenet_forward.5} parent=5 // pred_check
      %p275 = pneg %p274
    $region46: #{simplenet_forward.5} parent=5 // pred_check_branch
      %277 = sbr.rel (%p275) target = $region48
    $region47: #{simplenet_forward.5} parent=5 // pred_region
      // Predicated region
      $region49: #{simplenet_forward.5} parent=47 // pred_check
        %p278 = pneg %p35
      $region50: #{simplenet_forward.5} parent=47 // pred_check_branch
        %280 = sbr.rel (%p278) target = $region52
      $region51: #{simplenet_forward.5} parent=47 // pred_region
        %p281 = scmp.lt.s32.totalorder %s15, 1
        %s282 = scalar_select %p281, %s15, 1
        %s283 = smul.addr %s282, 2
        %s284 = scalar_lea.vmem %s0, %s283
      $region52: #{simplenet_forward.5} parent=47 // pred_fallthru
        _
    $region48: #{simplenet_forward.5} parent=5 // pred_fallthru
      _
    %p285 = scmp.le.s32.totalorder 1, %s15
    %p286 = scmp.lt.s32.totalorder %s15, 3
    %p287 = pnand %p285, %p286
    %p288 = pneg %p287
    // Predicated region
    $region53: #{simplenet_forward.5} parent=5 // pred_check
      _
    $region54: #{simplenet_forward.5} parent=5 // pred_check_branch
      %290 = sbr.rel (%p287) target = $region56
    $region55: #{simplenet_forward.5} parent=5 // pred_region
      %s291 = ssub.s32 %s15, 1
      %p292 = scmp.lt.s32.totalorder %s20, 1
      %s293 = scalar_select %p292, %s20, 1
      %s294 = smul.addr %s293, 2
      %s295 = scalar_lea.vmem %s0, %s294
      %p296 = pneg %p41
      %p297 = pneg %p38
      %p298 = pneg %p62
      %p299 = pneg %p59
      %p300 = pneg %p83
      %p301 = pneg %p80
      %p302 = pneg %p104
      %p303 = pneg %p101
      %p304 = pneg %p125
      %p305 = pneg %p122
      %p306 = pneg %p146
      %p307 = pneg %p143
      %p308 = pneg %p167
      %p309 = pneg %p164
      %p310 = pneg %p188
      %p311 = pneg %p185
      %p312 = pneg %p209
      %p313 = pneg %p206
      %p314 = pneg %p235
      %p315 = pneg %p232
      %p316 = scmp.lt.s32.totalorder %s20, 1
      %s317 = scalar_select %p316, %s20, 1
      %s318 = smul.addr %s317, 2
      %s319 = scalar_lea.vmem %s9, %s318
      %p320 = scmp.lt.s32.totalorder %s20, 1
      %s321 = scalar_select %p320, %s20, 1
      %s322 = smul.addr %s321, 2
      %s323 = scalar_lea.vmem %s0, %s322
      %p324 = scmp.lt.s32.totalorder %s20, 1
      %s325 = scalar_select %p324, %s20, 1
      %s326 = smul.addr %s325, 2
      %s327 = scalar_lea.vmem %s9, %s326
      %v329 = vld [vmem:[%s323] sm:$0x3]
      %v330 = vld [vmem:[%s1] sm:$0xf]
      %v331 = vld [vmem:[%s1 + $0x4] sm:$0xf]
      %v332 = vld [vmem:[%s1 + $0x8] sm:$0xf]
      %v333 = vld [vmem:[%s1 + $0xc] sm:$0xf]
      %v334 = vld [vmem:[%s1 + $0x10] sm:$0xf]
      %v335 = vld [vmem:[%s1 + $0x14] sm:$0xf]
      %v336 = vld [vmem:[%s1 + $0x18] sm:$0xf]
      %v337 = vld [vmem:[%s1 + $0x1c] sm:$0xf]
      %v338 = vld [vmem:[%s1 + $0x20] sm:$0xf]
      %v339 = vld [vmem:[%s1 + $0x24] sm:$0xf]
      %v340 = vld [vmem:[%s1 + $0x28] sm:$0xf]
      %v341 = vld [vmem:[%s1 + $0x2c] sm:$0xf]
      %v342 = vld [vmem:[%s1 + $0x30] sm:$0xf]
      %v343 = vld [vmem:[%s1 + $0x34] sm:$0xf]
      %v344 = vld [vmem:[%s1 + $0x38] sm:$0xf]
      %v345 = vld [vmem:[%s1 + $0x3c] sm:$0xf]
      %v346 = vld [vmem:[%s2] sm:$0x1]
      %v348 = vlaneseq
      %v349 = vshrl.u32 %v348, 7
      %v350 = vsub.s32 0, %v349
      %v351 = vrot.slane %v346, %v350
      %v369 = vunpack.c.l.b16 %v330
      %v370 = vunpack.c.l.b16 %v331
      %v371 = vunpack.c.l.b16 %v332
      %v372 = vunpack.c.l.b16 %v333
      %v373 = vunpack.c.l.b16 %v334
      %v374 = vunpack.c.l.b16 %v335
      %v375 = vunpack.c.l.b16 %v336
      %v376 = vunpack.c.l.b16 %v337
      %v377 = vunpack.c.l.b16 %v338
      %v378 = vunpack.c.l.b16 %v339
      %v379 = vunpack.c.l.b16 %v340
      %v380 = vunpack.c.l.b16 %v341
      %v381 = vunpack.c.l.b16 %v342
      %v382 = vunpack.c.l.b16 %v343
      %v383 = vunpack.c.l.b16 %v344
      %v384 = vunpack.c.l.b16 %v345
      %v385 = vpack.c.b16 %v370, %v369
      %v386 = vpack.c.b16 %v372, %v371
      %v387 = vpack.c.b16 %v374, %v373
      %v388 = vpack.c.b16 %v376, %v375
      %v389 = vpack.c.b16 %v378, %v377
      %v390 = vpack.c.b16 %v380, %v379
      %v391 = vpack.c.b16 %v382, %v381
      %v392 = vpack.c.b16 %v384, %v383
      %401 = vmatprep.subr.bf16.mxu0 0
      %402 = vmatpush1.bf16.msra.mxu0 %v392
      %403 = vmatprep.subr.bf16.mxu0 0
      %404 = vmatpush1.bf16.msra.mxu0 %v391
      %405 = vmatprep.subr.bf16.mxu0 0
      %406 = vmatpush1.bf16.msra.mxu0 %v390
      %407 = vmatprep.subr.bf16.mxu0 0
      %408 = vmatpush1.bf16.msra.mxu0 %v389
      %409 = vmatprep.subr.bf16.mxu0 0
      %410 = vmatpush1.bf16.msra.mxu0 %v388
      %411 = vmatprep.subr.bf16.mxu0 0
      %412 = vmatpush1.bf16.msra.mxu0 %v387
      %413 = vmatprep.subr.bf16.mxu0 0
      %414 = vmatpush1.bf16.msra.mxu0 %v386
      %415 = vmatprep.subr.bf16.mxu0 0
      %416 = vmatpush1.bf16.msra.mxu0 %v385
      %417 = vmatprep.subr.bf16.mxu0 0
      %418 = vmatpush2.bf16.msra.mxu0 0
      %419 = vmatprep.subr.bf16.mxu0 0
      %420 = vmatpush2.bf16.msra.mxu0 0
      %421 = vmatprep.subr.bf16.mxu0 0
      %422 = vmatpush2.bf16.msra.mxu0 0
      %423 = vmatprep.subr.bf16.mxu0 0
      %424 = vmatpush2.bf16.msra.mxu0 0
      %425 = vmatprep.subr.bf16.mxu0 0
      %426 = vmatpush2.bf16.msra.mxu0 0
      %427 = vmatprep.subr.bf16.mxu0 0
      %428 = vmatpush2.bf16.msra.mxu0 0
      %429 = vmatprep.subr.bf16.mxu0 0
      %430 = vmatpush2.bf16.msra.mxu0 0
      %431 = vmatprep.subr.bf16.mxu0 0
      %432 = vmatpush2.bf16.msra.mxu0 0
      %433 = vmatprep.mubr.bf16.mxu0 0
      %434 = vmatmul.mubr.bf16.gmra.mxu0 %v329
      %v435 = vpop.f32.mrf.mxu0
      %v436 = vadd.f32 %v351, %v435
      %v437 = vpop.f32.mrf.mxu0
      %v438 = vpop.f32.mrf.mxu0
      %v439 = vpop.f32.mrf.mxu0
      %440 = vdwg.mxu0
      %v441 = vpack.c.bf16 %v436, %v436
      %v442 = vld [vmem:[%s3] sm:$0xff]
      %v443 = vld [vmem:[%s3 + $0x8] sm:$0xf]
      %v444 = vld [vmem:[%s3 + $0xc] sm:$0xff]
      %v445 = vld [vmem:[%s3 + $0x14] sm:$0xf]
      %v446 = vld [vmem:[%s3 + $0x18] sm:$0xff]
      %v447 = vld [vmem:[%s3 + $0x20] sm:$0xf]
      %v448 = vld [vmem:[%s3 + $0x24] sm:$0xff]
      %v449 = vld [vmem:[%s3 + $0x2c] sm:$0xf]
      %v450 = vld [vmem:[%s3 + $0x30] sm:$0xff]
      %v451 = vld [vmem:[%s3 + $0x38] sm:$0xf]
      %v452 = vld [vmem:[%s3 + $0x3c] sm:$0xff]
      %v453 = vld [vmem:[%s3 + $0x44] sm:$0xf]
      %v454 = vld [vmem:[%s3 + $0x48] sm:$0xff]
      %v455 = vld [vmem:[%s3 + $0x50] sm:$0xf]
      %v456 = vld [vmem:[%s3 + $0x54] sm:$0xff]
      %v457 = vld [vmem:[%s3 + $0x5c] sm:$0xf]
      %v458 = vld [vmem:[%s4] sm:$0x7]
      %v460 = vlaneseq
      %v461 = vshrl.u32 %v460, 7
      %v462 = vsub.s32 0, %v461
      %v463 = vrot.slane %v458, %v462
      %v464 = vlaneseq
      %v465 = vshrl.u32 %v464, 7
      %v466 = vsub.s32 1, %v465
      %v467 = vrot.slane %v458, %v466
      %v468 = vlaneseq
      %v469 = vshrl.u32 %v468, 7
      %v470 = vsub.s32 2, %v469
      %v471 = vrot.slane %v458, %v470
      %v491 = vunpack.c.l.b16 %v442
      %v492 = vunpack.c.h.b16 %v442
      %v493 = vunpack.c.l.b16 %v443
      %v494 = vunpack.c.l.b16 %v444
      %v495 = vunpack.c.h.b16 %v444
      %v496 = vunpack.c.l.b16 %v445
      %v497 = vunpack.c.l.b16 %v446
      %v498 = vunpack.c.h.b16 %v446
      %v499 = vunpack.c.l.b16 %v447
      %v500 = vunpack.c.l.b16 %v448
      %v501 = vunpack.c.h.b16 %v448
      %v502 = vunpack.c.l.b16 %v449
      %v503 = vunpack.c.l.b16 %v450
      %v504 = vunpack.c.h.b16 %v450
      %v505 = vunpack.c.l.b16 %v451
      %v506 = vunpack.c.l.b16 %v452
      %v507 = vunpack.c.h.b16 %v452
      %v508 = vunpack.c.l.b16 %v453
      %v509 = vunpack.c.l.b16 %v454
      %v510 = vunpack.c.h.b16 %v454
      %v511 = vunpack.c.l.b16 %v455
      %v512 = vunpack.c.l.b16 %v456
      %v513 = vunpack.c.h.b16 %v456
      %v514 = vunpack.c.l.b16 %v457
      %v515 = vpack.c.b16 %v494, %v491
      %v516 = vpack.c.b16 %v495, %v492
      %v517 = vpack.c.b16 %v496, %v493
      %v518 = vpack.c.b16 %v500, %v497
      %v519 = vpack.c.b16 %v501, %v498
      %v520 = vpack.c.b16 %v502, %v499
      %v521 = vpack.c.b16 %v506, %v503
      %v522 = vpack.c.b16 %v507, %v504
      %v523 = vpack.c.b16 %v508, %v505
      %v524 = vpack.c.b16 %v512, %v509
      %v525 = vpack.c.b16 %v513, %v510
      %v526 = vpack.c.b16 %v514, %v511
      %vm539 = vcmask 523264
      %v541 = vsel %vm539, %v441, 0
      %543 = vmatprep.subr.bf16.mxu0 0
      %544 = vmatpush1.bf16.msra.mxu0 0
      %545 = vmatprep.subr.bf16.mxu0 0
      %546 = vmatpush1.bf16.msra.mxu0 0
      %547 = vmatprep.subr.bf16.mxu0 0
      %548 = vmatpush1.bf16.msra.mxu0 0
      %549 = vmatprep.subr.bf16.mxu0 0
      %550 = vmatpush1.bf16.msra.mxu0 0
      %551 = vmatprep.subr.bf16.mxu0 %v525
      %552 = vmatpush1.bf16.msra.mxu0 %v524
      %553 = vmatprep.subr.bf16.mxu0 %v522
      %554 = vmatpush1.bf16.msra.mxu0 %v521
      %555 = vmatprep.subr.bf16.mxu0 %v519
      %556 = vmatpush1.bf16.msra.mxu0 %v518
      %557 = vmatprep.subr.bf16.mxu0 %v516
      %558 = vmatpush1.bf16.msra.mxu0 %v515
      %559 = vmatprep.subr.bf16.mxu0 0
      %560 = vmatpush2.bf16.msra.mxu0 0
      %561 = vmatprep.subr.bf16.mxu0 0
      %562 = vmatpush2.bf16.msra.mxu0 0
      %563 = vmatprep.subr.bf16.mxu0 0
      %564 = vmatpush2.bf16.msra.mxu0 0
      %565 = vmatprep.subr.bf16.mxu0 0
      %566 = vmatpush2.bf16.msra.mxu0 0
      %567 = vmatprep.subr.bf16.mxu0 0
      %568 = vmatpush2.bf16.msra.mxu0 0
      %569 = vmatprep.subr.bf16.mxu0 0
      %570 = vmatpush2.bf16.msra.mxu0 0
      %571 = vmatprep.subr.bf16.mxu0 0
      %572 = vmatpush2.bf16.msra.mxu0 0
      %573 = vmatprep.subr.bf16.mxu0 0
      %574 = vmatpush2.bf16.msra.mxu0 0
      %575 = vmatprep.mubr.bf16.mxu0 0
      %576 = vmatmul.mubr.bf16.gmra.mxu0 %v541
      %v577 = vpop.f32.mrf.mxu0
      %v578 = vadd.f32 %v463, %v577
      %v579 = vpop.f32.mrf.mxu0
      %v580 = vadd.f32 %v467, %v579
      %v581 = vpop.f32.mrf.mxu0
      %v582 = vpop.f32.mrf.mxu0
      %583 = vdwg.mxu0
      %584 = vmatprep.subr.bf16.mxu0 0
      %585 = vmatpush1.bf16.msra.mxu0 0
      %586 = vmatprep.subr.bf16.mxu0 0
      %587 = vmatpush1.bf16.msra.mxu0 0
      %588 = vmatprep.subr.bf16.mxu0 0
      %589 = vmatpush1.bf16.msra.mxu0 0
      %590 = vmatprep.subr.bf16.mxu0 0
      %591 = vmatpush1.bf16.msra.mxu0 0
      %592 = vmatprep.subr.bf16.mxu0 0
      %593 = vmatpush1.bf16.msra.mxu0 %v526
      %594 = vmatprep.subr.bf16.mxu0 0
      %595 = vmatpush1.bf16.msra.mxu0 %v523
      %596 = vmatprep.subr.bf16.mxu0 0
      %597 = vmatpush1.bf16.msra.mxu0 %v520
      %598 = vmatprep.subr.bf16.mxu0 0
      %599 = vmatpush1.bf16.msra.mxu0 %v517
      %600 = vmatprep.subr.bf16.mxu0 0
      %601 = vmatpush2.bf16.msra.mxu0 0
      %602 = vmatprep.subr.bf16.mxu0 0
      %603 = vmatpush2.bf16.msra.mxu0 0
      %604 = vmatprep.subr.bf16.mxu0 0
      %605 = vmatpush2.bf16.msra.mxu0 0
      %606 = vmatprep.subr.bf16.mxu0 0
      %607 = vmatpush2.bf16.msra.mxu0 0
      %608 = vmatprep.subr.bf16.mxu0 0
      %609 = vmatpush2.bf16.msra.mxu0 0
      %610 = vmatprep.subr.bf16.mxu0 0
      %611 = vmatpush2.bf16.msra.mxu0 0
      %612 = vmatprep.subr.bf16.mxu0 0
      %613 = vmatpush2.bf16.msra.mxu0 0
      %614 = vmatprep.subr.bf16.mxu0 0
      %615 = vmatpush2.bf16.msra.mxu0 0
      %616 = vmatprep.mubr.bf16.mxu0 0
      %617 = vmatmul.mubr.bf16.gmra.mxu0 %v541
      %v618 = vpop.f32.mrf.mxu0
      %v619 = vadd.f32 %v471, %v618
      %v620 = vpop.f32.mrf.mxu0
      %v621 = vpop.f32.mrf.mxu0
      %v622 = vpop.f32.mrf.mxu0
      %623 = vdwg.mxu0
      %v624 = vpack.c.bf16 %v578, %v578
      %v625 = vpack.c.bf16 %v580, %v580
      %v626 = vpack.c.bf16 %v619, %v619
      %627 = vmatprep.subr.bf16.mxu0 0
      %628 = vmatpush1.bf16.xpose.msra.mxu0 0
      %629 = vmatprep.subr.bf16.mxu0 0
      %630 = vmatpush1.bf16.xpose.msra.mxu0 0
      %631 = vmatprep.subr.bf16.mxu0 0
      %632 = vmatpush1.bf16.xpose.msra.mxu0 0
      %633 = vmatprep.subr.bf16.mxu0 0
      %634 = vmatpush1.bf16.xpose.msra.mxu0 0
      %635 = vmatprep.subr.bf16.mxu0 0
      %636 = vmatpush1.bf16.xpose.msra.mxu0 0
      %637 = vmatprep.subr.bf16.mxu0 0
      %638 = vmatpush1.bf16.xpose.msra.mxu0 0
      %639 = vmatprep.subr.bf16.mxu0 0
      %640 = vmatpush1.bf16.xpose.msra.mxu0 0
      %641 = vmatprep.subr.bf16.mxu0 0
      %642 = vmatpush1.bf16.xpose.msra.mxu0 %v625
      %643 = vmatprep.subr.bf16.mxu0 0
      %644 = vmatpush2.bf16.xpose.msra.mxu0 0
      %645 = vmatprep.subr.bf16.mxu0 0
      %646 = vmatpush2.bf16.xpose.msra.mxu0 0
      %647 = vmatprep.subr.bf16.mxu0 0
      %648 = vmatpush2.bf16.xpose.msra.mxu0 0
      %649 = vmatprep.subr.bf16.mxu0 0
      %650 = vmatpush2.bf16.xpose.msra.mxu0 0
      %651 = vmatprep.subr.bf16.mxu0 0
      %652 = vmatpush2.bf16.xpose.msra.mxu0 0
      %653 = vmatprep.subr.bf16.mxu0 0
      %654 = vmatpush2.bf16.xpose.msra.mxu0 0
      %655 = vmatprep.subr.bf16.mxu0 0
      %656 = vmatpush2.bf16.xpose.msra.mxu0 0
      %657 = vmatprep.subr.bf16.mxu0 0
      %658 = vmatpush2.bf16.xpose.msra.mxu0 0
      %659 = vmatprep.mubr.bf16.mxu0 0
      %660 = vmatmul.mubr.bf16.gmra.mxu0 %v624
      %v661 = vpop.f32.mrf.mxu0
      %v662 = vadd.f32 0.0, %v661
      %v663 = vpop.f32.mrf.mxu0
      %v664 = vpop.f32.mrf.mxu0
      %v665 = vpop.f32.mrf.mxu0
      %666 = vdwg.mxu0
      %vm667 = vcmask 27648
      %v668 = vsel %vm667, %v662, -inf
      %669 = vmax.xlane.f32.xlu0 %v668
      %v670 = vpop.xlane.xlu0 %669
      %v671 = vsub.f32 %v662, %v670
      %v672 = vmul.f32 %v671, 1.442695
      %v673 = vpow.pop %v672
      %v674 = vsel %vm667, %v673, 0.0
      %675 = vadd.xlane.f32.xlu0 %v674
      %v676 = vpop.xlane.xlu0 %675
      %v677 = vrcp.pop %v676
      %v678 = vmul.f32 %v673, %v677
      %v679 = vpack.c.bf16 %v678, %v678
      %vm680 = vcmask 31744
      %v682 = vsel %vm680, %v679, 0
      %vm684 = vcmask 1041408
      %v686 = vsel %vm684, %v626, 0
      %688 = vmatprep.subr.bf16.mxu0 0
      %689 = vmatpush1.bf16.msra.mxu0 0
      %690 = vmatprep.subr.bf16.mxu0 0
      %691 = vmatpush1.bf16.msra.mxu0 0
      %692 = vmatprep.subr.bf16.mxu0 0
      %693 = vmatpush1.bf16.msra.mxu0 0
      %694 = vmatprep.subr.bf16.mxu0 0
      %695 = vmatpush1.bf16.msra.mxu0 0
      %696 = vmatprep.subr.bf16.mxu0 0
      %697 = vmatpush1.bf16.msra.mxu0 0
      %698 = vmatprep.subr.bf16.mxu0 0
      %699 = vmatpush1.bf16.msra.mxu0 0
      %700 = vmatprep.subr.bf16.mxu0 0
      %701 = vmatpush1.bf16.msra.mxu0 0
      %702 = vmatprep.subr.bf16.mxu0 0
      %703 = vmatpush1.bf16.msra.mxu0 %v686
      %704 = vmatprep.subr.bf16.mxu0 0
      %705 = vmatpush2.bf16.msra.mxu0 0
      %706 = vmatprep.subr.bf16.mxu0 0
      %707 = vmatpush2.bf16.msra.mxu0 0
      %708 = vmatprep.subr.bf16.mxu0 0
      %709 = vmatpush2.bf16.msra.mxu0 0
      %710 = vmatprep.subr.bf16.mxu0 0
      %711 = vmatpush2.bf16.msra.mxu0 0
      %712 = vmatprep.subr.bf16.mxu0 0
      %713 = vmatpush2.bf16.msra.mxu0 0
      %714 = vmatprep.subr.bf16.mxu0 0
      %715 = vmatpush2.bf16.msra.mxu0 0
      %716 = vmatprep.subr.bf16.mxu0 0
      %717 = vmatpush2.bf16.msra.mxu0 0
      %718 = vmatprep.subr.bf16.mxu0 0
      %719 = vmatpush2.bf16.msra.mxu0 0
      %720 = vmatprep.mubr.bf16.mxu0 0
      %721 = vmatmul.mubr.bf16.gmra.mxu0 %v682
      %v722 = vpop.f32.mrf.mxu0
      %v723 = vadd.f32 0.0, %v722
      %v724 = vpop.f32.mrf.mxu0
      %v725 = vpop.f32.mrf.mxu0
      %v726 = vpop.f32.mrf.mxu0
      %727 = vdwg.mxu0
      %v728 = vpack.c.bf16 %v723, %v723
      %v729 = vld [vmem:[%s5] sm:$0xf]
      %v730 = vld [vmem:[%s5 + $0x4] sm:$0xf]
      %v731 = vld [vmem:[%s5 + $0x8] sm:$0xf]
      %v732 = vld [vmem:[%s5 + $0xc] sm:$0xf]
      %v733 = vld [vmem:[%s5 + $0x10] sm:$0xf]
      %v734 = vld [vmem:[%s5 + $0x14] sm:$0xf]
      %v735 = vld [vmem:[%s5 + $0x18] sm:$0xf]
      %v736 = vld [vmem:[%s5 + $0x1c] sm:$0xf]
      %v737 = vld [vmem:[%s5 + $0x20] sm:$0xf]
      %v738 = vld [vmem:[%s5 + $0x24] sm:$0xf]
      %v739 = vld [vmem:[%s5 + $0x28] sm:$0xf]
      %v740 = vld [vmem:[%s5 + $0x2c] sm:$0xf]
      %v741 = vld [vmem:[%s5 + $0x30] sm:$0xf]
      %v742 = vld [vmem:[%s5 + $0x34] sm:$0xf]
      %v743 = vld [vmem:[%s5 + $0x38] sm:$0xf]
      %v744 = vld [vmem:[%s5 + $0x3c] sm:$0xf]
      %v745 = vld [vmem:[%s6] sm:$0x1]
      %v747 = vlaneseq
      %v748 = vshrl.u32 %v747, 7
      %v749 = vsub.s32 0, %v748
      %v750 = vrot.slane %v745, %v749
      %v768 = vunpack.c.l.b16 %v729
      %v769 = vunpack.c.l.b16 %v730
      %v770 = vunpack.c.l.b16 %v731
      %v771 = vunpack.c.l.b16 %v732
      %v772 = vunpack.c.l.b16 %v733
      %v773 = vunpack.c.l.b16 %v734
      %v774 = vunpack.c.l.b16 %v735
      %v775 = vunpack.c.l.b16 %v736
      %v776 = vunpack.c.l.b16 %v737
      %v777 = vunpack.c.l.b16 %v738
      %v778 = vunpack.c.l.b16 %v739
      %v779 = vunpack.c.l.b16 %v740
      %v780 = vunpack.c.l.b16 %v741
      %v781 = vunpack.c.l.b16 %v742
      %v782 = vunpack.c.l.b16 %v743
      %v783 = vunpack.c.l.b16 %v744
      %v784 = vpack.c.b16 %v769, %v768
      %v785 = vpack.c.b16 %v771, %v770
      %v786 = vpack.c.b16 %v773, %v772
      %v787 = vpack.c.b16 %v775, %v774
      %v788 = vpack.c.b16 %v777, %v776
      %v789 = vpack.c.b16 %v779, %v778
      %v790 = vpack.c.b16 %v781, %v780
      %v791 = vpack.c.b16 %v783, %v782
      %800 = vmatprep.subr.bf16.mxu0 0
      %801 = vmatpush1.bf16.msra.mxu0 %v791
      %802 = vmatprep.subr.bf16.mxu0 0
      %803 = vmatpush1.bf16.msra.mxu0 %v790
      %804 = vmatprep.subr.bf16.mxu0 0
      %805 = vmatpush1.bf16.msra.mxu0 %v789
      %806 = vmatprep.subr.bf16.mxu0 0
      %807 = vmatpush1.bf16.msra.mxu0 %v788
      %808 = vmatprep.subr.bf16.mxu0 0
      %809 = vmatpush1.bf16.msra.mxu0 %v787
      %810 = vmatprep.subr.bf16.mxu0 0
      %811 = vmatpush1.bf16.msra.mxu0 %v786
      %812 = vmatprep.subr.bf16.mxu0 0
      %813 = vmatpush1.bf16.msra.mxu0 %v785
      %814 = vmatprep.subr.bf16.mxu0 0
      %815 = vmatpush1.bf16.msra.mxu0 %v784
      %816 = vmatprep.subr.bf16.mxu0 0
      %817 = vmatpush2.bf16.msra.mxu0 0
      %818 = vmatprep.subr.bf16.mxu0 0
      %819 = vmatpush2.bf16.msra.mxu0 0
      %820 = vmatprep.subr.bf16.mxu0 0
      %821 = vmatpush2.bf16.msra.mxu0 0
      %822 = vmatprep.subr.bf16.mxu0 0
      %823 = vmatpush2.bf16.msra.mxu0 0
      %824 = vmatprep.subr.bf16.mxu0 0
      %825 = vmatpush2.bf16.msra.mxu0 0
      %826 = vmatprep.subr.bf16.mxu0 0
      %827 = vmatpush2.bf16.msra.mxu0 0
      %828 = vmatprep.subr.bf16.mxu0 0
      %829 = vmatpush2.bf16.msra.mxu0 0
      %830 = vmatprep.subr.bf16.mxu0 0
      %831 = vmatpush2.bf16.msra.mxu0 0
      %832 = vmatprep.mubr.bf16.mxu0 0
      %833 = vmatmul.mubr.bf16.gmra.mxu0 %v728
      %v834 = vpop.f32.mrf.mxu0
      %v835 = vadd.f32 %v750, %v834
      %v836 = vpop.f32.mrf.mxu0
      %v837 = vpop.f32.mrf.mxu0
      %v838 = vpop.f32.mrf.mxu0
      %839 = vdwg.mxu0
      %v840 = vadd.f32 %v835, %v436
      %v841 = vpack.c.bf16 %v840, %v840
      %v842 = vld [vmem:[%s7] sm:$0xf]
      %v843 = vld [vmem:[%s7 + $0x4] sm:$0xf]
      %v844 = vld [vmem:[%s7 + $0x8] sm:$0xf]
      %v845 = vld [vmem:[%s7 + $0xc] sm:$0xf]
      %v846 = vld [vmem:[%s7 + $0x10] sm:$0xf]
      %v847 = vld [vmem:[%s7 + $0x14] sm:$0xf]
      %v848 = vld [vmem:[%s7 + $0x18] sm:$0xf]
      %v849 = vld [vmem:[%s7 + $0x1c] sm:$0xf]
      %v850 = vld [vmem:[%s8] sm:$0x1]
      %v852 = vlaneseq
      %v853 = vshrl.u32 %v852, 7
      %v854 = vsub.s32 0, %v853
      %v855 = vrot.slane %v850, %v854
      %v865 = vunpack.c.l.b16 %v842
      %v866 = vunpack.c.l.b16 %v843
      %v867 = vunpack.c.l.b16 %v844
      %v868 = vunpack.c.l.b16 %v845
      %v869 = vunpack.c.l.b16 %v846
      %v870 = vunpack.c.l.b16 %v847
      %v871 = vunpack.c.l.b16 %v848
      %v872 = vunpack.c.l.b16 %v849
      %v873 = vpack.c.b16 %v866, %v865
      %v874 = vpack.c.b16 %v868, %v867
      %v875 = vpack.c.b16 %v870, %v869
      %v876 = vpack.c.b16 %v872, %v871
      %v882 = vsel %vm539, %v841, 0
      %884 = vmatprep.subr.bf16.mxu0 0
      %885 = vmatpush1.bf16.msra.mxu0 0
      %886 = vmatprep.subr.bf16.mxu0 0
      %887 = vmatpush1.bf16.msra.mxu0 0
      %888 = vmatprep.subr.bf16.mxu0 0
      %889 = vmatpush1.bf16.msra.mxu0 0
      %890 = vmatprep.subr.bf16.mxu0 0
      %891 = vmatpush1.bf16.msra.mxu0 0
      %892 = vmatprep.subr.bf16.mxu0 0
      %893 = vmatpush1.bf16.msra.mxu0 %v876
      %894 = vmatprep.subr.bf16.mxu0 0
      %895 = vmatpush1.bf16.msra.mxu0 %v875
      %896 = vmatprep.subr.bf16.mxu0 0
      %897 = vmatpush1.bf16.msra.mxu0 %v874
      %898 = vmatprep.subr.bf16.mxu0 0
      %899 = vmatpush1.bf16.msra.mxu0 %v873
      %900 = vmatprep.subr.bf16.mxu0 0
      %901 = vmatpush2.bf16.msra.mxu0 0
      %902 = vmatprep.subr.bf16.mxu0 0
      %903 = vmatpush2.bf16.msra.mxu0 0
      %904 = vmatprep.subr.bf16.mxu0 0
      %905 = vmatpush2.bf16.msra.mxu0 0
      %906 = vmatprep.subr.bf16.mxu0 0
      %907 = vmatpush2.bf16.msra.mxu0 0
      %908 = vmatprep.subr.bf16.mxu0 0
      %909 = vmatpush2.bf16.msra.mxu0 0
      %910 = vmatprep.subr.bf16.mxu0 0
      %911 = vmatpush2.bf16.msra.mxu0 0
      %912 = vmatprep.subr.bf16.mxu0 0
      %913 = vmatpush2.bf16.msra.mxu0 0
      %914 = vmatprep.subr.bf16.mxu0 0
      %915 = vmatpush2.bf16.msra.mxu0 0
      %916 = vmatprep.mubr.bf16.mxu0 0
      %917 = vmatmul.mubr.bf16.gmra.mxu0 %v882
      %v918 = vpop.f32.mrf.mxu0
      %v919 = vadd.f32 %v855, %v918
      %v920 = vpop.f32.mrf.mxu0
      %v921 = vpop.f32.mrf.mxu0
      %v922 = vpop.f32.mrf.mxu0
      %923 = vdwg.mxu0
      %v924 = vpack.c.bf16 %v919, %v919
      %925 = vst [vmem:[%s327] sm:$0x3] %v924
      %p926 = scmp.lt.s32.totalorder %s20, 1
      %s927 = scalar_select %p926, %s20, 1
      %s928 = smul.addr %s927, 2
      %s929 = scalar_lea.vmem %s9, %s928
      // Predicated region
      $region57: #{simplenet_forward.5} parent=55 // pred_check
        %p930 = pneg %p232
      $region58: #{simplenet_forward.5} parent=55 // pred_check_branch
        %932 = sbr.rel (%p930) target = $region60
      $region59: #{simplenet_forward.5} parent=55 // pred_region
        _
      $region60: #{simplenet_forward.5} parent=55 // pred_fallthru
        _
    $region56: #{simplenet_forward.5} parent=5 // pred_fallthru
      _
    %p933 = scmp.le.s32.totalorder 2, %s15
    // Predicated region
    $region61: #{simplenet_forward.5} parent=5 // pred_check
      %p934 = pneg %p933
    $region62: #{simplenet_forward.5} parent=5 // pred_check_branch
      %936 = sbr.rel (%p934) target = $region64
    $region63: #{simplenet_forward.5} parent=5 // pred_region
      %s937 = ssub.s32 %s15, 2
      // Predicated region
      $region65: #{simplenet_forward.5} parent=63 // pred_check
        %p938 = pneg %p238
      $region66: #{simplenet_forward.5} parent=63 // pred_check_branch
        %940 = sbr.rel (%p938) target = $region68
      $region67: #{simplenet_forward.5} parent=63 // pred_region
        %p941 = scmp.lt.s32.totalorder %s21, 1
        %s942 = scalar_select %p941, %s21, 1
        %s943 = smul.addr %s942, 2
        %s944 = scalar_lea.vmem %s9, %s943
      $region68: #{simplenet_forward.5} parent=63 // pred_fallthru
        _
    $region64: #{simplenet_forward.5} parent=5 // pred_fallthru
      _
  $region6: #{simplenet_forward.5} parent=0 // loop_footer
    %s19 = sadd.s32 1, %s15
  $region7: #{simplenet_forward.5} parent=0 // loop_footer_branch
    %14 = sbr.rel target = $region3
  $region8: #{simplenet_forward.5} parent=0 // loop_exit
    _

// kernel: simplenet_forward.6
$region0: #{simplenet_forward.6}
  #allocation0 [shape = 'u32[]', space=smem, size = 0x4, offset = 0x4, fixed_abs, tag = 'smem constant byte address 0x4 - core index']
  #allocation1 [shape = 'u32[144,128]{1,0:T(1,128)}', space=vmem, size = 0x12000, scoped, tag = 'internal scratch']
  #allocation2 [shape = 'f32[16,256]{1,0:T(8,128)}', space=vmem, size = 0x4000, scoped, tag = 'scratch operand']
  %s0 = inlined_call_operand.vmem [shape: bf16[32,64], index: 0, kind: input, shape index: {}]
  %s1 = inlined_call_operand.vmem [shape: bf16[64,512], index: 1, kind: input, shape index: {}]
  %s2 = inlined_call_operand.vmem [shape: f32[1,512], index: 2, kind: input, shape index: {}]
  %s3 = inlined_call_operand.vmem [shape: bf16[32,512], index: 3, kind: output, shape index: {}]
  %s4 = sld [smem:[#allocation0]]
  $region125: #{simplenet_forward.6} parent=0
    _
  %s6 = ssub.s32 1, %s4
  %s7 = scalar_select 0, %s6, %s4
  $region1: #{simplenet_forward.6} parent=0
    #allocation3 [shape = 'u8[65536]{0}', space=vmem, size = 0x10000, scoped, tag = 'input window, operand 1']
    #allocation4 [shape = 'u8[16384]{0}', space=vmem, size = 0x4000, scoped, tag = 'output window, operand 0']
    loop: start=0, step=1, limit=6
    $region2: #{simplenet_forward.6} parent=1 // loop_pre_header
      _
    $region3: #{simplenet_forward.6} parent=1 // loop_header
      %s9 = sphi 0, %s13
      %p10 = scmp.ge.s32.totalorder %s9, 6
      %s16 = sphi 0, %s35
      %s17 = sphi 0, %s31
      %s18 = sphi 0, %s27
      %s19 = sphi 0, %s16
      %s20 = sphi 0, %s17
      %s21 = sphi 0, %s18
      %s22 = sphi 0, %s19
      %s23 = sphi 0, %s20
      %s24 = sphi 0, %s21
      %s40 = sphi 0, %s42
      %s43 = sphi 0, %s40
      %s44 = sphi 0, %s43
      %s60 = sphi 0, %s44
      %s68 = sphi 0, %s70
      %s71 = sphi 0, %s68
      %s72 = sphi 0, %s71
      %s88 = sphi 0, %s72
      %s94 = sphi 0, %s96
      %s97 = sphi 0, %s94
      %s98 = sphi 0, %s97
      %s114 = sphi 0, %s98
      %s122 = sphi 0, %s124
      %s125 = sphi 0, %s122
      %s126 = sphi 0, %s125
      %s142 = sphi 0, %s126
    $region4: #{simplenet_forward.6} parent=1 // loop_header_branch
      %12 = sbr.rel (%p10) target = $region8
    $region5: #{simplenet_forward.6} parent=1 // loop_body
      %s14 = ssub.s32 %s9, 1
      %s15 = ssub.s32 %s9, 2
      %s25 = sadd.s32 1, %s18
      %p26 = scmp.ge.s32.totalorder %s25, 1
      %s27 = scalar_select %p26, 0, %s25
      %s28 = sadd.s32 1, %s17
      %s29 = scalar_select %p26, %s28, %s17
      %p30 = scmp.ge.s32.totalorder %s29, 2
      %s31 = scalar_select %p30, 0, %s29
      %s32 = sadd.s32 1, %s16
      %s33 = scalar_select %p30, %s32, %s16
      %p34 = scmp.ge.s32.totalorder %s33, 2
      %s35 = scalar_select %p34, 0, %s33
      %s36 = ssub.s32 %s16, %s35
      %s37 = ssub.s32 %s18, %s27
      %s38 = sor.u32 %s36, %s37
      %p39 = scmp.eq.s32.totalorder %s38, 0
      %s41 = sadd.s32 %s40, 1
      %s42 = scalar_select %p39, %s40, %s41
      %p45 = pneg %p39
      %p46 = scmp.eq.s32.totalorder %s9, 3
      %p47 = por %p45, %p46
      %p48 = scmp.ne.s32.totalorder %s40, %s43
      %p49 = scmp.eq.s32.totalorder %s9, 0
      %p50 = por %p48, %p49
      %p51 = scmp.ne.s32.totalorder %s40, %s43
      %p52 = scmp.eq.s32.totalorder %s14, 3
      %p53 = por %p51, %p52
      %p54 = scmp.ne.s32.totalorder %s43, %s44
      %p55 = scmp.eq.s32.totalorder %s14, 0
      %p56 = por %p54, %p55
      %p57 = scmp.ne.s32.totalorder %s43, %s44
      %p58 = scmp.eq.s32.totalorder %s15, 3
      %p59 = por %p57, %p58
      %p61 = scmp.ne.s32.totalorder %s44, %s60
      %p62 = scmp.eq.s32.totalorder %s15, 0
      %p63 = por %p61, %p62
      %s64 = ssub.s32 %s18, %s27
      %s65 = ssub.s32 %s17, %s31
      %s66 = sor.u32 %s64, %s65
      %p67 = scmp.eq.s32.totalorder %s66, 0
      %s69 = sadd.s32 %s68, 1
      %s70 = scalar_select %p67, %s68, %s69
      %p73 = pneg %p67
      %p74 = scmp.eq.s32.totalorder %s9, 3
      %p75 = por %p73, %p74
      %p76 = scmp.ne.s32.totalorder %s68, %s71
      %p77 = scmp.eq.s32.totalorder %s9, 0
      %p78 = por %p76, %p77
      %p79 = scmp.ne.s32.totalorder %s68, %s71
      %p80 = scmp.eq.s32.totalorder %s14, 3
      %p81 = por %p79, %p80
      %p82 = scmp.ne.s32.totalorder %s71, %s72
      %p83 = scmp.eq.s32.totalorder %s14, 0
      %p84 = por %p82, %p83
      %p85 = scmp.ne.s32.totalorder %s71, %s72
      %p86 = scmp.eq.s32.totalorder %s15, 3
      %p87 = por %p85, %p86
      %p89 = scmp.ne.s32.totalorder %s72, %s88
      %p90 = scmp.eq.s32.totalorder %s15, 0
      %p91 = por %p89, %p90
      %s92 = ssub.s32 %s17, %s31
      %p93 = scmp.eq.s32.totalorder %s92, 0
      %s95 = sadd.s32 %s94, 1
      %s96 = scalar_select %p93, %s94, %s95
      %p99 = pneg %p93
      %p100 = scmp.eq.s32.totalorder %s9, 3
      %p101 = por %p99, %p100
      %p102 = scmp.ne.s32.totalorder %s94, %s97
      %p103 = scmp.eq.s32.totalorder %s9, 0
      %p104 = por %p102, %p103
      %p105 = scmp.ne.s32.totalorder %s94, %s97
      %p106 = scmp.eq.s32.totalorder %s14, 3
      %p107 = por %p105, %p106
      %p108 = scmp.ne.s32.totalorder %s97, %s98
      %p109 = scmp.eq.s32.totalorder %s14, 0
      %p110 = por %p108, %p109
      %p111 = scmp.ne.s32.totalorder %s97, %s98
      %p112 = scmp.eq.s32.totalorder %s15, 3
      %p113 = por %p111, %p112
      %p115 = scmp.ne.s32.totalorder %s98, %s114
      %p116 = scmp.eq.s32.totalorder %s15, 0
      %p117 = por %p115, %p116
      %s118 = ssub.s32 %s16, %s35
      %s119 = ssub.s32 %s17, %s31
      %s120 = sor.u32 %s118, %s119
      %p121 = scmp.eq.s32.totalorder %s120, 0
      %s123 = sadd.s32 %s122, 1
      %s124 = scalar_select %p121, %s122, %s123
      %p127 = pneg %p121
      %p128 = scmp.eq.s32.totalorder %s9, 3
      %p129 = por %p127, %p128
      %p130 = scmp.ne.s32.totalorder %s122, %s125
      %p131 = scmp.eq.s32.totalorder %s9, 0
      %p132 = por %p130, %p131
      %p133 = scmp.ne.s32.totalorder %s122, %s125
      %p134 = scmp.eq.s32.totalorder %s14, 3
      %p135 = por %p133, %p134
      %p136 = scmp.ne.s32.totalorder %s125, %s126
      %p137 = scmp.eq.s32.totalorder %s14, 0
      %p138 = por %p136, %p137
      %p139 = scmp.ne.s32.totalorder %s125, %s126
      %p140 = scmp.eq.s32.totalorder %s15, 3
      %p141 = por %p139, %p140
      %p143 = scmp.ne.s32.totalorder %s126, %s142
      %p144 = scmp.eq.s32.totalorder %s15, 0
      %p145 = por %p143, %p144
      %p146 = scmp.le.s32.totalorder 1, %s9
      %p147 = scmp.lt.s32.totalorder %s9, 5
      %p148 = pnand %p146, %p147
      %p149 = pneg %p148
      // Predicated region
      $region9: #{simplenet_forward.6} parent=5 // pred_check
        _
      $region10: #{simplenet_forward.6} parent=5 // pred_check_branch
        %151 = sbr.rel (%p148) target = $region12
      $region11: #{simplenet_forward.6} parent=5 // pred_region
        %s152 = ssub.s32 %s9, 1
      $region12: #{simplenet_forward.6} parent=5 // pred_fallthru
        _
      %p153 = scmp.lt.s32.totalorder %s9, 4
      // Predicated region
      $region13: #{simplenet_forward.6} parent=5 // pred_check
        %p154 = pneg %p153
      $region14: #{simplenet_forward.6} parent=5 // pred_check_branch
        %156 = sbr.rel (%p154) target = $region16
      $region15: #{simplenet_forward.6} parent=5 // pred_region
        // Predicated region
        $region17: #{simplenet_forward.6} parent=15 // pred_check
          %p157 = pneg %p50
        $region18: #{simplenet_forward.6} parent=15 // pred_check_branch
          %159 = sbr.rel (%p157) target = $region20
        $region19: #{simplenet_forward.6} parent=15 // pred_region
          %s160 = smul.u32 2, %s16
          %p161 = scmp.lt.s32.totalorder %s160, 3
          %s162 = scalar_select %p161, %s160, 3
          %p163 = scmp.lt.s32.totalorder %s18, 0
          %s164 = scalar_select %p163, %s18, 0
          %s165 = sadd.s32 %s164, %s162
          %s166 = smul.addr %s165, 4
          %s167 = scalar_lea.vmem %s0, %s166
          %s168 = smul.u32 2, %s16
        $region20: #{simplenet_forward.6} parent=15 // pred_fallthru
          _
        // Predicated region
        $region21: #{simplenet_forward.6} parent=15 // pred_check
          %p169 = pneg %p78
        $region22: #{simplenet_forward.6} parent=15 // pred_check_branch
          %171 = sbr.rel (%p169) target = $region24
        $region23: #{simplenet_forward.6} parent=15 // pred_region
          %s172 = sand.u32 %s68, 1
          %s173 = sand.u32 %s68, 1
          %s174 = smul.addr %s173, 64
          %s175 = scalar_lea.vmem [#allocation3], %s174
          %s176 = smul.u32 8, %s18
          %s177 = smul.u32 2, %s17
          %s178 = smul.addr %s176, 4
          %s179 = sadd.s32 %s177, %s178
          %s180 = smul.addr %s179, 4
          %s181 = scalar_lea.vmem %s1, %s180
          // Predicated region
          $region25: #{simplenet_forward.6} parent=23 // pred_check
            _
          $region26: #{simplenet_forward.6} parent=23 // pred_check_branch
            %183 = sbr.rel (0) target = $region28
          $region27: #{simplenet_forward.6} parent=23 // pred_region
            // Predicated region
            $region29: #{simplenet_forward.6} parent=27 // pred_check
              _
            $region30: #{simplenet_forward.6} parent=27 // pred_check_branch
              %185 = sbr.rel (0) target = $region32
            $region31: #{simplenet_forward.6} parent=27 // pred_region
              // Predicated region
              $region44: #{simplenet_forward.6} parent=31 // pred_check
                _
              $region45: #{simplenet_forward.6} parent=31 // pred_check_branch
                %215 = sbr.rel (0) target = $region47
              $region46: #{simplenet_forward.6} parent=31 // pred_region
                loop: start=0, step=1, limit=1
                $region48: #{simplenet_forward.6} parent=46 // loop_pre_header
                  _
                $region49: #{simplenet_forward.6} parent=46 // loop_header
                  %s217 = sphi 0, %s221
                  %p218 = scmp.ge.s32.totalorder %s217, 1
                  %s222 = sphi %s181, %s181
                  %s223 = sphi %s175, %s175
                $region50: #{simplenet_forward.6} parent=46 // loop_header_branch
                  %220 = sbr.rel (%p218) target = $region54
                $region51: #{simplenet_forward.6} parent=46 // loop_body
                  %v224 = vld [vmem:[%s222] sm:$0xff]
                  %225 = vst [vmem:[%s223] sm:$0xff] %v224
                  %v226 = vld [vmem:[%s222 + $0x10] sm:$0xff]
                  %227 = vst [vmem:[%s223 + $0x8] sm:$0xff] %v226
                  %v228 = vld [vmem:[%s222 + $0x20] sm:$0xff]
                  %229 = vst [vmem:[%s223 + $0x10] sm:$0xff] %v228
                  %v230 = vld [vmem:[%s222 + $0x30] sm:$0xff]
                  %231 = vst [vmem:[%s223 + $0x18] sm:$0xff] %v230
                  %v232 = vld [vmem:[%s222 + $0x40] sm:$0xff]
                  %233 = vst [vmem:[%s223 + $0x20] sm:$0xff] %v232
                  %v234 = vld [vmem:[%s222 + $0x50] sm:$0xff]
                  %235 = vst [vmem:[%s223 + $0x28] sm:$0xff] %v234
                  %v236 = vld [vmem:[%s222 + $0x60] sm:$0xff]
                  %237 = vst [vmem:[%s223 + $0x30] sm:$0xff] %v236
                  %v238 = vld [vmem:[%s222 + $0x70] sm:$0xff]
                  %239 = vst [vmem:[%s223 + $0x38] sm:$0xff] %v238
                $region52: #{simplenet_forward.6} parent=46 // loop_footer
                  %s221 = sadd.s32 1, %s217
                $region53: #{simplenet_forward.6} parent=46 // loop_footer_branch
                  %216 = sbr.rel target = $region49
                $region54: #{simplenet_forward.6} parent=46 // loop_exit
                  _
              $region47: #{simplenet_forward.6} parent=31 // pred_fallthru
                _
              // Predicated region
              $region55: #{simplenet_forward.6} parent=31 // pred_check
                _
              $region56: #{simplenet_forward.6} parent=31 // pred_check_branch
                %241 = sbr.rel target = $region58
              $region57: #{simplenet_forward.6} parent=31 // pred_region
                _
              $region58: #{simplenet_forward.6} parent=31 // pred_fallthru
                _
            $region32: #{simplenet_forward.6} parent=27 // pred_fallthru
              _
            // Predicated region
            $region33: #{simplenet_forward.6} parent=27 // pred_check
              _
            $region34: #{simplenet_forward.6} parent=27 // pred_check_branch
              %187 = sbr.rel target = $region36
            $region35: #{simplenet_forward.6} parent=27 // pred_region
              %s189 = ssub.s32 256, 1
              loop: start=0, step=1, limit=1
              $region37: #{simplenet_forward.6} parent=35 // loop_pre_header
                _
              $region38: #{simplenet_forward.6} parent=35 // loop_header
                %s191 = sphi 0, %s195
                %p192 = scmp.ge.s32.totalorder %s191, 1
                %s196 = sphi %s181, %s181
                %s197 = sphi %s175, %s175
              $region39: #{simplenet_forward.6} parent=35 // loop_header_branch
                %194 = sbr.rel (%p192) target = $region43
              $region40: #{simplenet_forward.6} parent=35 // loop_body
                %v198 = vld [vmem:[%s196] sm:%s189]
                %199 = vst [vmem:[%s197] sm:%s189] %v198
                %v200 = vld [vmem:[%s196 + $0x10] sm:%s189]
                %201 = vst [vmem:[%s197 + $0x8] sm:%s189] %v200
                %v202 = vld [vmem:[%s196 + $0x20] sm:%s189]
                %203 = vst [vmem:[%s197 + $0x10] sm:%s189] %v202
                %v204 = vld [vmem:[%s196 + $0x30] sm:%s189]
                %205 = vst [vmem:[%s197 + $0x18] sm:%s189] %v204
                %v206 = vld [vmem:[%s196 + $0x40] sm:%s189]
                %207 = vst [vmem:[%s197 + $0x20] sm:%s189] %v206
                %v208 = vld [vmem:[%s196 + $0x50] sm:%s189]
                %209 = vst [vmem:[%s197 + $0x28] sm:%s189] %v208
                %v210 = vld [vmem:[%s196 + $0x60] sm:%s189]
                %211 = vst [vmem:[%s197 + $0x30] sm:%s189] %v210
                %v212 = vld [vmem:[%s196 + $0x70] sm:%s189]
                %213 = vst [vmem:[%s197 + $0x38] sm:%s189] %v212
              $region41: #{simplenet_forward.6} parent=35 // loop_footer
                %s195 = sadd.s32 1, %s191
              $region42: #{simplenet_forward.6} parent=35 // loop_footer_branch
                %190 = sbr.rel target = $region38
              $region43: #{simplenet_forward.6} parent=35 // loop_exit
                _
            $region36: #{simplenet_forward.6} parent=27 // pred_fallthru
              _
          $region28: #{simplenet_forward.6} parent=23 // pred_fallthru
            _
          %242 = vnop
        $region24: #{simplenet_forward.6} parent=15 // pred_fallthru
          _
        // Predicated region
        $region59: #{simplenet_forward.6} parent=15 // pred_check
          %p243 = pneg %p104
        $region60: #{simplenet_forward.6} parent=15 // pred_check_branch
          %245 = sbr.rel (%p243) target = $region62
        $region61: #{simplenet_forward.6} parent=15 // pred_region
          %s246 = smul.u32 2, %s17
          %p247 = scmp.lt.s32.totalorder %s246, 3
          %s248 = scalar_select %p247, %s246, 3
          %s249 = scalar_lea.vmem %s2, %s248
          %s250 = smul.u32 2, %s17
        $region62: #{simplenet_forward.6} parent=15 // pred_fallthru
          _
      $region16: #{simplenet_forward.6} parent=5 // pred_fallthru
        _
      %p251 = scmp.le.s32.totalorder 1, %s9
      %p252 = scmp.lt.s32.totalorder %s9, 5
      %p253 = pnand %p251, %p252
      %p254 = pneg %p253
      // Predicated region
      $region63: #{simplenet_forward.6} parent=5 // pred_check
        _
      $region64: #{simplenet_forward.6} parent=5 // pred_check_branch
        %256 = sbr.rel (%p253) target = $region66
      $region65: #{simplenet_forward.6} parent=5 // pred_region
        %s257 = ssub.s32 %s9, 1
        %s258 = sand.u32 %s71, 1
        %s259 = sand.u32 %s71, 1
        %s260 = smul.addr %s259, 64
        %s261 = scalar_lea.vmem [#allocation3], %s260
        // Predicated region
        $region67: #{simplenet_forward.6} parent=65 // pred_check
          %p262 = pneg %p84
        $region68: #{simplenet_forward.6} parent=65 // pred_check_branch
          %264 = sbr.rel (%p262) target = $region70
        $region69: #{simplenet_forward.6} parent=65 // pred_region
          _
        $region70: #{simplenet_forward.6} parent=65 // pred_fallthru
          _
        %s265 = smul.u32 2, %s19
        %p266 = scmp.lt.s32.totalorder %s265, 3
        %s267 = scalar_select %p266, %s265, 3
        %p268 = scmp.lt.s32.totalorder %s21, 0
        %s269 = scalar_select %p268, %s21, 0
        %s270 = sadd.s32 %s269, %s267
        %s271 = smul.addr %s270, 4
        %s272 = scalar_lea.vmem %s0, %s271
        %p273 = pneg %p56
        %p274 = pneg %p53
        %s275 = sand.u32 %s71, 1
        %s276 = sand.u32 %s71, 1
        %s277 = smul.addr %s276, 64
        %s278 = scalar_lea.vmem [#allocation3], %s277
        %p279 = pneg %p84
        %p280 = pneg %p81
        %s281 = smul.u32 2, %s20
        %p282 = scmp.lt.s32.totalorder %s281, 3
        %s283 = scalar_select %p282, %s281, 3
        %s284 = scalar_lea.vmem %s2, %s283
        %p285 = pneg %p110
        %p286 = pneg %p107
        %p287 = pneg %p138
        %p288 = pneg %p135
        %s289 = sand.u32 %s125, 1
        %s290 = sand.u32 %s125, 1
        %s291 = smul.addr %s290, 16
        %s292 = scalar_lea.vmem [#allocation4], %s291
        %s293 = smul.u32 2, %s19
        %p294 = scmp.lt.s32.totalorder %s293, 3
        %s295 = scalar_select %p294, %s293, 3
        %p296 = scmp.lt.s32.totalorder %s21, 0
        %s297 = scalar_select %p296, %s21, 0
        %s298 = sadd.s32 %s297, %s295
        %s299 = smul.addr %s298, 4
        %s300 = scalar_lea.vmem %s0, %s299
        %s301 = smul.u32 2, %s19
        %s302 = smul.u32 8, %s21
        %s303 = smul.u32 2, %s20
        %s304 = smul.u32 2, %s20
        %p305 = scmp.lt.s32.totalorder %s304, 3
        %s306 = scalar_select %p305, %s304, 3
        %s307 = scalar_lea.vmem %s2, %s306
        %s308 = smul.u32 2, %s20
        %s309 = smul.u32 2, %s19
        %s310 = smul.u32 2, %s20
        %p312 = scmp.eq.s32.totalorder %s21, 0
        // Predicated region
        $region71: #{simplenet_forward.6} parent=65 // pred_check
          %p313 = pneg %p312
        $region72: #{simplenet_forward.6} parent=65 // pred_check_branch
          %315 = sbr.rel (%p313) target = $region74
        $region73: #{simplenet_forward.6} parent=65 // pred_region
          %316 = vst [vmem:[#allocation2] sm:$0xff] 0.0
          %317 = vst [vmem:[#allocation2 + $0x8] sm:$0xff] 0.0
          %318 = vst [vmem:[#allocation2 + $0x10] sm:$0xff] 0.0
          %319 = vst [vmem:[#allocation2 + $0x18] sm:$0xff] 0.0
        $region74: #{simplenet_forward.6} parent=65 // pred_fallthru
          _
        %v320 = vld [vmem:[#allocation2] sm:$0xff]
        %v321 = vld [vmem:[#allocation2 + $0x8] sm:$0xff]
        %v322 = vld [vmem:[#allocation2 + $0x10] sm:$0xff]
        %v323 = vld [vmem:[#allocation2 + $0x18] sm:$0xff]
        %v324 = vld [vmem:[%s300] sm:$0xf]
        %v325 = vld [vmem:[%s300 + $0x4] sm:$0xf]
        %v326 = vld [vmem:[%s261] sm:$0xff]
        %v327 = vld [vmem:[%s261 + $0x8] sm:$0xff]
        %v328 = vld [vmem:[%s261 + $0x10] sm:$0xff]
        %v329 = vld [vmem:[%s261 + $0x18] sm:$0xff]
        %v330 = vld [vmem:[%s261 + $0x20] sm:$0xff]
        %v331 = vld [vmem:[%s261 + $0x28] sm:$0xff]
        %v332 = vld [vmem:[%s261 + $0x30] sm:$0xff]
        %v333 = vld [vmem:[%s261 + $0x38] sm:$0xff]
        %v336 = vunpack.c.l.b16 %v324
        %v337 = vunpack.c.l.b16 %v325
        %v338 = vpack.c.b16 %v337, %v336
        %v347 = vunpack.c.l.b16 %v326
        %v348 = vunpack.c.h.b16 %v326
        %v349 = vunpack.c.l.b16 %v327
        %v350 = vunpack.c.h.b16 %v327
        %v351 = vunpack.c.l.b16 %v328
        %v352 = vunpack.c.h.b16 %v328
        %v353 = vunpack.c.l.b16 %v329
        %v354 = vunpack.c.h.b16 %v329
        %v355 = vunpack.c.l.b16 %v330
        %v356 = vunpack.c.h.b16 %v330
        %v357 = vunpack.c.l.b16 %v331
        %v358 = vunpack.c.h.b16 %v331
        %v359 = vunpack.c.l.b16 %v332
        %v360 = vunpack.c.h.b16 %v332
        %v361 = vunpack.c.l.b16 %v333
        %v362 = vunpack.c.h.b16 %v333
        %v363 = vpack.c.b16 %v349, %v347
        %v364 = vpack.c.b16 %v350, %v348
        %v365 = vpack.c.b16 %v353, %v351
        %v366 = vpack.c.b16 %v354, %v352
        %v367 = vpack.c.b16 %v357, %v355
        %v368 = vpack.c.b16 %v358, %v356
        %v369 = vpack.c.b16 %v361, %v359
        %v370 = vpack.c.b16 %v362, %v360
        %vm379 = vcmask 523264
        %v381 = vsel %vm379, %v338, 0
        %383 = vmatprep.subr.bf16.mxu0 0
        %384 = vmatpush1.bf16.msra.mxu0 0
        %385 = vmatprep.subr.bf16.mxu0 0
        %386 = vmatpush1.bf16.msra.mxu0 0
        %387 = vmatprep.subr.bf16.mxu0 0
        %388 = vmatpush1.bf16.msra.mxu0 0
        %389 = vmatprep.subr.bf16.mxu0 0
        %390 = vmatpush1.bf16.msra.mxu0 0
        %391 = vmatprep.subr.bf16.mxu0 %v370
        %392 = vmatpush1.bf16.msra.mxu0 %v369
        %393 = vmatprep.subr.bf16.mxu0 %v368
        %394 = vmatpush1.bf16.msra.mxu0 %v367
        %395 = vmatprep.subr.bf16.mxu0 %v366
        %396 = vmatpush1.bf16.msra.mxu0 %v365
        %397 = vmatprep.subr.bf16.mxu0 %v364
        %398 = vmatpush1.bf16.msra.mxu0 %v363
        %399 = vmatprep.subr.bf16.mxu0 0
        %400 = vmatpush2.bf16.msra.mxu0 0
        %401 = vmatprep.subr.bf16.mxu0 0
        %402 = vmatpush2.bf16.msra.mxu0 0
        %403 = vmatprep.subr.bf16.mxu0 0
        %404 = vmatpush2.bf16.msra.mxu0 0
        %405 = vmatprep.subr.bf16.mxu0 0
        %406 = vmatpush2.bf16.msra.mxu0 0
        %407 = vmatprep.subr.bf16.mxu0 0
        %408 = vmatpush2.bf16.msra.mxu0 0
        %409 = vmatprep.subr.bf16.mxu0 0
        %410 = vmatpush2.bf16.msra.mxu0 0
        %411 = vmatprep.subr.bf16.mxu0 0
        %412 = vmatpush2.bf16.msra.mxu0 0
        %413 = vmatprep.subr.bf16.mxu0 0
        %414 = vmatpush2.bf16.msra.mxu0 0
        %415 = vmatprep.mubr.bf16.mxu0 0
        %416 = vmatmul.mubr.bf16.gmra.mxu0 %v381
        %v417 = vpop.f32.mrf.mxu0
        %v418 = vadd.f32 0.0, %v417
        %v419 = vpop.f32.mrf.mxu0
        %v420 = vadd.f32 0.0, %v419
        %v421 = vpop.f32.mrf.mxu0
        %v422 = vadd.f32 0.0, %v421
        %v423 = vpop.f32.mrf.mxu0
        %v424 = vadd.f32 0.0, %v423
        %425 = vdwg.mxu0
        %v426 = vadd.f32 %v320, %v418
        %v427 = vadd.f32 %v321, %v420
        %v428 = vadd.f32 %v322, %v422
        %v429 = vadd.f32 %v323, %v424
        %430 = vst [vmem:[#allocation2] sm:$0xff] %v426
        %431 = vst [vmem:[#allocation2 + $0x8] sm:$0xff] %v427
        %432 = vst [vmem:[#allocation2 + $0x10] sm:$0xff] %v428
        %433 = vst [vmem:[#allocation2 + $0x18] sm:$0xff] %v429
        // Predicated region
        $region75: #{simplenet_forward.6} parent=65 // pred_check
          %p434 = pneg %p312
        $region76: #{simplenet_forward.6} parent=65 // pred_check_branch
          %436 = sbr.rel (%p434) target = $region78
        $region77: #{simplenet_forward.6} parent=65 // pred_region
          %v437 = vld [vmem:[#allocation2] sm:$0xff]
          %v438 = vld [vmem:[#allocation2 + $0x8] sm:$0xff]
          %v439 = vld [vmem:[#allocation2 + $0x10] sm:$0xff]
          %v440 = vld [vmem:[#allocation2 + $0x18] sm:$0xff]
          %v441 = vld [vmem:[%s307] sm:$0x3]
          %v443 = vlaneseq
          %v444 = vshrl.u32 %v443, 7
          %v445 = vsub.s32 0, %v444
          %v446 = vrot.slane %v441, %v445
          %v447 = vlaneseq
          %v448 = vshrl.u32 %v447, 7
          %v449 = vsub.s32 1, %v448
          %v450 = vrot.slane %v441, %v449
          %v453 = vadd.f32 %v437, %v446
          %v454 = vadd.f32 %v438, %v450
          %v455 = vadd.f32 %v439, %v446
          %v456 = vadd.f32 %v440, %v450
          %v457 = vpack.c.bf16 %v455, %v453
          %v458 = vpack.c.bf16 %v456, %v454
          %v461 = vunpack.c.l.b16 %v457
          %v462 = vunpack.c.l.b16 %v458
          %v463 = vunpack.c.h.b16 %v457
          %v464 = vunpack.c.h.b16 %v458
          %v465 = vpack.c.b16 %v462, %v461
          %v466 = vpack.c.b16 %v464, %v463
          %469 = vst [vmem:[%s292] sm:$0xff] %v465
          %470 = vst [vmem:[%s292 + $0x8] sm:$0xff] %v466
        $region78: #{simplenet_forward.6} parent=65 // pred_fallthru
          _
        %s471 = sand.u32 %s125, 1
        %s472 = sand.u32 %s125, 1
        %s473 = smul.addr %s472, 16
        %s474 = scalar_lea.vmem [#allocation4], %s473
        // Predicated region
        $region79: #{simplenet_forward.6} parent=65 // pred_check
          %p475 = pneg %p135
        $region80: #{simplenet_forward.6} parent=65 // pred_check_branch
          %477 = sbr.rel (%p475) target = $region82
        $region81: #{simplenet_forward.6} parent=65 // pred_region
          %s478 = smul.u32 2, %s19
          %s479 = smul.u32 2, %s20
          %s480 = smul.addr %s478, 4
          %s481 = sadd.s32 %s479, %s480
          %s482 = smul.addr %s481, 4
          %s483 = scalar_lea.vmem %s3, %s482
          // Predicated region
          $region83: #{simplenet_forward.6} parent=81 // pred_check
            _
          $region84: #{simplenet_forward.6} parent=81 // pred_check_branch
            %485 = sbr.rel (0) target = $region86
          $region85: #{simplenet_forward.6} parent=81 // pred_region
            // Predicated region
            $region87: #{simplenet_forward.6} parent=85 // pred_check
              _
            $region88: #{simplenet_forward.6} parent=85 // pred_check_branch
              %487 = sbr.rel (0) target = $region90
            $region89: #{simplenet_forward.6} parent=85 // pred_region
              // Predicated region
              $region102: #{simplenet_forward.6} parent=89 // pred_check
                _
              $region103: #{simplenet_forward.6} parent=89 // pred_check_branch
                %505 = sbr.rel (0) target = $region105
              $region104: #{simplenet_forward.6} parent=89 // pred_region
                loop: start=0, step=1, limit=1
                $region106: #{simplenet_forward.6} parent=104 // loop_pre_header
                  _
                $region107: #{simplenet_forward.6} parent=104 // loop_header
                  %s507 = sphi 0, %s511
                  %p508 = scmp.ge.s32.totalorder %s507, 1
                  %s512 = sphi %s474, %s474
                  %s513 = sphi %s483, %s483
                $region108: #{simplenet_forward.6} parent=104 // loop_header_branch
                  %510 = sbr.rel (%p508) target = $region112
                $region109: #{simplenet_forward.6} parent=104 // loop_body
                  %v514 = vld [vmem:[%s512] sm:$0xff]
                  %515 = vst [vmem:[%s513] sm:$0xff] %v514
                  %v516 = vld [vmem:[%s512 + $0x8] sm:$0xff]
                  %517 = vst [vmem:[%s513 + $0x10] sm:$0xff] %v516
                $region110: #{simplenet_forward.6} parent=104 // loop_footer
                  %s511 = sadd.s32 1, %s507
                $region111: #{simplenet_forward.6} parent=104 // loop_footer_branch
                  %506 = sbr.rel target = $region107
                $region112: #{simplenet_forward.6} parent=104 // loop_exit
                  _
              $region105: #{simplenet_forward.6} parent=89 // pred_fallthru
                _
              // Predicated region
              $region113: #{simplenet_forward.6} parent=89 // pred_check
                _
              $region114: #{simplenet_forward.6} parent=89 // pred_check_branch
                %519 = sbr.rel target = $region116
              $region115: #{simplenet_forward.6} parent=89 // pred_region
                _
              $region116: #{simplenet_forward.6} parent=89 // pred_fallthru
                _
            $region90: #{simplenet_forward.6} parent=85 // pred_fallthru
              _
            // Predicated region
            $region91: #{simplenet_forward.6} parent=85 // pred_check
              _
            $region92: #{simplenet_forward.6} parent=85 // pred_check_branch
              %489 = sbr.rel target = $region94
            $region93: #{simplenet_forward.6} parent=85 // pred_region
              %s491 = ssub.s32 256, 1
              loop: start=0, step=1, limit=1
              $region95: #{simplenet_forward.6} parent=93 // loop_pre_header
                _
              $region96: #{simplenet_forward.6} parent=93 // loop_header
                %s493 = sphi 0, %s497
                %p494 = scmp.ge.s32.totalorder %s493, 1
                %s498 = sphi %s474, %s474
                %s499 = sphi %s483, %s483
              $region97: #{simplenet_forward.6} parent=93 // loop_header_branch
                %496 = sbr.rel (%p494) target = $region101
              $region98: #{simplenet_forward.6} parent=93 // loop_body
                %v500 = vld [vmem:[%s498] sm:%s491]
                %501 = vst [vmem:[%s499] sm:%s491] %v500
                %v502 = vld [vmem:[%s498 + $0x8] sm:%s491]
                %503 = vst [vmem:[%s499 + $0x10] sm:%s491] %v502
              $region99: #{simplenet_forward.6} parent=93 // loop_footer
                %s497 = sadd.s32 1, %s493
              $region100: #{simplenet_forward.6} parent=93 // loop_footer_branch
                %492 = sbr.rel target = $region96
              $region101: #{simplenet_forward.6} parent=93 // loop_exit
                _
            $region94: #{simplenet_forward.6} parent=85 // pred_fallthru
              _
          $region86: #{simplenet_forward.6} parent=81 // pred_fallthru
            _
          %520 = vnop
        $region82: #{simplenet_forward.6} parent=65 // pred_fallthru
          _
      $region66: #{simplenet_forward.6} parent=5 // pred_fallthru
        _
      %p521 = scmp.le.s32.totalorder 2, %s9
      // Predicated region
      $region117: #{simplenet_forward.6} parent=5 // pred_check
        %p522 = pneg %p521
      $region118: #{simplenet_forward.6} parent=5 // pred_check_branch
        %524 = sbr.rel (%p522) target = $region120
      $region119: #{simplenet_forward.6} parent=5 // pred_region
        %s525 = ssub.s32 %s9, 2
        // Predicated region
        $region121: #{simplenet_forward.6} parent=119 // pred_check
          %p526 = pneg %p141
        $region122: #{simplenet_forward.6} parent=119 // pred_check_branch
          %528 = sbr.rel (%p526) target = $region124
        $region123: #{simplenet_forward.6} parent=119 // pred_region
          %s529 = sand.u32 %s126, 1
          %s530 = sand.u32 %s126, 1
          %s531 = smul.addr %s530, 16
          %s532 = scalar_lea.vmem [#allocation4], %s531
        $region124: #{simplenet_forward.6} parent=119 // pred_fallthru
          _
      $region120: #{simplenet_forward.6} parent=5 // pred_fallthru
        _
    $region6: #{simplenet_forward.6} parent=1 // loop_footer
      %s13 = sadd.s32 1, %s9
    $region7: #{simplenet_forward.6} parent=1 // loop_footer_branch
      %8 = sbr.rel target = $region3
    $region8: #{simplenet_forward.6} parent=1 // loop_exit
      _

// kernel: simplenet_forward.7
$region0: #{simplenet_forward.7}
  #allocation0 [shape = 'u32[]', space=smem, size = 0x4, offset = 0x4, fixed_abs, tag = 'smem constant byte address 0x4 - core index']
  #allocation1 [shape = 'u32[144,128]{1,0:T(1,128)}', space=vmem, size = 0x12000, scoped, tag = 'internal scratch']
  #allocation2 [shape = 'f32[256,128]{1,0:T(8,128)}', space=vmem, size = 0x20000, scoped, tag = 'scratch operand']
  %s0 = inlined_call_operand.vmem [shape: bf16[512,800], index: 0, kind: input, shape index: {}]
  %s1 = inlined_call_operand.vmem [shape: bf16[800,128], index: 1, kind: input, shape index: {}]
  %s2 = inlined_call_operand.vmem [shape: f32[1,128], index: 2, kind: input, shape index: {}]
  %s3 = inlined_call_operand.vmem [shape: f32[512,128], index: 3, kind: output, shape index: {}]
  %s4 = sld [smem:[#allocation0]]
  $region53: #{simplenet_forward.7} parent=0
    _
  %s6 = ssub.s32 1, %s4
  %s7 = scalar_select 0, %s6, %s4
  loop: start=0, step=1, limit=4
  $region2: #{simplenet_forward.7} parent=0 // loop_pre_header
    _
  $region3: #{simplenet_forward.7} parent=0 // loop_header
    %s9 = sphi 0, %s13
    %p10 = scmp.ge.s32.totalorder %s9, 4
    %s16 = sphi 0, %s35
    %s17 = sphi 0, %s31
    %s18 = sphi 0, %s27
    %s19 = sphi 0, %s16
    %s20 = sphi 0, %s17
    %s21 = sphi 0, %s18
    %s22 = sphi 0, %s19
    %s23 = sphi 0, %s20
    %s24 = sphi 0, %s21
    %s40 = sphi 0, %s42
    %s43 = sphi 0, %s40
    %s44 = sphi 0, %s43
    %s60 = sphi 0, %s44
    %s68 = sphi 0, %s70
    %s71 = sphi 0, %s68
    %s72 = sphi 0, %s71
    %s88 = sphi 0, %s72
    %s94 = sphi 0, %s96
    %s97 = sphi 0, %s94
    %s98 = sphi 0, %s97
    %s114 = sphi 0, %s98
    %s122 = sphi 0, %s124
    %s125 = sphi 0, %s122
    %s126 = sphi 0, %s125
    %s142 = sphi 0, %s126
  $region4: #{simplenet_forward.7} parent=0 // loop_header_branch
    %12 = sbr.rel (%p10) target = $region8
  $region5: #{simplenet_forward.7} parent=0 // loop_body
    %s14 = ssub.s32 %s9, 1
    %s15 = ssub.s32 %s9, 2
    %s25 = sadd.s32 1, %s18
    %p26 = scmp.ge.s32.totalorder %s25, 1
    %s27 = scalar_select %p26, 0, %s25
    %s28 = sadd.s32 1, %s17
    %s29 = scalar_select %p26, %s28, %s17
    %p30 = scmp.ge.s32.totalorder %s29, 1
    %s31 = scalar_select %p30, 0, %s29
    %s32 = sadd.s32 1, %s16
    %s33 = scalar_select %p30, %s32, %s16
    %p34 = scmp.ge.s32.totalorder %s33, 2
    %s35 = scalar_select %p34, 0, %s33
    %s36 = ssub.s32 %s16, %s35
    %s37 = ssub.s32 %s18, %s27
    %s38 = sor.u32 %s36, %s37
    %p39 = scmp.eq.s32.totalorder %s38, 0
    %s41 = sadd.s32 %s40, 1
    %s42 = scalar_select %p39, %s40, %s41
    %p45 = pneg %p39
    %p46 = scmp.eq.s32.totalorder %s9, 1
    %p47 = por %p45, %p46
    %p48 = scmp.ne.s32.totalorder %s40, %s43
    %p49 = scmp.eq.s32.totalorder %s9, 0
    %p50 = por %p48, %p49
    %p51 = scmp.ne.s32.totalorder %s40, %s43
    %p52 = scmp.eq.s32.totalorder %s14, 1
    %p53 = por %p51, %p52
    %p54 = scmp.ne.s32.totalorder %s43, %s44
    %p55 = scmp.eq.s32.totalorder %s14, 0
    %p56 = por %p54, %p55
    %p57 = scmp.ne.s32.totalorder %s43, %s44
    %p58 = scmp.eq.s32.totalorder %s15, 1
    %p59 = por %p57, %p58
    %p61 = scmp.ne.s32.totalorder %s44, %s60
    %p62 = scmp.eq.s32.totalorder %s15, 0
    %p63 = por %p61, %p62
    %s64 = ssub.s32 %s18, %s27
    %s65 = ssub.s32 %s17, %s31
    %s66 = sor.u32 %s64, %s65
    %p67 = scmp.eq.s32.totalorder %s66, 0
    %s69 = sadd.s32 %s68, 1
    %s70 = scalar_select %p67, %s68, %s69
    %p73 = pneg %p67
    %p74 = scmp.eq.s32.totalorder %s9, 1
    %p75 = por %p73, %p74
    %p76 = scmp.ne.s32.totalorder %s68, %s71
    %p77 = scmp.eq.s32.totalorder %s9, 0
    %p78 = por %p76, %p77
    %p79 = scmp.ne.s32.totalorder %s68, %s71
    %p80 = scmp.eq.s32.totalorder %s14, 1
    %p81 = por %p79, %p80
    %p82 = scmp.ne.s32.totalorder %s71, %s72
    %p83 = scmp.eq.s32.totalorder %s14, 0
    %p84 = por %p82, %p83
    %p85 = scmp.ne.s32.totalorder %s71, %s72
    %p86 = scmp.eq.s32.totalorder %s15, 1
    %p87 = por %p85, %p86
    %p89 = scmp.ne.s32.totalorder %s72, %s88
    %p90 = scmp.eq.s32.totalorder %s15, 0
    %p91 = por %p89, %p90
    %s92 = ssub.s32 %s17, %s31
    %p93 = scmp.eq.s32.totalorder %s92, 0
    %s95 = sadd.s32 %s94, 1
    %s96 = scalar_select %p93, %s94, %s95
    %p99 = pneg %p93
    %p100 = scmp.eq.s32.totalorder %s9, 1
    %p101 = por %p99, %p100
    %p102 = scmp.ne.s32.totalorder %s94, %s97
    %p103 = scmp.eq.s32.totalorder %s9, 0
    %p104 = por %p102, %p103
    %p105 = scmp.ne.s32.totalorder %s94, %s97
    %p106 = scmp.eq.s32.totalorder %s14, 1
    %p107 = por %p105, %p106
    %p108 = scmp.ne.s32.totalorder %s97, %s98
    %p109 = scmp.eq.s32.totalorder %s14, 0
    %p110 = por %p108, %p109
    %p111 = scmp.ne.s32.totalorder %s97, %s98
    %p112 = scmp.eq.s32.totalorder %s15, 1
    %p113 = por %p111, %p112
    %p115 = scmp.ne.s32.totalorder %s98, %s114
    %p116 = scmp.eq.s32.totalorder %s15, 0
    %p117 = por %p115, %p116
    %s118 = ssub.s32 %s16, %s35
    %s119 = ssub.s32 %s17, %s31
    %s120 = sor.u32 %s118, %s119
    %p121 = scmp.eq.s32.totalorder %s120, 0
    %s123 = sadd.s32 %s122, 1
    %s124 = scalar_select %p121, %s122, %s123
    %p127 = pneg %p121
    %p128 = scmp.eq.s32.totalorder %s9, 1
    %p129 = por %p127, %p128
    %p130 = scmp.ne.s32.totalorder %s122, %s125
    %p131 = scmp.eq.s32.totalorder %s9, 0
    %p132 = por %p130, %p131
    %p133 = scmp.ne.s32.totalorder %s122, %s125
    %p134 = scmp.eq.s32.totalorder %s14, 1
    %p135 = por %p133, %p134
    %p136 = scmp.ne.s32.totalorder %s125, %s126
    %p137 = scmp.eq.s32.totalorder %s14, 0
    %p138 = por %p136, %p137
    %p139 = scmp.ne.s32.totalorder %s125, %s126
    %p140 = scmp.eq.s32.totalorder %s15, 1
    %p141 = por %p139, %p140
    %p143 = scmp.ne.s32.totalorder %s126, %s142
    %p144 = scmp.eq.s32.totalorder %s15, 0
    %p145 = por %p143, %p144
    %p146 = scmp.le.s32.totalorder 1, %s9
    %p147 = scmp.lt.s32.totalorder %s9, 3
    %p148 = pnand %p146, %p147
    %p149 = pneg %p148
    // Predicated region
    $region9: #{simplenet_forward.7} parent=5 // pred_check
      _
    $region10: #{simplenet_forward.7} parent=5 // pred_check_branch
      %151 = sbr.rel (%p148) target = $region12
    $region11: #{simplenet_forward.7} parent=5 // pred_region
      %s152 = ssub.s32 %s9, 1
      // Predicated region
      $region13: #{simplenet_forward.7} parent=11 // pred_check
        %p153 = pneg %p84
      $region14: #{simplenet_forward.7} parent=11 // pred_check_branch
        %155 = sbr.rel (%p153) target = $region16
      $region15: #{simplenet_forward.7} parent=11 // pred_region
        %s156 = smul.u32 100, %s21
        %p157 = scmp.lt.s32.totalorder %s156, 99
        %s158 = scalar_select %p157, %s156, 99
        %p159 = scmp.lt.s32.totalorder %s20, 0
        %s160 = scalar_select %p159, %s20, 0
        %s161 = sadd.s32 %s160, %s158
        %s162 = smul.addr %s161, 4
        %s163 = scalar_lea.vmem %s1, %s162
        %s164 = smul.u32 100, %s21
      $region16: #{simplenet_forward.7} parent=11 // pred_fallthru
        _
      // Predicated region
      $region17: #{simplenet_forward.7} parent=11 // pred_check
        %p165 = pneg %p110
      $region18: #{simplenet_forward.7} parent=11 // pred_check_branch
        %167 = sbr.rel (%p165) target = $region20
      $region19: #{simplenet_forward.7} parent=11 // pred_region
        %p168 = scmp.lt.s32.totalorder %s20, 0
        %s169 = scalar_select %p168, %s20, 0
        %s170 = scalar_lea.vmem %s2, %s169
      $region20: #{simplenet_forward.7} parent=11 // pred_fallthru
        _
    $region12: #{simplenet_forward.7} parent=5 // pred_fallthru
      _
    %p171 = scmp.lt.s32.totalorder %s9, 2
    // Predicated region
    $region21: #{simplenet_forward.7} parent=5 // pred_check
      %p172 = pneg %p171
    $region22: #{simplenet_forward.7} parent=5 // pred_check_branch
      %174 = sbr.rel (%p172) target = $region24
    $region23: #{simplenet_forward.7} parent=5 // pred_region
      // Predicated region
      $region25: #{simplenet_forward.7} parent=23 // pred_check
        %p175 = pneg %p50
      $region26: #{simplenet_forward.7} parent=23 // pred_check_branch
        %177 = sbr.rel (%p175) target = $region28
      $region27: #{simplenet_forward.7} parent=23 // pred_region
        %s178 = smul.u32 32, %s16
        %s179 = smul.u32 7, %s18
        %p180 = scmp.lt.s32.totalorder %s178, 63
        %s181 = scalar_select %p180, %s178, 63
        %p182 = scmp.lt.s32.totalorder %s179, 6
        %s183 = scalar_select %p182, %s179, 6
        %s184 = smul.addr %s181, 7
        %s185 = sadd.s32 %s183, %s184
        %s186 = smul.addr %s185, 4
        %s187 = scalar_lea.vmem %s0, %s186
        %s188 = smul.u32 32, %s16
        %s189 = smul.u32 7, %s18
      $region28: #{simplenet_forward.7} parent=23 // pred_fallthru
        _
    $region24: #{simplenet_forward.7} parent=5 // pred_fallthru
      _
    %p190 = scmp.le.s32.totalorder 1, %s9
    %p191 = scmp.lt.s32.totalorder %s9, 3
    %p192 = pnand %p190, %p191
    %p193 = pneg %p192
    // Predicated region
    $region29: #{simplenet_forward.7} parent=5 // pred_check
      _
    $region30: #{simplenet_forward.7} parent=5 // pred_check_branch
      %195 = sbr.rel (%p192) target = $region32
    $region31: #{simplenet_forward.7} parent=5 // pred_region
      %s196 = ssub.s32 %s9, 1
      %s197 = smul.u32 32, %s19
      %s198 = smul.u32 7, %s21
      %p199 = scmp.lt.s32.totalorder %s197, 63
      %s200 = scalar_select %p199, %s197, 63
      %p201 = scmp.lt.s32.totalorder %s198, 6
      %s202 = scalar_select %p201, %s198, 6
      %s203 = smul.addr %s200, 7
      %s204 = sadd.s32 %s202, %s203
      %s205 = smul.addr %s204, 4
      %s206 = scalar_lea.vmem %s0, %s205
      %p207 = pneg %p56
      %p208 = pneg %p53
      %s209 = smul.u32 100, %s21
      %p210 = scmp.lt.s32.totalorder %s209, 99
      %s211 = scalar_select %p210, %s209, 99
      %p212 = scmp.lt.s32.totalorder %s20, 0
      %s213 = scalar_select %p212, %s20, 0
      %s214 = sadd.s32 %s213, %s211
      %s215 = smul.addr %s214, 4
      %s216 = scalar_lea.vmem %s1, %s215
      %p217 = pneg %p84
      %p218 = pneg %p81
      %p219 = scmp.lt.s32.totalorder %s20, 0
      %s220 = scalar_select %p219, %s20, 0
      %s221 = scalar_lea.vmem %s2, %s220
      %p222 = pneg %p110
      %p223 = pneg %p107
      %p224 = pneg %p138
      %p225 = pneg %p135
      %s226 = smul.u32 32, %s19
      %p227 = scmp.lt.s32.totalorder %s226, 63
      %s228 = scalar_select %p227, %s226, 63
      %p229 = scmp.lt.s32.totalorder %s20, 0
      %s230 = scalar_select %p229, %s20, 0
      %s231 = sadd.s32 %s230, %s228
      %s232 = smul.addr %s231, 8
      %s233 = scalar_lea.vmem %s3, %s232
      %s234 = smul.u32 32, %s19
      %s235 = smul.u32 7, %s21
      %p236 = scmp.lt.s32.totalorder %s234, 63
      %s237 = scalar_select %p236, %s234, 63
      %p238 = scmp.lt.s32.totalorder %s235, 6
      %s239 = scalar_select %p238, %s235, 6
      %s240 = smul.addr %s237, 7
      %s241 = sadd.s32 %s239, %s240
      %s242 = smul.addr %s241, 4
      %s243 = scalar_lea.vmem %s0, %s242
      %s244 = smul.u32 32, %s19
      %s245 = smul.u32 7, %s21
      %s246 = smul.u32 100, %s21
      %p247 = scmp.lt.s32.totalorder %s246, 99
      %s248 = scalar_select %p247, %s246, 99
      %p249 = scmp.lt.s32.totalorder %s20, 0
      %s250 = scalar_select %p249, %s20, 0
      %s251 = sadd.s32 %s250, %s248
      %s252 = smul.addr %s251, 4
      %s253 = scalar_lea.vmem %s1, %s252
      %s254 = smul.u32 100, %s21
      %p255 = scmp.lt.s32.totalorder %s20, 0
      %s256 = scalar_select %p255, %s20, 0
      %s257 = scalar_lea.vmem %s2, %s256
      %s258 = smul.u32 32, %s19
      %p259 = scmp.lt.s32.totalorder %s258, 63
      %s260 = scalar_select %p259, %s258, 63
      %p261 = scmp.lt.s32.totalorder %s20, 0
      %s262 = scalar_select %p261, %s20, 0
      %s263 = sadd.s32 %s262, %s260
      %s264 = smul.addr %s263, 8
      %s265 = scalar_lea.vmem %s3, %s264
      %s266 = smul.u32 32, %s19
      %p268 = scmp.eq.s32.totalorder %s21, 0
      // Predicated region
      $region33: #{simplenet_forward.7} parent=31 // pred_check
        %p269 = pneg %p268
      $region34: #{simplenet_forward.7} parent=31 // pred_check_branch
        %271 = sbr.rel (%p269) target = $region36
      $region35: #{simplenet_forward.7} parent=31 // pred_region
        %272 = vst [vmem:[#allocation2] sm:$0xff] 0.0
        %273 = vst [vmem:[#allocation2 + $0x8] sm:$0xff] 0.0
        %274 = vst [vmem:[#allocation2 + $0x10] sm:$0xff] 0.0
        %275 = vst [vmem:[#allocation2 + $0x18] sm:$0xff] 0.0
        %276 = vst [vmem:[#allocation2 + $0x20] sm:$0xff] 0.0
        %277 = vst [vmem:[#allocation2 + $0x28] sm:$0xff] 0.0
        %278 = vst [vmem:[#allocation2 + $0x30] sm:$0xff] 0.0
        %279 = vst [vmem:[#allocation2 + $0x38] sm:$0xff] 0.0
        %280 = vst [vmem:[#allocation2 + $0x40] sm:$0xff] 0.0
        %281 = vst [vmem:[#allocation2 + $0x48] sm:$0xff] 0.0
        %282 = vst [vmem:[#allocation2 + $0x50] sm:$0xff] 0.0
        %283 = vst [vmem:[#allocation2 + $0x58] sm:$0xff] 0.0
        %284 = vst [vmem:[#allocation2 + $0x60] sm:$0xff] 0.0
        %285 = vst [vmem:[#allocation2 + $0x68] sm:$0xff] 0.0
        %286 = vst [vmem:[#allocation2 + $0x70] sm:$0xff] 0.0
        %287 = vst [vmem:[#allocation2 + $0x78] sm:$0xff] 0.0
        %288 = vst [vmem:[#allocation2 + $0x80] sm:$0xff] 0.0
        %289 = vst [vmem:[#allocation2 + $0x88] sm:$0xff] 0.0
        %290 = vst [vmem:[#allocation2 + $0x90] sm:$0xff] 0.0
        %291 = vst [vmem:[#allocation2 + $0x98] sm:$0xff] 0.0
        %292 = vst [vmem:[#allocation2 + $0xa0] sm:$0xff] 0.0
        %293 = vst [vmem:[#allocation2 + $0xa8] sm:$0xff] 0.0
        %294 = vst [vmem:[#allocation2 + $0xb0] sm:$0xff] 0.0
        %295 = vst [vmem:[#allocation2 + $0xb8] sm:$0xff] 0.0
        %296 = vst [vmem:[#allocation2 + $0xc0] sm:$0xff] 0.0
        %297 = vst [vmem:[#allocation2 + $0xc8] sm:$0xff] 0.0
        %298 = vst [vmem:[#allocation2 + $0xd0] sm:$0xff] 0.0
        %299 = vst [vmem:[#allocation2 + $0xd8] sm:$0xff] 0.0
        %300 = vst [vmem:[#allocation2 + $0xe0] sm:$0xff] 0.0
        %301 = vst [vmem:[#allocation2 + $0xe8] sm:$0xff] 0.0
        %302 = vst [vmem:[#allocation2 + $0xf0] sm:$0xff] 0.0
        %303 = vst [vmem:[#allocation2 + $0xf8] sm:$0xff] 0.0
      $region36: #{simplenet_forward.7} parent=31 // pred_fallthru
        _
      %v304 = vld [vmem:[#allocation2] sm:$0xff]
      %v305 = vld [vmem:[#allocation2 + $0x8] sm:$0xff]
      %v306 = vld [vmem:[#allocation2 + $0x10] sm:$0xff]
      %v307 = vld [vmem:[#allocation2 + $0x18] sm:$0xff]
      %v308 = vld [vmem:[#allocation2 + $0x20] sm:$0xff]
      %v309 = vld [vmem:[#allocation2 + $0x28] sm:$0xff]
      %v310 = vld [vmem:[#allocation2 + $0x30] sm:$0xff]
      %v311 = vld [vmem:[#allocation2 + $0x38] sm:$0xff]
      %v312 = vld [vmem:[#allocation2 + $0x40] sm:$0xff]
      %v313 = vld [vmem:[#allocation2 + $0x48] sm:$0xff]
      %v314 = vld [vmem:[#allocation2 + $0x50] sm:$0xff]
      %v315 = vld [vmem:[#allocation2 + $0x58] sm:$0xff]
      %v316 = vld [vmem:[#allocation2 + $0x60] sm:$0xff]
      %v317 = vld [vmem:[#allocation2 + $0x68] sm:$0xff]
      %v318 = vld [vmem:[#allocation2 + $0x70] sm:$0xff]
      %v319 = vld [vmem:[#allocation2 + $0x78] sm:$0xff]
      %v320 = vld [vmem:[#allocation2 + $0x80] sm:$0xff]
      %v321 = vld [vmem:[#allocation2 + $0x88] sm:$0xff]
      %v322 = vld [vmem:[#allocation2 + $0x90] sm:$0xff]
      %v323 = vld [vmem:[#allocation2 + $0x98] sm:$0xff]
      %v324 = vld [vmem:[#allocation2 + $0xa0] sm:$0xff]
      %v325 = vld [vmem:[#allocation2 + $0xa8] sm:$0xff]
      %v326 = vld [vmem:[#allocation2 + $0xb0] sm:$0xff]
      %v327 = vld [vmem:[#allocation2 + $0xb8] sm:$0xff]
      %v328 = vld [vmem:[#allocation2 + $0xc0] sm:$0xff]
      %v329 = vld [vmem:[#allocation2 + $0xc8] sm:$0xff]
      %v330 = vld [vmem:[#allocation2 + $0xd0] sm:$0xff]
      %v331 = vld [vmem:[#allocation2 + $0xd8] sm:$0xff]
      %v332 = vld [vmem:[#allocation2 + $0xe0] sm:$0xff]
      %v333 = vld [vmem:[#allocation2 + $0xe8] sm:$0xff]
      %v334 = vld [vmem:[#allocation2 + $0xf0] sm:$0xff]
      %v335 = vld [vmem:[#allocation2 + $0xf8] sm:$0xff]
      %v336 = vld [vmem:[%s243] sm:$0xff]
      %v337 = vld [vmem:[%s243 + $0x8] sm:$0xff]
      %v338 = vld [vmem:[%s243 + $0x10] sm:$0xff]
      %v339 = vld [vmem:[%s243 + $0x18] sm:$0xf]
      %v340 = vld [vmem:[%s243 + $0x1c] sm:$0xff]
      %v341 = vld [vmem:[%s243 + $0x24] sm:$0xff]
      %v342 = vld [vmem:[%s243 + $0x2c] sm:$0xff]
      %v343 = vld [vmem:[%s243 + $0x34] sm:$0xf]
      %v344 = vld [vmem:[%s243 + $0x38] sm:$0xff]
      %v345 = vld [vmem:[%s243 + $0x40] sm:$0xff]
      %v346 = vld [vmem:[%s243 + $0x48] sm:$0xff]
      %v347 = vld [vmem:[%s243 + $0x50] sm:$0xf]
      %v348 = vld [vmem:[%s243 + $0x54] sm:$0xff]
      %v349 = vld [vmem:[%s243 + $0x5c] sm:$0xff]
      %v350 = vld [vmem:[%s243 + $0x64] sm:$0xff]
      %v351 = vld [vmem:[%s243 + $0x6c] sm:$0xf]
      %v352 = vld [vmem:[%s243 + $0x70] sm:$0xff]
      %v353 = vld [vmem:[%s243 + $0x78] sm:$0xff]
      %v354 = vld [vmem:[%s243 + $0x80] sm:$0xff]
      %v355 = vld [vmem:[%s243 + $0x88] sm:$0xf]
      %v356 = vld [vmem:[%s243 + $0x8c] sm:$0xff]
      %v357 = vld [vmem:[%s243 + $0x94] sm:$0xff]
      %v358 = vld [vmem:[%s243 + $0x9c] sm:$0xff]
      %v359 = vld [vmem:[%s243 + $0xa4] sm:$0xf]
      %v360 = vld [vmem:[%s243 + $0xa8] sm:$0xff]
      %v361 = vld [vmem:[%s243 + $0xb0] sm:$0xff]
      %v362 = vld [vmem:[%s243 + $0xb8] sm:$0xff]
      %v363 = vld [vmem:[%s243 + $0xc0] sm:$0xf]
      %v364 = vld [vmem:[%s243 + $0xc4] sm:$0xff]
      %v365 = vld [vmem:[%s243 + $0xcc] sm:$0xff]
      %v366 = vld [vmem:[%s243 + $0xd4] sm:$0xff]
      %v367 = vld [vmem:[%s243 + $0xdc] sm:$0xf]
      %v368 = vld [vmem:[%s243 + $0xe0] sm:$0xff]
      %v369 = vld [vmem:[%s243 + $0xe8] sm:$0xff]
      %v370 = vld [vmem:[%s243 + $0xf0] sm:$0xff]
      %v371 = vld [vmem:[%s243 + $0xf8] sm:$0xf]
      %v372 = vld [vmem:[%s243 + $0xfc] sm:$0xff]
      %v373 = vld [vmem:[%s243 + $0x104] sm:$0xff]
      %v374 = vld [vmem:[%s243 + $0x10c] sm:$0xff]
      %v375 = vld [vmem:[%s243 + $0x114] sm:$0xf]
      %v376 = vld [vmem:[%s243 + $0x118] sm:$0xff]
      %v377 = vld [vmem:[%s243 + $0x120] sm:$0xff]
      %v378 = vld [vmem:[%s243 + $0x128] sm:$0xff]
      %v379 = vld [vmem:[%s243 + $0x130] sm:$0xf]
      %v380 = vld [vmem:[%s243 + $0x134] sm:$0xff]
      %v381 = vld [vmem:[%s243 + $0x13c] sm:$0xff]
      %v382 = vld [vmem:[%s243 + $0x144] sm:$0xff]
      %v383 = vld [vmem:[%s243 + $0x14c] sm:$0xf]
      %v384 = vld [vmem:[%s243 + $0x150] sm:$0xff]
      %v385 = vld [vmem:[%s243 + $0x158] sm:$0xff]
      %v386 = vld [vmem:[%s243 + $0x160] sm:$0xff]
      %v387 = vld [vmem:[%s243 + $0x168] sm:$0xf]
      %v388 = vld [vmem:[%s243 + $0x16c] sm:$0xff]
      %v389 = vld [vmem:[%s243 + $0x174] sm:$0xff]
      %v390 = vld [vmem:[%s243 + $0x17c] sm:$0xff]
      %v391 = vld [vmem:[%s243 + $0x184] sm:$0xf]
      %v392 = vld [vmem:[%s243 + $0x188] sm:$0xff]
      %v393 = vld [vmem:[%s243 + $0x190] sm:$0xff]
      %v394 = vld [vmem:[%s243 + $0x198] sm:$0xff]
      %v395 = vld [vmem:[%s243 + $0x1a0] sm:$0xf]
      %v396 = vld [vmem:[%s243 + $0x1a4] sm:$0xff]
      %v397 = vld [vmem:[%s243 + $0x1ac] sm:$0xff]
      %v398 = vld [vmem:[%s243 + $0x1b4] sm:$0xff]
      %v399 = vld [vmem:[%s243 + $0x1bc] sm:$0xf]
      %v400 = vld [vmem:[%s243 + $0x1c0] sm:$0xff]
      %v401 = vld [vmem:[%s243 + $0x1c8] sm:$0xff]
      %v402 = vld [vmem:[%s243 + $0x1d0] sm:$0xff]
      %v403 = vld [vmem:[%s243 + $0x1d8] sm:$0xf]
      %v404 = vld [vmem:[%s243 + $0x1dc] sm:$0xff]
      %v405 = vld [vmem:[%s243 + $0x1e4] sm:$0xff]
      %v406 = vld [vmem:[%s243 + $0x1ec] sm:$0xff]
      %v407 = vld [vmem:[%s243 + $0x1f4] sm:$0xf]
      %v408 = vld [vmem:[%s243 + $0x1f8] sm:$0xff]
      %v409 = vld [vmem:[%s243 + $0x200] sm:$0xff]
      %v410 = vld [vmem:[%s243 + $0x208] sm:$0xff]
      %v411 = vld [vmem:[%s243 + $0x210] sm:$0xf]
      %v412 = vld [vmem:[%s243 + $0x214] sm:$0xff]
      %v413 = vld [vmem:[%s243 + $0x21c] sm:$0xff]
      %v414 = vld [vmem:[%s243 + $0x224] sm:$0xff]
      %v415 = vld [vmem:[%s243 + $0x22c] sm:$0xf]
      %v416 = vld [vmem:[%s243 + $0x230] sm:$0xff]
      %v417 = vld [vmem:[%s243 + $0x238] sm:$0xff]
      %v418 = vld [vmem:[%s243 + $0x240] sm:$0xff]
      %v419 = vld [vmem:[%s243 + $0x248] sm:$0xf]
      %v420 = vld [vmem:[%s243 + $0x24c] sm:$0xff]
      %v421 = vld [vmem:[%s243 + $0x254] sm:$0xff]
      %v422 = vld [vmem:[%s243 + $0x25c] sm:$0xff]
      %v423 = vld [vmem:[%s243 + $0x264] sm:$0xf]
      %v424 = vld [vmem:[%s243 + $0x268] sm:$0xff]
      %v425 = vld [vmem:[%s243 + $0x270] sm:$0xff]
      %v426 = vld [vmem:[%s243 + $0x278] sm:$0xff]
      %v427 = vld [vmem:[%s243 + $0x280] sm:$0xf]
      %v428 = vld [vmem:[%s243 + $0x284] sm:$0xff]
      %v429 = vld [vmem:[%s243 + $0x28c] sm:$0xff]
      %v430 = vld [vmem:[%s243 + $0x294] sm:$0xff]
      %v431 = vld [vmem:[%s243 + $0x29c] sm:$0xf]
      %v432 = vld [vmem:[%s243 + $0x2a0] sm:$0xff]
      %v433 = vld [vmem:[%s243 + $0x2a8] sm:$0xff]
      %v434 = vld [vmem:[%s243 + $0x2b0] sm:$0xff]
      %v435 = vld [vmem:[%s243 + $0x2b8] sm:$0xf]
      %v436 = vld [vmem:[%s243 + $0x2bc] sm:$0xff]
      %v437 = vld [vmem:[%s243 + $0x2c4] sm:$0xff]
      %v438 = vld [vmem:[%s243 + $0x2cc] sm:$0xff]
      %v439 = vld [vmem:[%s243 + $0x2d4] sm:$0xf]
      %v440 = vld [vmem:[%s243 + $0x2d8] sm:$0xff]
      %v441 = vld [vmem:[%s243 + $0x2e0] sm:$0xff]
      %v442 = vld [vmem:[%s243 + $0x2e8] sm:$0xff]
      %v443 = vld [vmem:[%s243 + $0x2f0] sm:$0xf]
      %v444 = vld [vmem:[%s243 + $0x2f4] sm:$0xff]
      %v445 = vld [vmem:[%s243 + $0x2fc] sm:$0xff]
      %v446 = vld [vmem:[%s243 + $0x304] sm:$0xff]
      %v447 = vld [vmem:[%s243 + $0x30c] sm:$0xf]
      %v448 = vld [vmem:[%s243 + $0x310] sm:$0xff]
      %v449 = vld [vmem:[%s243 + $0x318] sm:$0xff]
      %v450 = vld [vmem:[%s243 + $0x320] sm:$0xff]
      %v451 = vld [vmem:[%s243 + $0x328] sm:$0xf]
      %v452 = vld [vmem:[%s243 + $0x32c] sm:$0xff]
      %v453 = vld [vmem:[%s243 + $0x334] sm:$0xff]
      %v454 = vld [vmem:[%s243 + $0x33c] sm:$0xff]
      %v455 = vld [vmem:[%s243 + $0x344] sm:$0xf]
      %v456 = vld [vmem:[%s243 + $0x348] sm:$0xff]
      %v457 = vld [vmem:[%s243 + $0x350] sm:$0xff]
      %v458 = vld [vmem:[%s243 + $0x358] sm:$0xff]
      %v459 = vld [vmem:[%s243 + $0x360] sm:$0xf]
      %v460 = vld [vmem:[%s243 + $0x364] sm:$0xff]
      %v461 = vld [vmem:[%s243 + $0x36c] sm:$0xff]
      %v462 = vld [vmem:[%s243 + $0x374] sm:$0xff]
      %v463 = vld [vmem:[%s243 + $0x37c] sm:$0xf]
      %v464 = vld [vmem:[%s253] sm:$0xf]
      %v465 = vld [vmem:[%s253 + $0x4] sm:$0xf]
      %v466 = vld [vmem:[%s253 + $0x8] sm:$0xf]
      %v467 = vld [vmem:[%s253 + $0xc] sm:$0xf]
      %v468 = vld [vmem:[%s253 + $0x10] sm:$0xf]
      %v469 = vld [vmem:[%s253 + $0x14] sm:$0xf]
      %v470 = vld [vmem:[%s253 + $0x18] sm:$0xf]
      %v471 = vld [vmem:[%s253 + $0x1c] sm:$0xf]
      %v472 = vld [vmem:[%s253 + $0x20] sm:$0xf]
      %v473 = vld [vmem:[%s253 + $0x24] sm:$0xf]
      %v474 = vld [vmem:[%s253 + $0x28] sm:$0xf]
      %v475 = vld [vmem:[%s253 + $0x2c] sm:$0xf]
      %v476 = vld [vmem:[%s253 + $0x30] sm:$0xf]
      %v477 = vld [vmem:[%s253 + $0x34] sm:$0xf]
      %v478 = vld [vmem:[%s253 + $0x38] sm:$0xf]
      %v479 = vld [vmem:[%s253 + $0x3c] sm:$0xf]
      %v480 = vld [vmem:[%s253 + $0x40] sm:$0xf]
      %v481 = vld [vmem:[%s253 + $0x44] sm:$0xf]
      %v482 = vld [vmem:[%s253 + $0x48] sm:$0xf]
      %v483 = vld [vmem:[%s253 + $0x4c] sm:$0xf]
      %v484 = vld [vmem:[%s253 + $0x50] sm:$0xf]
      %v485 = vld [vmem:[%s253 + $0x54] sm:$0xf]
      %v486 = vld [vmem:[%s253 + $0x58] sm:$0xf]
      %v487 = vld [vmem:[%s253 + $0x5c] sm:$0xf]
      %v488 = vld [vmem:[%s253 + $0x60] sm:$0xf]
      %v489 = vld [vmem:[%s253 + $0x64] sm:$0xf]
      %v490 = vld [vmem:[%s253 + $0x68] sm:$0xf]
      %v491 = vld [vmem:[%s253 + $0x6c] sm:$0xf]
      %v492 = vld [vmem:[%s253 + $0x70] sm:$0xf]
      %v493 = vld [vmem:[%s253 + $0x74] sm:$0xf]
      %v494 = vld [vmem:[%s253 + $0x78] sm:$0xf]
      %v495 = vld [vmem:[%s253 + $0x7c] sm:$0xf]
      %v496 = vld [vmem:[%s253 + $0x80] sm:$0xf]
      %v497 = vld [vmem:[%s253 + $0x84] sm:$0xf]
      %v498 = vld [vmem:[%s253 + $0x88] sm:$0xf]
      %v499 = vld [vmem:[%s253 + $0x8c] sm:$0xf]
      %v500 = vld [vmem:[%s253 + $0x90] sm:$0xf]
      %v501 = vld [vmem:[%s253 + $0x94] sm:$0xf]
      %v502 = vld [vmem:[%s253 + $0x98] sm:$0xf]
      %v503 = vld [vmem:[%s253 + $0x9c] sm:$0xf]
      %v504 = vld [vmem:[%s253 + $0xa0] sm:$0xf]
      %v505 = vld [vmem:[%s253 + $0xa4] sm:$0xf]
      %v506 = vld [vmem:[%s253 + $0xa8] sm:$0xf]
      %v507 = vld [vmem:[%s253 + $0xac] sm:$0xf]
      %v508 = vld [vmem:[%s253 + $0xb0] sm:$0xf]
      %v509 = vld [vmem:[%s253 + $0xb4] sm:$0xf]
      %v510 = vld [vmem:[%s253 + $0xb8] sm:$0xf]
      %v511 = vld [vmem:[%s253 + $0xbc] sm:$0xf]
      %v512 = vld [vmem:[%s253 + $0xc0] sm:$0xf]
      %v513 = vld [vmem:[%s253 + $0xc4] sm:$0xf]
      %v514 = vld [vmem:[%s253 + $0xc8] sm:$0xf]
      %v515 = vld [vmem:[%s253 + $0xcc] sm:$0xf]
      %v516 = vld [vmem:[%s253 + $0xd0] sm:$0xf]
      %v517 = vld [vmem:[%s253 + $0xd4] sm:$0xf]
      %v518 = vld [vmem:[%s253 + $0xd8] sm:$0xf]
      %v519 = vld [vmem:[%s253 + $0xdc] sm:$0xf]
      %v520 = vld [vmem:[%s253 + $0xe0] sm:$0xf]
      %v521 = vld [vmem:[%s253 + $0xe4] sm:$0xf]
      %v522 = vld [vmem:[%s253 + $0xe8] sm:$0xf]
      %v523 = vld [vmem:[%s253 + $0xec] sm:$0xf]
      %v524 = vld [vmem:[%s253 + $0xf0] sm:$0xf]
      %v525 = vld [vmem:[%s253 + $0xf4] sm:$0xf]
      %v526 = vld [vmem:[%s253 + $0xf8] sm:$0xf]
      %v527 = vld [vmem:[%s253 + $0xfc] sm:$0xf]
      %v528 = vld [vmem:[%s253 + $0x100] sm:$0xf]
      %v529 = vld [vmem:[%s253 + $0x104] sm:$0xf]
      %v530 = vld [vmem:[%s253 + $0x108] sm:$0xf]
      %v531 = vld [vmem:[%s253 + $0x10c] sm:$0xf]
      %v532 = vld [vmem:[%s253 + $0x110] sm:$0xf]
      %v533 = vld [vmem:[%s253 + $0x114] sm:$0xf]
      %v534 = vld [vmem:[%s253 + $0x118] sm:$0xf]
      %v535 = vld [vmem:[%s253 + $0x11c] sm:$0xf]
      %v536 = vld [vmem:[%s253 + $0x120] sm:$0xf]
      %v537 = vld [vmem:[%s253 + $0x124] sm:$0xf]
      %v538 = vld [vmem:[%s253 + $0x128] sm:$0xf]
      %v539 = vld [vmem:[%s253 + $0x12c] sm:$0xf]
      %v540 = vld [vmem:[%s253 + $0x130] sm:$0xf]
      %v541 = vld [vmem:[%s253 + $0x134] sm:$0xf]
      %v542 = vld [vmem:[%s253 + $0x138] sm:$0xf]
      %v543 = vld [vmem:[%s253 + $0x13c] sm:$0xf]
      %v544 = vld [vmem:[%s253 + $0x140] sm:$0xf]
      %v545 = vld [vmem:[%s253 + $0x144] sm:$0xf]
      %v546 = vld [vmem:[%s253 + $0x148] sm:$0xf]
      %v547 = vld [vmem:[%s253 + $0x14c] sm:$0xf]
      %v548 = vld [vmem:[%s253 + $0x150] sm:$0xf]
      %v549 = vld [vmem:[%s253 + $0x154] sm:$0xf]
      %v550 = vld [vmem:[%s253 + $0x158] sm:$0xf]
      %v551 = vld [vmem:[%s253 + $0x15c] sm:$0xf]
      %v552 = vld [vmem:[%s253 + $0x160] sm:$0xf]
      %v553 = vld [vmem:[%s253 + $0x164] sm:$0xf]
      %v554 = vld [vmem:[%s253 + $0x168] sm:$0xf]
      %v555 = vld [vmem:[%s253 + $0x16c] sm:$0xf]
      %v556 = vld [vmem:[%s253 + $0x170] sm:$0xf]
      %v557 = vld [vmem:[%s253 + $0x174] sm:$0xf]
      %v558 = vld [vmem:[%s253 + $0x178] sm:$0xf]
      %v559 = vld [vmem:[%s253 + $0x17c] sm:$0xf]
      %v560 = vld [vmem:[%s253 + $0x180] sm:$0xf]
      %v561 = vld [vmem:[%s253 + $0x184] sm:$0xf]
      %v562 = vld [vmem:[%s253 + $0x188] sm:$0xf]
      %v563 = vld [vmem:[%s253 + $0x18c] sm:$0xf]
      %v692 = vunpack.c.l.b16 %v336
      %v693 = vunpack.c.h.b16 %v336
      %v694 = vunpack.c.l.b16 %v337
      %v695 = vunpack.c.h.b16 %v337
      %v696 = vunpack.c.l.b16 %v338
      %v697 = vunpack.c.h.b16 %v338
      %v698 = vunpack.c.l.b16 %v339
      %v699 = vunpack.c.l.b16 %v340
      %v700 = vunpack.c.h.b16 %v340
      %v701 = vunpack.c.l.b16 %v341
      %v702 = vunpack.c.h.b16 %v341
      %v703 = vunpack.c.l.b16 %v342
      %v704 = vunpack.c.h.b16 %v342
      %v705 = vunpack.c.l.b16 %v343
      %v706 = vunpack.c.l.b16 %v344
      %v707 = vunpack.c.h.b16 %v344
      %v708 = vunpack.c.l.b16 %v345
      %v709 = vunpack.c.h.b16 %v345
      %v710 = vunpack.c.l.b16 %v346
      %v711 = vunpack.c.h.b16 %v346
      %v712 = vunpack.c.l.b16 %v347
      %v713 = vunpack.c.l.b16 %v348
      %v714 = vunpack.c.h.b16 %v348
      %v715 = vunpack.c.l.b16 %v349
      %v716 = vunpack.c.h.b16 %v349
      %v717 = vunpack.c.l.b16 %v350
      %v718 = vunpack.c.h.b16 %v350
      %v719 = vunpack.c.l.b16 %v351
      %v720 = vunpack.c.l.b16 %v352
      %v721 = vunpack.c.h.b16 %v352
      %v722 = vunpack.c.l.b16 %v353
      %v723 = vunpack.c.h.b16 %v353
      %v724 = vunpack.c.l.b16 %v354
      %v725 = vunpack.c.h.b16 %v354
      %v726 = vunpack.c.l.b16 %v355
      %v727 = vunpack.c.l.b16 %v356
      %v728 = vunpack.c.h.b16 %v356
      %v729 = vunpack.c.l.b16 %v357
      %v730 = vunpack.c.h.b16 %v357
      %v731 = vunpack.c.l.b16 %v358
      %v732 = vunpack.c.h.b16 %v358
      %v733 = vunpack.c.l.b16 %v359
      %v734 = vunpack.c.l.b16 %v360
      %v735 = vunpack.c.h.b16 %v360
      %v736 = vunpack.c.l.b16 %v361
      %v737 = vunpack.c.h.b16 %v361
      %v738 = vunpack.c.l.b16 %v362
      %v739 = vunpack.c.h.b16 %v362
      %v740 = vunpack.c.l.b16 %v363
      %v741 = vunpack.c.l.b16 %v364
      %v742 = vunpack.c.h.b16 %v364
      %v743 = vunpack.c.l.b16 %v365
      %v744 = vunpack.c.h.b16 %v365
      %v745 = vunpack.c.l.b16 %v366
      %v746 = vunpack.c.h.b16 %v366
      %v747 = vunpack.c.l.b16 %v367
      %v748 = vunpack.c.l.b16 %v368
      %v749 = vunpack.c.h.b16 %v368
      %v750 = vunpack.c.l.b16 %v369
      %v751 = vunpack.c.h.b16 %v369
      %v752 = vunpack.c.l.b16 %v370
      %v753 = vunpack.c.h.b16 %v370
      %v754 = vunpack.c.l.b16 %v371
      %v755 = vunpack.c.l.b16 %v372
      %v756 = vunpack.c.h.b16 %v372
      %v757 = vunpack.c.l.b16 %v373
      %v758 = vunpack.c.h.b16 %v373
      %v759 = vunpack.c.l.b16 %v374
      %v760 = vunpack.c.h.b16 %v374
      %v761 = vunpack.c.l.b16 %v375
      %v762 = vunpack.c.l.b16 %v376
      %v763 = vunpack.c.h.b16 %v376
      %v764 = vunpack.c.l.b16 %v377
      %v765 = vunpack.c.h.b16 %v377
      %v766 = vunpack.c.l.b16 %v378
      %v767 = vunpack.c.h.b16 %v378
      %v768 = vunpack.c.l.b16 %v379
      %v769 = vunpack.c.l.b16 %v380
      %v770 = vunpack.c.h.b16 %v380
      %v771 = vunpack.c.l.b16 %v381
      %v772 = vunpack.c.h.b16 %v381
      %v773 = vunpack.c.l.b16 %v382
      %v774 = vunpack.c.h.b16 %v382
      %v775 = vunpack.c.l.b16 %v383
      %v776 = vunpack.c.l.b16 %v384
      %v777 = vunpack.c.h.b16 %v384
      %v778 = vunpack.c.l.b16 %v385
      %v779 = vunpack.c.h.b16 %v385
      %v780 = vunpack.c.l.b16 %v386
      %v781 = vunpack.c.h.b16 %v386
      %v782 = vunpack.c.l.b16 %v387
      %v783 = vunpack.c.l.b16 %v388
      %v784 = vunpack.c.h.b16 %v388
      %v785 = vunpack.c.l.b16 %v389
      %v786 = vunpack.c.h.b16 %v389
      %v787 = vunpack.c.l.b16 %v390
      %v788 = vunpack.c.h.b16 %v390
      %v789 = vunpack.c.l.b16 %v391
      %v790 = vunpack.c.l.b16 %v392
      %v791 = vunpack.c.h.b16 %v392
      %v792 = vunpack.c.l.b16 %v393
      %v793 = vunpack.c.h.b16 %v393
      %v794 = vunpack.c.l.b16 %v394
      %v795 = vunpack.c.h.b16 %v394
      %v796 = vunpack.c.l.b16 %v395
      %v797 = vunpack.c.l.b16 %v396
      %v798 = vunpack.c.h.b16 %v396
      %v799 = vunpack.c.l.b16 %v397
      %v800 = vunpack.c.h.b16 %v397
      %v801 = vunpack.c.l.b16 %v398
      %v802 = vunpack.c.h.b16 %v398
      %v803 = vunpack.c.l.b16 %v399
      %v804 = vunpack.c.l.b16 %v400
      %v805 = vunpack.c.h.b16 %v400
      %v806 = vunpack.c.l.b16 %v401
      %v807 = vunpack.c.h.b16 %v401
      %v808 = vunpack.c.l.b16 %v402
      %v809 = vunpack.c.h.b16 %v402
      %v810 = vunpack.c.l.b16 %v403
      %v811 = vunpack.c.l.b16 %v404
      %v812 = vunpack.c.h.b16 %v404
      %v813 = vunpack.c.l.b16 %v405
      %v814 = vunpack.c.h.b16 %v405
      %v815 = vunpack.c.l.b16 %v406
      %v816 = vunpack.c.h.b16 %v406
      %v817 = vunpack.c.l.b16 %v407
      %v818 = vunpack.c.l.b16 %v408
      %v819 = vunpack.c.h.b16 %v408
      %v820 = vunpack.c.l.b16 %v409
      %v821 = vunpack.c.h.b16 %v409
      %v822 = vunpack.c.l.b16 %v410
      %v823 = vunpack.c.h.b16 %v410
      %v824 = vunpack.c.l.b16 %v411
      %v825 = vunpack.c.l.b16 %v412
      %v826 = vunpack.c.h.b16 %v412
      %v827 = vunpack.c.l.b16 %v413
      %v828 = vunpack.c.h.b16 %v413
      %v829 = vunpack.c.l.b16 %v414
      %v830 = vunpack.c.h.b16 %v414
      %v831 = vunpack.c.l.b16 %v415
      %v832 = vunpack.c.l.b16 %v416
      %v833 = vunpack.c.h.b16 %v416
      %v834 = vunpack.c.l.b16 %v417
      %v835 = vunpack.c.h.b16 %v417
      %v836 = vunpack.c.l.b16 %v418
      %v837 = vunpack.c.h.b16 %v418
      %v838 = vunpack.c.l.b16 %v419
      %v839 = vunpack.c.l.b16 %v420
      %v840 = vunpack.c.h.b16 %v420
      %v841 = vunpack.c.l.b16 %v421
      %v842 = vunpack.c.h.b16 %v421
      %v843 = vunpack.c.l.b16 %v422
      %v844 = vunpack.c.h.b16 %v422
      %v845 = vunpack.c.l.b16 %v423
      %v846 = vunpack.c.l.b16 %v424
      %v847 = vunpack.c.h.b16 %v424
      %v848 = vunpack.c.l.b16 %v425
      %v849 = vunpack.c.h.b16 %v425
      %v850 = vunpack.c.l.b16 %v426
      %v851 = vunpack.c.h.b16 %v426
      %v852 = vunpack.c.l.b16 %v427
      %v853 = vunpack.c.l.b16 %v428
      %v854 = vunpack.c.h.b16 %v428
      %v855 = vunpack.c.l.b16 %v429
      %v856 = vunpack.c.h.b16 %v429
      %v857 = vunpack.c.l.b16 %v430
      %v858 = vunpack.c.h.b16 %v430
      %v859 = vunpack.c.l.b16 %v431
      %v860 = vunpack.c.l.b16 %v432
      %v861 = vunpack.c.h.b16 %v432
      %v862 = vunpack.c.l.b16 %v433
      %v863 = vunpack.c.h.b16 %v433
      %v864 = vunpack.c.l.b16 %v434
      %v865 = vunpack.c.h.b16 %v434
      %v866 = vunpack.c.l.b16 %v435
      %v867 = vunpack.c.l.b16 %v436
      %v868 = vunpack.c.h.b16 %v436
      %v869 = vunpack.c.l.b16 %v437
      %v870 = vunpack.c.h.b16 %v437
      %v871 = vunpack.c.l.b16 %v438
      %v872 = vunpack.c.h.b16 %v438
      %v873 = vunpack.c.l.b16 %v439
      %v874 = vunpack.c.l.b16 %v440
      %v875 = vunpack.c.h.b16 %v440
      %v876 = vunpack.c.l.b16 %v441
      %v877 = vunpack.c.h.b16 %v441
      %v878 = vunpack.c.l.b16 %v442
      %v879 = vunpack.c.h.b16 %v442
      %v880 = vunpack.c.l.b16 %v443
      %v881 = vunpack.c.l.b16 %v444
      %v882 = vunpack.c.h.b16 %v444
      %v883 = vunpack.c.l.b16 %v445
      %v884 = vunpack.c.h.b16 %v445
      %v885 = vunpack.c.l.b16 %v446
      %v886 = vunpack.c.h.b16 %v446
      %v887 = vunpack.c.l.b16 %v447
      %v888 = vunpack.c.l.b16 %v448
      %v889 = vunpack.c.h.b16 %v448
      %v890 = vunpack.c.l.b16 %v449
      %v891 = vunpack.c.h.b16 %v449
      %v892 = vunpack.c.l.b16 %v450
      %v893 = vunpack.c.h.b16 %v450
      %v894 = vunpack.c.l.b16 %v451
      %v895 = vunpack.c.l.b16 %v452
      %v896 = vunpack.c.h.b16 %v452
      %v897 = vunpack.c.l.b16 %v453
      %v898 = vunpack.c.h.b16 %v453
      %v899 = vunpack.c.l.b16 %v454
      %v900 = vunpack.c.h.b16 %v454
      %v901 = vunpack.c.l.b16 %v455
      %v902 = vunpack.c.l.b16 %v456
      %v903 = vunpack.c.h.b16 %v456
      %v904 = vunpack.c.l.b16 %v457
      %v905 = vunpack.c.h.b16 %v457
      %v906 = vunpack.c.l.b16 %v458
      %v907 = vunpack.c.h.b16 %v458
      %v908 = vunpack.c.l.b16 %v459
      %v909 = vunpack.c.l.b16 %v460
      %v910 = vunpack.c.h.b16 %v460
      %v911 = vunpack.c.l.b16 %v461
      %v912 = vunpack.c.h.b16 %v461
      %v913 = vunpack.c.l.b16 %v462
      %v914 = vunpack.c.h.b16 %v462
      %v915 = vunpack.c.l.b16 %v463
      %v916 = vpack.c.b16 %v699, %v692
      %v917 = vpack.c.b16 %v700, %v693
      %v918 = vpack.c.b16 %v701, %v694
      %v919 = vpack.c.b16 %v702, %v695
      %v920 = vpack.c.b16 %v703, %v696
      %v921 = vpack.c.b16 %v704, %v697
      %v922 = vpack.c.b16 %v705, %v698
      %v923 = vpack.c.b16 %v713, %v706
      %v924 = vpack.c.b16 %v714, %v707
      %v925 = vpack.c.b16 %v715, %v708
      %v926 = vpack.c.b16 %v716, %v709
      %v927 = vpack.c.b16 %v717, %v710
      %v928 = vpack.c.b16 %v718, %v711
      %v929 = vpack.c.b16 %v719, %v712
      %v930 = vpack.c.b16 %v727, %v720
      %v931 = vpack.c.b16 %v728, %v721
      %v932 = vpack.c.b16 %v729, %v722
      %v933 = vpack.c.b16 %v730, %v723
      %v934 = vpack.c.b16 %v731, %v724
      %v935 = vpack.c.b16 %v732, %v725
      %v936 = vpack.c.b16 %v733, %v726
      %v937 = vpack.c.b16 %v741, %v734
      %v938 = vpack.c.b16 %v742, %v735
      %v939 = vpack.c.b16 %v743, %v736
      %v940 = vpack.c.b16 %v744, %v737
      %v941 = vpack.c.b16 %v745, %v738
      %v942 = vpack.c.b16 %v746, %v739
      %v943 = vpack.c.b16 %v747, %v740
      %v944 = vpack.c.b16 %v755, %v748
      %v945 = vpack.c.b16 %v756, %v749
      %v946 = vpack.c.b16 %v757, %v750
      %v947 = vpack.c.b16 %v758, %v751
      %v948 = vpack.c.b16 %v759, %v752
      %v949 = vpack.c.b16 %v760, %v753
      %v950 = vpack.c.b16 %v761, %v754
      %v951 = vpack.c.b16 %v769, %v762
      %v952 = vpack.c.b16 %v770, %v763
      %v953 = vpack.c.b16 %v771, %v764
      %v954 = vpack.c.b16 %v772, %v765
      %v955 = vpack.c.b16 %v773, %v766
      %v956 = vpack.c.b16 %v774, %v767
      %v957 = vpack.c.b16 %v775, %v768
      %v958 = vpack.c.b16 %v783, %v776
      %v959 = vpack.c.b16 %v784, %v777
      %v960 = vpack.c.b16 %v785, %v778
      %v961 = vpack.c.b16 %v786, %v779
      %v962 = vpack.c.b16 %v787, %v780
      %v963 = vpack.c.b16 %v788, %v781
      %v964 = vpack.c.b16 %v789, %v782
      %v965 = vpack.c.b16 %v797, %v790
      %v966 = vpack.c.b16 %v798, %v791
      %v967 = vpack.c.b16 %v799, %v792
      %v968 = vpack.c.b16 %v800, %v793
      %v969 = vpack.c.b16 %v801, %v794
      %v970 = vpack.c.b16 %v802, %v795
      %v971 = vpack.c.b16 %v803, %v796
      %v972 = vpack.c.b16 %v811, %v804
      %v973 = vpack.c.b16 %v812, %v805
      %v974 = vpack.c.b16 %v813, %v806
      %v975 = vpack.c.b16 %v814, %v807
      %v976 = vpack.c.b16 %v815, %v808
      %v977 = vpack.c.b16 %v816, %v809
      %v978 = vpack.c.b16 %v817, %v810
      %v979 = vpack.c.b16 %v825, %v818
      %v980 = vpack.c.b16 %v826, %v819
      %v981 = vpack.c.b16 %v827, %v820
      %v982 = vpack.c.b16 %v828, %v821
      %v983 = vpack.c.b16 %v829, %v822
      %v984 = vpack.c.b16 %v830, %v823
      %v985 = vpack.c.b16 %v831, %v824
      %v986 = vpack.c.b16 %v839, %v832
      %v987 = vpack.c.b16 %v840, %v833
      %v988 = vpack.c.b16 %v841, %v834
      %v989 = vpack.c.b16 %v842, %v835
      %v990 = vpack.c.b16 %v843, %v836
      %v991 = vpack.c.b16 %v844, %v837
      %v992 = vpack.c.b16 %v845, %v838
      %v993 = vpack.c.b16 %v853, %v846
      %v994 = vpack.c.b16 %v854, %v847
      %v995 = vpack.c.b16 %v855, %v848
      %v996 = vpack.c.b16 %v856, %v849
      %v997 = vpack.c.b16 %v857, %v850
      %v998 = vpack.c.b16 %v858, %v851
      %v999 = vpack.c.b16 %v859, %v852
      %v1000 = vpack.c.b16 %v867, %v860
      %v1001 = vpack.c.b16 %v868, %v861
      %v1002 = vpack.c.b16 %v869, %v862
      %v1003 = vpack.c.b16 %v870, %v863
      %v1004 = vpack.c.b16 %v871, %v864
      %v1005 = vpack.c.b16 %v872, %v865
      %v1006 = vpack.c.b16 %v873, %v866
      %v1007 = vpack.c.b16 %v881, %v874
      %v1008 = vpack.c.b16 %v882, %v875
      %v1009 = vpack.c.b16 %v883, %v876
      %v1010 = vpack.c.b16 %v884, %v877
      %v1011 = vpack.c.b16 %v885, %v878
      %v1012 = vpack.c.b16 %v886, %v879
      %v1013 = vpack.c.b16 %v887, %v880
      %v1014 = vpack.c.b16 %v895, %v888
      %v1015 = vpack.c.b16 %v896, %v889
      %v1016 = vpack.c.b16 %v897, %v890
      %v1017 = vpack.c.b16 %v898, %v891
      %v1018 = vpack.c.b16 %v899, %v892
      %v1019 = vpack.c.b16 %v900, %v893
      %v1020 = vpack.c.b16 %v901, %v894
      %v1021 = vpack.c.b16 %v909, %v902
      %v1022 = vpack.c.b16 %v910, %v903
      %v1023 = vpack.c.b16 %v911, %v904
      %v1024 = vpack.c.b16 %v912, %v905
      %v1025 = vpack.c.b16 %v913, %v906
      %v1026 = vpack.c.b16 %v914, %v907
      %v1027 = vpack.c.b16 %v915, %v908
      %v1224 = vunpack.c.l.b16 %v464
      %v1225 = vunpack.c.l.b16 %v465
      %v1226 = vunpack.c.l.b16 %v466
      %v1227 = vunpack.c.l.b16 %v467
      %v1228 = vunpack.c.l.b16 %v468
      %v1229 = vunpack.c.l.b16 %v469
      %v1230 = vunpack.c.l.b16 %v470
      %v1231 = vunpack.c.l.b16 %v471
      %v1232 = vunpack.c.l.b16 %v472
      %v1233 = vunpack.c.l.b16 %v473
      %v1234 = vunpack.c.l.b16 %v474
      %v1235 = vunpack.c.l.b16 %v475
      %v1236 = vunpack.c.l.b16 %v476
      %v1237 = vunpack.c.l.b16 %v477
      %v1238 = vunpack.c.l.b16 %v478
      %v1239 = vunpack.c.l.b16 %v479
      %v1240 = vunpack.c.l.b16 %v480
      %v1241 = vunpack.c.l.b16 %v481
      %v1242 = vunpack.c.l.b16 %v482
      %v1243 = vunpack.c.l.b16 %v483
      %v1244 = vunpack.c.l.b16 %v484
      %v1245 = vunpack.c.l.b16 %v485
      %v1246 = vunpack.c.l.b16 %v486
      %v1247 = vunpack.c.l.b16 %v487
      %v1248 = vunpack.c.l.b16 %v488
      %v1249 = vunpack.c.l.b16 %v489
      %v1250 = vunpack.c.l.b16 %v490
      %v1251 = vunpack.c.l.b16 %v491
      %v1252 = vunpack.c.l.b16 %v492
      %v1253 = vunpack.c.l.b16 %v493
      %v1254 = vunpack.c.l.b16 %v494
      %v1255 = vunpack.c.l.b16 %v495
      %v1256 = vunpack.c.l.b16 %v496
      %v1257 = vunpack.c.l.b16 %v497
      %v1258 = vunpack.c.l.b16 %v498
      %v1259 = vunpack.c.l.b16 %v499
      %v1260 = vunpack.c.l.b16 %v500
      %v1261 = vunpack.c.l.b16 %v501
      %v1262 = vunpack.c.l.b16 %v502
      %v1263 = vunpack.c.l.b16 %v503
      %v1264 = vunpack.c.l.b16 %v504
      %v1265 = vunpack.c.l.b16 %v505
      %v1266 = vunpack.c.l.b16 %v506
      %v1267 = vunpack.c.l.b16 %v507
      %v1268 = vunpack.c.l.b16 %v508
      %v1269 = vunpack.c.l.b16 %v509
      %v1270 = vunpack.c.l.b16 %v510
      %v1271 = vunpack.c.l.b16 %v511
      %v1272 = vunpack.c.l.b16 %v512
      %v1273 = vunpack.c.l.b16 %v513
      %v1274 = vunpack.c.l.b16 %v514
      %v1275 = vunpack.c.l.b16 %v515
      %v1276 = vunpack.c.l.b16 %v516
      %v1277 = vunpack.c.l.b16 %v517
      %v1278 = vunpack.c.l.b16 %v518
      %v1279 = vunpack.c.l.b16 %v519
      %v1280 = vunpack.c.l.b16 %v520
      %v1281 = vunpack.c.l.b16 %v521
      %v1282 = vunpack.c.l.b16 %v522
      %v1283 = vunpack.c.l.b16 %v523
      %v1284 = vunpack.c.l.b16 %v524
      %v1285 = vunpack.c.l.b16 %v525
      %v1286 = vunpack.c.l.b16 %v526
      %v1287 = vunpack.c.l.b16 %v527
      %v1288 = vunpack.c.l.b16 %v528
      %v1289 = vunpack.c.l.b16 %v529
      %v1290 = vunpack.c.l.b16 %v530
      %v1291 = vunpack.c.l.b16 %v531
      %v1292 = vunpack.c.l.b16 %v532
      %v1293 = vunpack.c.l.b16 %v533
      %v1294 = vunpack.c.l.b16 %v534
      %v1295 = vunpack.c.l.b16 %v535
      %v1296 = vunpack.c.l.b16 %v536
      %v1297 = vunpack.c.l.b16 %v537
      %v1298 = vunpack.c.l.b16 %v538
      %v1299 = vunpack.c.l.b16 %v539
      %v1300 = vunpack.c.l.b16 %v540
      %v1301 = vunpack.c.l.b16 %v541
      %v1302 = vunpack.c.l.b16 %v542
      %v1303 = vunpack.c.l.b16 %v543
      %v1304 = vunpack.c.l.b16 %v544
      %v1305 = vunpack.c.l.b16 %v545
      %v1306 = vunpack.c.l.b16 %v546
      %v1307 = vunpack.c.l.b16 %v547
      %v1308 = vunpack.c.l.b16 %v548
      %v1309 = vunpack.c.l.b16 %v549
      %v1310 = vunpack.c.l.b16 %v550
      %v1311 = vunpack.c.l.b16 %v551
      %v1312 = vunpack.c.l.b16 %v552
      %v1313 = vunpack.c.l.b16 %v553
      %v1314 = vunpack.c.l.b16 %v554
      %v1315 = vunpack.c.l.b16 %v555
      %v1316 = vunpack.c.l.b16 %v556
      %v1317 = vunpack.c.l.b16 %v557
      %v1318 = vunpack.c.l.b16 %v558
      %v1319 = vunpack.c.l.b16 %v559
      %v1320 = vunpack.c.l.b16 %v560
      %v1321 = vunpack.c.l.b16 %v561
      %v1322 = vunpack.c.l.b16 %v562
      %v1323 = vunpack.c.l.b16 %v563
      %v1324 = vpack.c.b16 %v1225, %v1224
      %v1325 = vpack.c.b16 %v1227, %v1226
      %v1326 = vpack.c.b16 %v1229, %v1228
      %v1327 = vpack.c.b16 %v1231, %v1230
      %v1328 = vpack.c.b16 %v1233, %v1232
      %v1329 = vpack.c.b16 %v1235, %v1234
      %v1330 = vpack.c.b16 %v1237, %v1236
      %v1331 = vpack.c.b16 %v1239, %v1238
      %v1332 = vpack.c.b16 %v1241, %v1240
      %v1333 = vpack.c.b16 %v1243, %v1242
      %v1334 = vpack.c.b16 %v1245, %v1244
      %v1335 = vpack.c.b16 %v1247, %v1246
      %v1336 = vpack.c.b16 %v1249, %v1248
      %v1337 = vpack.c.b16 %v1251, %v1250
      %v1338 = vpack.c.b16 %v1253, %v1252
      %v1339 = vpack.c.b16 %v1255, %v1254
      %v1340 = vpack.c.b16 %v1257, %v1256
      %v1341 = vpack.c.b16 %v1259, %v1258
      %v1342 = vpack.c.b16 %v1261, %v1260
      %v1343 = vpack.c.b16 %v1263, %v1262
      %v1344 = vpack.c.b16 %v1265, %v1264
      %v1345 = vpack.c.b16 %v1267, %v1266
      %v1346 = vpack.c.b16 %v1269, %v1268
      %v1347 = vpack.c.b16 %v1271, %v1270
      %v1348 = vpack.c.b16 %v1273, %v1272
      %v1349 = vpack.c.b16 %v1275, %v1274
      %v1350 = vpack.c.b16 %v1277, %v1276
      %v1351 = vpack.c.b16 %v1279, %v1278
      %v1352 = vpack.c.b16 %v1281, %v1280
      %v1353 = vpack.c.b16 %v1283, %v1282
      %v1354 = vpack.c.b16 %v1285, %v1284
      %v1355 = vpack.c.b16 %v1287, %v1286
      %v1356 = vpack.c.b16 %v1289, %v1288
      %v1357 = vpack.c.b16 %v1291, %v1290
      %v1358 = vpack.c.b16 %v1293, %v1292
      %v1359 = vpack.c.b16 %v1295, %v1294
      %v1360 = vpack.c.b16 %v1297, %v1296
      %v1361 = vpack.c.b16 %v1299, %v1298
      %v1362 = vpack.c.b16 %v1301, %v1300
      %v1363 = vpack.c.b16 %v1303, %v1302
      %v1364 = vpack.c.b16 %v1305, %v1304
      %v1365 = vpack.c.b16 %v1307, %v1306
      %v1366 = vpack.c.b16 %v1309, %v1308
      %v1367 = vpack.c.b16 %v1311, %v1310
      %v1368 = vpack.c.b16 %v1313, %v1312
      %v1369 = vpack.c.b16 %v1315, %v1314
      %v1370 = vpack.c.b16 %v1317, %v1316
      %v1371 = vpack.c.b16 %v1319, %v1318
      %v1372 = vpack.c.b16 %v1321, %v1320
      %v1373 = vpack.c.b16 %v1323, %v1322
      %vm1424 = vcmask 261120
      %v1426 = vsel %vm1424, %v922, 0
      %v1429 = vsel %vm1424, %v929, 0
      %v1432 = vsel %vm1424, %v936, 0
      %v1435 = vsel %vm1424, %v943, 0
      %v1438 = vsel %vm1424, %v950, 0
      %v1441 = vsel %vm1424, %v957, 0
      %v1444 = vsel %vm1424, %v964, 0
      %v1447 = vsel %vm1424, %v971, 0
      %v1450 = vsel %vm1424, %v978, 0
      %v1453 = vsel %vm1424, %v985, 0
      %v1456 = vsel %vm1424, %v992, 0
      %v1459 = vsel %vm1424, %v999, 0
      %v1462 = vsel %vm1424, %v1006, 0
      %v1465 = vsel %vm1424, %v1013, 0
      %v1468 = vsel %vm1424, %v1020, 0
      %v1471 = vsel %vm1424, %v1027, 0
      %1473 = vmatprep.subr.bf16.mxu0 0
      %1474 = vmatpush1.bf16.msra.mxu0 %v1331
      %1475 = vmatprep.subr.bf16.mxu0 0
      %1476 = vmatpush1.bf16.msra.mxu0 %v1330
      %1477 = vmatprep.subr.bf16.mxu0 0
      %1478 = vmatpush1.bf16.msra.mxu0 %v1329
      %1479 = vmatprep.subr.bf16.mxu0 0
      %1480 = vmatpush1.bf16.msra.mxu0 %v1328
      %1481 = vmatprep.subr.bf16.mxu0 0
      %1482 = vmatpush1.bf16.msra.mxu0 %v1327
      %1483 = vmatprep.subr.bf16.mxu0 0
      %1484 = vmatpush1.bf16.msra.mxu0 %v1326
      %1485 = vmatprep.subr.bf16.mxu0 0
      %1486 = vmatpush1.bf16.msra.mxu0 %v1325
      %1487 = vmatprep.subr.bf16.mxu0 0
      %1488 = vmatpush1.bf16.msra.mxu0 %v1324
      %1489 = vmatprep.subr.bf16.mxu0 0
      %1490 = vmatpush2.bf16.msra.mxu0 %v1339
      %1491 = vmatprep.subr.bf16.mxu0 0
      %1492 = vmatpush2.bf16.msra.mxu0 %v1338
      %1493 = vmatprep.subr.bf16.mxu0 0
      %1494 = vmatpush2.bf16.msra.mxu0 %v1337
      %1495 = vmatprep.subr.bf16.mxu0 0
      %1496 = vmatpush2.bf16.msra.mxu0 %v1336
      %1497 = vmatprep.subr.bf16.mxu0 0
      %1498 = vmatpush2.bf16.msra.mxu0 %v1335
      %1499 = vmatprep.subr.bf16.mxu0 0
      %1500 = vmatpush2.bf16.msra.mxu0 %v1334
      %1501 = vmatprep.subr.bf16.mxu0 0
      %1502 = vmatpush2.bf16.msra.mxu0 %v1333
      %1503 = vmatprep.subr.bf16.mxu0 0
      %1504 = vmatpush2.bf16.msra.mxu0 %v1332
      %1505 = vmatprep.mubr.bf16.mxu0 %v917
      %1506 = vmatmul.mubr.bf16.gmra.mxu0 %v916
      %v1507 = vpop.f32.mrf.mxu0
      %v1508 = vadd.f32 0.0, %v1507
      %v1509 = vpop.f32.mrf.mxu0
      %v1510 = vpop.f32.mrf.mxu0
      %v1511 = vadd.f32 0.0, %v1510
      %v1512 = vpop.f32.mrf.mxu0
      %1513 = vmatprep.mubr.bf16.mxu0 %v924
      %1514 = vmatmul.mubr.bf16.gmra.mxu0 %v923
      %v1515 = vpop.f32.mrf.mxu0
      %v1516 = vadd.f32 0.0, %v1515
      %v1517 = vpop.f32.mrf.mxu0
      %v1518 = vpop.f32.mrf.mxu0
      %v1519 = vadd.f32 0.0, %v1518
      %v1520 = vpop.f32.mrf.mxu0
      %1521 = vmatprep.mubr.bf16.mxu0 %v931
      %1522 = vmatmul.mubr.bf16.gmra.mxu0 %v930
      %v1523 = vpop.f32.mrf.mxu0
      %v1524 = vadd.f32 0.0, %v1523
      %v1525 = vpop.f32.mrf.mxu0
      %v1526 = vpop.f32.mrf.mxu0
      %v1527 = vadd.f32 0.0, %v1526
      %v1528 = vpop.f32.mrf.mxu0
      %1529 = vmatprep.mubr.bf16.mxu0 %v938
      %1530 = vmatmul.mubr.bf16.gmra.mxu0 %v937
      %v1531 = vpop.f32.mrf.mxu0
      %v1532 = vadd.f32 0.0, %v1531
      %v1533 = vpop.f32.mrf.mxu0
      %v1534 = vpop.f32.mrf.mxu0
      %v1535 = vadd.f32 0.0, %v1534
      %v1536 = vpop.f32.mrf.mxu0
      %1537 = vmatprep.mubr.bf16.mxu0 %v945
      %1538 = vmatmul.mubr.bf16.gmra.mxu0 %v944
      %v1539 = vpop.f32.mrf.mxu0
      %v1540 = vadd.f32 0.0, %v1539
      %v1541 = vpop.f32.mrf.mxu0
      %v1542 = vpop.f32.mrf.mxu0
      %v1543 = vadd.f32 0.0, %v1542
      %v1544 = vpop.f32.mrf.mxu0
      %1545 = vmatprep.mubr.bf16.mxu0 %v952
      %1546 = vmatmul.mubr.bf16.gmra.mxu0 %v951
      %v1547 = vpop.f32.mrf.mxu0
      %v1548 = vadd.f32 0.0, %v1547
      %v1549 = vpop.f32.mrf.mxu0
      %v1550 = vpop.f32.mrf.mxu0
      %v1551 = vadd.f32 0.0, %v1550
      %v1552 = vpop.f32.mrf.mxu0
      %1553 = vmatprep.mubr.bf16.mxu0 %v959
      %1554 = vmatmul.mubr.bf16.gmra.mxu0 %v958
      %v1555 = vpop.f32.mrf.mxu0
      %v1556 = vadd.f32 0.0, %v1555
      %v1557 = vpop.f32.mrf.mxu0
      %v1558 = vpop.f32.mrf.mxu0
      %v1559 = vadd.f32 0.0, %v1558
      %v1560 = vpop.f32.mrf.mxu0
      %1561 = vmatprep.mubr.bf16.mxu0 %v966
      %1562 = vmatmul.mubr.bf16.gmra.mxu0 %v965
      %v1563 = vpop.f32.mrf.mxu0
      %v1564 = vadd.f32 0.0, %v1563
      %v1565 = vpop.f32.mrf.mxu0
      %v1566 = vpop.f32.mrf.mxu0
      %v1567 = vadd.f32 0.0, %v1566
      %v1568 = vpop.f32.mrf.mxu0
      %1569 = vmatprep.mubr.bf16.mxu0 %v973
      %1570 = vmatmul.mubr.bf16.gmra.mxu0 %v972
      %v1571 = vpop.f32.mrf.mxu0
      %v1572 = vadd.f32 0.0, %v1571
      %v1573 = vpop.f32.mrf.mxu0
      %v1574 = vpop.f32.mrf.mxu0
      %v1575 = vadd.f32 0.0, %v1574
      %v1576 = vpop.f32.mrf.mxu0
      %1577 = vmatprep.mubr.bf16.mxu0 %v980
      %1578 = vmatmul.mubr.bf16.gmra.mxu0 %v979
      %v1579 = vpop.f32.mrf.mxu0
      %v1580 = vadd.f32 0.0, %v1579
      %v1581 = vpop.f32.mrf.mxu0
      %v1582 = vpop.f32.mrf.mxu0
      %v1583 = vadd.f32 0.0, %v1582
      %v1584 = vpop.f32.mrf.mxu0
      %1585 = vmatprep.mubr.bf16.mxu0 %v987
      %1586 = vmatmul.mubr.bf16.gmra.mxu0 %v986
      %v1587 = vpop.f32.mrf.mxu0
      %v1588 = vadd.f32 0.0, %v1587
      %v1589 = vpop.f32.mrf.mxu0
      %v1590 = vpop.f32.mrf.mxu0
      %v1591 = vadd.f32 0.0, %v1590
      %v1592 = vpop.f32.mrf.mxu0
      %1593 = vmatprep.mubr.bf16.mxu0 %v994
      %1594 = vmatmul.mubr.bf16.gmra.mxu0 %v993
      %v1595 = vpop.f32.mrf.mxu0
      %v1596 = vadd.f32 0.0, %v1595
      %v1597 = vpop.f32.mrf.mxu0
      %v1598 = vpop.f32.mrf.mxu0
      %v1599 = vadd.f32 0.0, %v1598
      %v1600 = vpop.f32.mrf.mxu0
      %1601 = vmatprep.mubr.bf16.mxu0 %v1001
      %1602 = vmatmul.mubr.bf16.gmra.mxu0 %v1000
      %v1603 = vpop.f32.mrf.mxu0
      %v1604 = vadd.f32 0.0, %v1603
      %v1605 = vpop.f32.mrf.mxu0
      %v1606 = vpop.f32.mrf.mxu0
      %v1607 = vadd.f32 0.0, %v1606
      %v1608 = vpop.f32.mrf.mxu0
      %1609 = vmatprep.mubr.bf16.mxu0 %v1008
      %1610 = vmatmul.mubr.bf16.gmra.mxu0 %v1007
      %v1611 = vpop.f32.mrf.mxu0
      %v1612 = vadd.f32 0.0, %v1611
      %v1613 = vpop.f32.mrf.mxu0
      %v1614 = vpop.f32.mrf.mxu0
      %v1615 = vadd.f32 0.0, %v1614
      %v1616 = vpop.f32.mrf.mxu0
      %1617 = vmatprep.mubr.bf16.mxu0 %v1015
      %1618 = vmatmul.mubr.bf16.gmra.mxu0 %v1014
      %v1619 = vpop.f32.mrf.mxu0
      %v1620 = vadd.f32 0.0, %v1619
      %v1621 = vpop.f32.mrf.mxu0
      %v1622 = vpop.f32.mrf.mxu0
      %v1623 = vadd.f32 0.0, %v1622
      %v1624 = vpop.f32.mrf.mxu0
      %1625 = vmatprep.mubr.bf16.mxu0 %v1022
      %1626 = vmatmul.mubr.bf16.gmra.mxu0 %v1021
      %v1627 = vpop.f32.mrf.mxu0
      %v1628 = vadd.f32 0.0, %v1627
      %v1629 = vpop.f32.mrf.mxu0
      %v1630 = vpop.f32.mrf.mxu0
      %v1631 = vadd.f32 0.0, %v1630
      %v1632 = vpop.f32.mrf.mxu0
      %1633 = vdwg.mxu0
      %1634 = vmatprep.subr.bf16.mxu0 0
      %1635 = vmatpush1.bf16.msra.mxu0 %v1347
      %1636 = vmatprep.subr.bf16.mxu0 0
      %1637 = vmatpush1.bf16.msra.mxu0 %v1346
      %1638 = vmatprep.subr.bf16.mxu0 0
      %1639 = vmatpush1.bf16.msra.mxu0 %v1345
      %1640 = vmatprep.subr.bf16.mxu0 0
      %1641 = vmatpush1.bf16.msra.mxu0 %v1344
      %1642 = vmatprep.subr.bf16.mxu0 0
      %1643 = vmatpush1.bf16.msra.mxu0 %v1343
      %1644 = vmatprep.subr.bf16.mxu0 0
      %1645 = vmatpush1.bf16.msra.mxu0 %v1342
      %1646 = vmatprep.subr.bf16.mxu0 0
      %1647 = vmatpush1.bf16.msra.mxu0 %v1341
      %1648 = vmatprep.subr.bf16.mxu0 0
      %1649 = vmatpush1.bf16.msra.mxu0 %v1340
      %1650 = vmatprep.subr.bf16.mxu0 0
      %1651 = vmatpush2.bf16.msra.mxu0 %v1355
      %1652 = vmatprep.subr.bf16.mxu0 0
      %1653 = vmatpush2.bf16.msra.mxu0 %v1354
      %1654 = vmatprep.subr.bf16.mxu0 0
      %1655 = vmatpush2.bf16.msra.mxu0 %v1353
      %1656 = vmatprep.subr.bf16.mxu0 0
      %1657 = vmatpush2.bf16.msra.mxu0 %v1352
      %1658 = vmatprep.subr.bf16.mxu0 0
      %1659 = vmatpush2.bf16.msra.mxu0 %v1351
      %1660 = vmatprep.subr.bf16.mxu0 0
      %1661 = vmatpush2.bf16.msra.mxu0 %v1350
      %1662 = vmatprep.subr.bf16.mxu0 0
      %1663 = vmatpush2.bf16.msra.mxu0 %v1349
      %1664 = vmatprep.subr.bf16.mxu0 0
      %1665 = vmatpush2.bf16.msra.mxu0 %v1348
      %1666 = vmatprep.mubr.bf16.mxu0 %v919
      %1667 = vmatmul.mubr.bf16.gmra.mxu0 %v918
      %v1668 = vpop.f32.mrf.mxu0
      %v1669 = vadd.f32 %v1508, %v1668
      %v1670 = vpop.f32.mrf.mxu0
      %v1671 = vpop.f32.mrf.mxu0
      %v1672 = vadd.f32 %v1511, %v1671
      %v1673 = vpop.f32.mrf.mxu0
      %1674 = vmatprep.mubr.bf16.mxu0 %v926
      %1675 = vmatmul.mubr.bf16.gmra.mxu0 %v925
      %v1676 = vpop.f32.mrf.mxu0
      %v1677 = vadd.f32 %v1516, %v1676
      %v1678 = vpop.f32.mrf.mxu0
      %v1679 = vpop.f32.mrf.mxu0
      %v1680 = vadd.f32 %v1519, %v1679
      %v1681 = vpop.f32.mrf.mxu0
      %1682 = vmatprep.mubr.bf16.mxu0 %v933
      %1683 = vmatmul.mubr.bf16.gmra.mxu0 %v932
      %v1684 = vpop.f32.mrf.mxu0
      %v1685 = vadd.f32 %v1524, %v1684
      %v1686 = vpop.f32.mrf.mxu0
      %v1687 = vpop.f32.mrf.mxu0
      %v1688 = vadd.f32 %v1527, %v1687
      %v1689 = vpop.f32.mrf.mxu0
      %1690 = vmatprep.mubr.bf16.mxu0 %v940
      %1691 = vmatmul.mubr.bf16.gmra.mxu0 %v939
      %v1692 = vpop.f32.mrf.mxu0
      %v1693 = vadd.f32 %v1532, %v1692
      %v1694 = vpop.f32.mrf.mxu0
      %v1695 = vpop.f32.mrf.mxu0
      %v1696 = vadd.f32 %v1535, %v1695
      %v1697 = vpop.f32.mrf.mxu0
      %1698 = vmatprep.mubr.bf16.mxu0 %v947
      %1699 = vmatmul.mubr.bf16.gmra.mxu0 %v946
      %v1700 = vpop.f32.mrf.mxu0
      %v1701 = vadd.f32 %v1540, %v1700
      %v1702 = vpop.f32.mrf.mxu0
      %v1703 = vpop.f32.mrf.mxu0
      %v1704 = vadd.f32 %v1543, %v1703
      %v1705 = vpop.f32.mrf.mxu0
      %1706 = vmatprep.mubr.bf16.mxu0 %v954
      %1707 = vmatmul.mubr.bf16.gmra.mxu0 %v953
      %v1708 = vpop.f32.mrf.mxu0
      %v1709 = vadd.f32 %v1548, %v1708
      %v1710 = vpop.f32.mrf.mxu0
      %v1711 = vpop.f32.mrf.mxu0
      %v1712 = vadd.f32 %v1551, %v1711
      %v1713 = vpop.f32.mrf.mxu0
      %1714 = vmatprep.mubr.bf16.mxu0 %v961
      %1715 = vmatmul.mubr.bf16.gmra.mxu0 %v960
      %v1716 = vpop.f32.mrf.mxu0
      %v1717 = vadd.f32 %v1556, %v1716
      %v1718 = vpop.f32.mrf.mxu0
      %v1719 = vpop.f32.mrf.mxu0
      %v1720 = vadd.f32 %v1559, %v1719
      %v1721 = vpop.f32.mrf.mxu0
      %1722 = vmatprep.mubr.bf16.mxu0 %v968
      %1723 = vmatmul.mubr.bf16.gmra.mxu0 %v967
      %v1724 = vpop.f32.mrf.mxu0
      %v1725 = vadd.f32 %v1564, %v1724
      %v1726 = vpop.f32.mrf.mxu0
      %v1727 = vpop.f32.mrf.mxu0
      %v1728 = vadd.f32 %v1567, %v1727
      %v1729 = vpop.f32.mrf.mxu0
      %1730 = vmatprep.mubr.bf16.mxu0 %v975
      %1731 = vmatmul.mubr.bf16.gmra.mxu0 %v974
      %v1732 = vpop.f32.mrf.mxu0
      %v1733 = vadd.f32 %v1572, %v1732
      %v1734 = vpop.f32.mrf.mxu0
      %v1735 = vpop.f32.mrf.mxu0
      %v1736 = vadd.f32 %v1575, %v1735
      %v1737 = vpop.f32.mrf.mxu0
      %1738 = vmatprep.mubr.bf16.mxu0 %v982
      %1739 = vmatmul.mubr.bf16.gmra.mxu0 %v981
      %v1740 = vpop.f32.mrf.mxu0
      %v1741 = vadd.f32 %v1580, %v1740
      %v1742 = vpop.f32.mrf.mxu0
      %v1743 = vpop.f32.mrf.mxu0
      %v1744 = vadd.f32 %v1583, %v1743
      %v1745 = vpop.f32.mrf.mxu0
      %1746 = vmatprep.mubr.bf16.mxu0 %v989
      %1747 = vmatmul.mubr.bf16.gmra.mxu0 %v988
      %v1748 = vpop.f32.mrf.mxu0
      %v1749 = vadd.f32 %v1588, %v1748
      %v1750 = vpop.f32.mrf.mxu0
      %v1751 = vpop.f32.mrf.mxu0
      %v1752 = vadd.f32 %v1591, %v1751
      %v1753 = vpop.f32.mrf.mxu0
      %1754 = vmatprep.mubr.bf16.mxu0 %v996
      %1755 = vmatmul.mubr.bf16.gmra.mxu0 %v995
      %v1756 = vpop.f32.mrf.mxu0
      %v1757 = vadd.f32 %v1596, %v1756
      %v1758 = vpop.f32.mrf.mxu0
      %v1759 = vpop.f32.mrf.mxu0
      %v1760 = vadd.f32 %v1599, %v1759
      %v1761 = vpop.f32.mrf.mxu0
      %1762 = vmatprep.mubr.bf16.mxu0 %v1003
      %1763 = vmatmul.mubr.bf16.gmra.mxu0 %v1002
      %v1764 = vpop.f32.mrf.mxu0
      %v1765 = vadd.f32 %v1604, %v1764
      %v1766 = vpop.f32.mrf.mxu0
      %v1767 = vpop.f32.mrf.mxu0
      %v1768 = vadd.f32 %v1607, %v1767
      %v1769 = vpop.f32.mrf.mxu0
      %1770 = vmatprep.mubr.bf16.mxu0 %v1010
      %1771 = vmatmul.mubr.bf16.gmra.mxu0 %v1009
      %v1772 = vpop.f32.mrf.mxu0
      %v1773 = vadd.f32 %v1612, %v1772
      %v1774 = vpop.f32.mrf.mxu0
      %v1775 = vpop.f32.mrf.mxu0
      %v1776 = vadd.f32 %v1615, %v1775
      %v1777 = vpop.f32.mrf.mxu0
      %1778 = vmatprep.mubr.bf16.mxu0 %v1017
      %1779 = vmatmul.mubr.bf16.gmra.mxu0 %v1016
      %v1780 = vpop.f32.mrf.mxu0
      %v1781 = vadd.f32 %v1620, %v1780
      %v1782 = vpop.f32.mrf.mxu0
      %v1783 = vpop.f32.mrf.mxu0
      %v1784 = vadd.f32 %v1623, %v1783
      %v1785 = vpop.f32.mrf.mxu0
      %1786 = vmatprep.mubr.bf16.mxu0 %v1024
      %1787 = vmatmul.mubr.bf16.gmra.mxu0 %v1023
      %v1788 = vpop.f32.mrf.mxu0
      %v1789 = vadd.f32 %v1628, %v1788
      %v1790 = vpop.f32.mrf.mxu0
      %v1791 = vpop.f32.mrf.mxu0
      %v1792 = vadd.f32 %v1631, %v1791
      %v1793 = vpop.f32.mrf.mxu0
      %1794 = vdwg.mxu0
      %1795 = vmatprep.subr.bf16.mxu0 0
      %1796 = vmatpush1.bf16.msra.mxu0 %v1363
      %1797 = vmatprep.subr.bf16.mxu0 0
      %1798 = vmatpush1.bf16.msra.mxu0 %v1362
      %1799 = vmatprep.subr.bf16.mxu0 0
      %1800 = vmatpush1.bf16.msra.mxu0 %v1361
      %1801 = vmatprep.subr.bf16.mxu0 0
      %1802 = vmatpush1.bf16.msra.mxu0 %v1360
      %1803 = vmatprep.subr.bf16.mxu0 0
      %1804 = vmatpush1.bf16.msra.mxu0 %v1359
      %1805 = vmatprep.subr.bf16.mxu0 0
      %1806 = vmatpush1.bf16.msra.mxu0 %v1358
      %1807 = vmatprep.subr.bf16.mxu0 0
      %1808 = vmatpush1.bf16.msra.mxu0 %v1357
      %1809 = vmatprep.subr.bf16.mxu0 0
      %1810 = vmatpush1.bf16.msra.mxu0 %v1356
      %1811 = vmatprep.subr.bf16.mxu0 0
      %1812 = vmatpush2.bf16.msra.mxu0 %v1371
      %1813 = vmatprep.subr.bf16.mxu0 0
      %1814 = vmatpush2.bf16.msra.mxu0 %v1370
      %1815 = vmatprep.subr.bf16.mxu0 0
      %1816 = vmatpush2.bf16.msra.mxu0 %v1369
      %1817 = vmatprep.subr.bf16.mxu0 0
      %1818 = vmatpush2.bf16.msra.mxu0 %v1368
      %1819 = vmatprep.subr.bf16.mxu0 0
      %1820 = vmatpush2.bf16.msra.mxu0 %v1367
      %1821 = vmatprep.subr.bf16.mxu0 0
      %1822 = vmatpush2.bf16.msra.mxu0 %v1366
      %1823 = vmatprep.subr.bf16.mxu0 0
      %1824 = vmatpush2.bf16.msra.mxu0 %v1365
      %1825 = vmatprep.subr.bf16.mxu0 0
      %1826 = vmatpush2.bf16.msra.mxu0 %v1364
      %1827 = vmatprep.mubr.bf16.mxu0 %v921
      %1828 = vmatmul.mubr.bf16.gmra.mxu0 %v920
      %v1829 = vpop.f32.mrf.mxu0
      %v1830 = vadd.f32 %v1669, %v1829
      %v1831 = vpop.f32.mrf.mxu0
      %v1832 = vpop.f32.mrf.mxu0
      %v1833 = vadd.f32 %v1672, %v1832
      %v1834 = vpop.f32.mrf.mxu0
      %1835 = vmatprep.mubr.bf16.mxu0 %v928
      %1836 = vmatmul.mubr.bf16.gmra.mxu0 %v927
      %v1837 = vpop.f32.mrf.mxu0
      %v1838 = vadd.f32 %v1677, %v1837
      %v1839 = vpop.f32.mrf.mxu0
      %v1840 = vpop.f32.mrf.mxu0
      %v1841 = vadd.f32 %v1680, %v1840
      %v1842 = vpop.f32.mrf.mxu0
      %1843 = vmatprep.mubr.bf16.mxu0 %v935
      %1844 = vmatmul.mubr.bf16.gmra.mxu0 %v934
      %v1845 = vpop.f32.mrf.mxu0
      %v1846 = vadd.f32 %v1685, %v1845
      %v1847 = vpop.f32.mrf.mxu0
      %v1848 = vpop.f32.mrf.mxu0
      %v1849 = vadd.f32 %v1688, %v1848
      %v1850 = vpop.f32.mrf.mxu0
      %1851 = vmatprep.mubr.bf16.mxu0 %v942
      %1852 = vmatmul.mubr.bf16.gmra.mxu0 %v941
      %v1853 = vpop.f32.mrf.mxu0
      %v1854 = vadd.f32 %v1693, %v1853
      %v1855 = vpop.f32.mrf.mxu0
      %v1856 = vpop.f32.mrf.mxu0
      %v1857 = vadd.f32 %v1696, %v1856
      %v1858 = vpop.f32.mrf.mxu0
      %1859 = vmatprep.mubr.bf16.mxu0 %v949
      %1860 = vmatmul.mubr.bf16.gmra.mxu0 %v948
      %v1861 = vpop.f32.mrf.mxu0
      %v1862 = vadd.f32 %v1701, %v1861
      %v1863 = vpop.f32.mrf.mxu0
      %v1864 = vpop.f32.mrf.mxu0
      %v1865 = vadd.f32 %v1704, %v1864
      %v1866 = vpop.f32.mrf.mxu0
      %1867 = vmatprep.mubr.bf16.mxu0 %v956
      %1868 = vmatmul.mubr.bf16.gmra.mxu0 %v955
      %v1869 = vpop.f32.mrf.mxu0
      %v1870 = vadd.f32 %v1709, %v1869
      %v1871 = vpop.f32.mrf.mxu0
      %v1872 = vpop.f32.mrf.mxu0
      %v1873 = vadd.f32 %v1712, %v1872
      %v1874 = vpop.f32.mrf.mxu0
      %1875 = vmatprep.mubr.bf16.mxu0 %v963
      %1876 = vmatmul.mubr.bf16.gmra.mxu0 %v962
      %v1877 = vpop.f32.mrf.mxu0
      %v1878 = vadd.f32 %v1717, %v1877
      %v1879 = vpop.f32.mrf.mxu0
      %v1880 = vpop.f32.mrf.mxu0
      %v1881 = vadd.f32 %v1720, %v1880
      %v1882 = vpop.f32.mrf.mxu0
      %1883 = vmatprep.mubr.bf16.mxu0 %v970
      %1884 = vmatmul.mubr.bf16.gmra.mxu0 %v969
      %v1885 = vpop.f32.mrf.mxu0
      %v1886 = vadd.f32 %v1725, %v1885
      %v1887 = vpop.f32.mrf.mxu0
      %v1888 = vpop.f32.mrf.mxu0
      %v1889 = vadd.f32 %v1728, %v1888
      %v1890 = vpop.f32.mrf.mxu0
      %1891 = vmatprep.mubr.bf16.mxu0 %v977
      %1892 = vmatmul.mubr.bf16.gmra.mxu0 %v976
      %v1893 = vpop.f32.mrf.mxu0
      %v1894 = vadd.f32 %v1733, %v1893
      %v1895 = vpop.f32.mrf.mxu0
      %v1896 = vpop.f32.mrf.mxu0
      %v1897 = vadd.f32 %v1736, %v1896
      %v1898 = vpop.f32.mrf.mxu0
      %1899 = vmatprep.mubr.bf16.mxu0 %v984
      %1900 = vmatmul.mubr.bf16.gmra.mxu0 %v983
      %v1901 = vpop.f32.mrf.mxu0
      %v1902 = vadd.f32 %v1741, %v1901
      %v1903 = vpop.f32.mrf.mxu0
      %v1904 = vpop.f32.mrf.mxu0
      %v1905 = vadd.f32 %v1744, %v1904
      %v1906 = vpop.f32.mrf.mxu0
      %1907 = vmatprep.mubr.bf16.mxu0 %v991
      %1908 = vmatmul.mubr.bf16.gmra.mxu0 %v990
      %v1909 = vpop.f32.mrf.mxu0
      %v1910 = vadd.f32 %v1749, %v1909
      %v1911 = vpop.f32.mrf.mxu0
      %v1912 = vpop.f32.mrf.mxu0
      %v1913 = vadd.f32 %v1752, %v1912
      %v1914 = vpop.f32.mrf.mxu0
      %1915 = vmatprep.mubr.bf16.mxu0 %v998
      %1916 = vmatmul.mubr.bf16.gmra.mxu0 %v997
      %v1917 = vpop.f32.mrf.mxu0
      %v1918 = vadd.f32 %v1757, %v1917
      %v1919 = vpop.f32.mrf.mxu0
      %v1920 = vpop.f32.mrf.mxu0
      %v1921 = vadd.f32 %v1760, %v1920
      %v1922 = vpop.f32.mrf.mxu0
      %1923 = vmatprep.mubr.bf16.mxu0 %v1005
      %1924 = vmatmul.mubr.bf16.gmra.mxu0 %v1004
      %v1925 = vpop.f32.mrf.mxu0
      %v1926 = vadd.f32 %v1765, %v1925
      %v1927 = vpop.f32.mrf.mxu0
      %v1928 = vpop.f32.mrf.mxu0
      %v1929 = vadd.f32 %v1768, %v1928
      %v1930 = vpop.f32.mrf.mxu0
      %1931 = vmatprep.mubr.bf16.mxu0 %v1012
      %1932 = vmatmul.mubr.bf16.gmra.mxu0 %v1011
      %v1933 = vpop.f32.mrf.mxu0
      %v1934 = vadd.f32 %v1773, %v1933
      %v1935 = vpop.f32.mrf.mxu0
      %v1936 = vpop.f32.mrf.mxu0
      %v1937 = vadd.f32 %v1776, %v1936
      %v1938 = vpop.f32.mrf.mxu0
      %1939 = vmatprep.mubr.bf16.mxu0 %v1019
      %1940 = vmatmul.mubr.bf16.gmra.mxu0 %v1018
      %v1941 = vpop.f32.mrf.mxu0
      %v1942 = vadd.f32 %v1781, %v1941
      %v1943 = vpop.f32.mrf.mxu0
      %v1944 = vpop.f32.mrf.mxu0
      %v1945 = vadd.f32 %v1784, %v1944
      %v1946 = vpop.f32.mrf.mxu0
      %1947 = vmatprep.mubr.bf16.mxu0 %v1026
      %1948 = vmatmul.mubr.bf16.gmra.mxu0 %v1025
      %v1949 = vpop.f32.mrf.mxu0
      %v1950 = vadd.f32 %v1789, %v1949
      %v1951 = vpop.f32.mrf.mxu0
      %v1952 = vpop.f32.mrf.mxu0
      %v1953 = vadd.f32 %v1792, %v1952
      %v1954 = vpop.f32.mrf.mxu0
      %1955 = vdwg.mxu0
      %1956 = vmatprep.subr.bf16.mxu0 0
      %1957 = vmatpush1.bf16.msra.mxu0 0
      %1958 = vmatprep.subr.bf16.mxu0 0
      %1959 = vmatpush1.bf16.msra.mxu0 0
      %1960 = vmatprep.subr.bf16.mxu0 0
      %1961 = vmatpush1.bf16.msra.mxu0 0
      %1962 = vmatprep.subr.bf16.mxu0 0
      %1963 = vmatpush1.bf16.msra.mxu0 0
      %1964 = vmatprep.subr.bf16.mxu0 0
      %1965 = vmatpush1.bf16.msra.mxu0 0
      %1966 = vmatprep.subr.bf16.mxu0 0
      %1967 = vmatpush1.bf16.msra.mxu0 0
      %1968 = vmatprep.subr.bf16.mxu0 0
      %1969 = vmatpush1.bf16.msra.mxu0 %v1373
      %1970 = vmatprep.subr.bf16.mxu0 0
      %1971 = vmatpush1.bf16.msra.mxu0 %v1372
      %1972 = vmatprep.subr.bf16.mxu0 0
      %1973 = vmatpush2.bf16.msra.mxu0 0
      %1974 = vmatprep.subr.bf16.mxu0 0
      %1975 = vmatpush2.bf16.msra.mxu0 0
      %1976 = vmatprep.subr.bf16.mxu0 0
      %1977 = vmatpush2.bf16.msra.mxu0 0
      %1978 = vmatprep.subr.bf16.mxu0 0
      %1979 = vmatpush2.bf16.msra.mxu0 0
      %1980 = vmatprep.subr.bf16.mxu0 0
      %1981 = vmatpush2.bf16.msra.mxu0 0
      %1982 = vmatprep.subr.bf16.mxu0 0
      %1983 = vmatpush2.bf16.msra.mxu0 0
      %1984 = vmatprep.subr.bf16.mxu0 0
      %1985 = vmatpush2.bf16.msra.mxu0 0
      %1986 = vmatprep.subr.bf16.mxu0 0
      %1987 = vmatpush2.bf16.msra.mxu0 0
      %1988 = vmatprep.mubr.bf16.mxu0 0
      %1989 = vmatmul.mubr.bf16.gmra.mxu0 %v1426
      %v1990 = vpop.f32.mrf.mxu0
      %v1991 = vadd.f32 %v1830, %v1990
      %v1992 = vpop.f32.mrf.mxu0
      %v1993 = vpop.f32.mrf.mxu0
      %v1994 = vadd.f32 %v1833, %v1993
      %v1995 = vpop.f32.mrf.mxu0
      %1996 = vmatprep.mubr.bf16.mxu0 0
      %1997 = vmatmul.mubr.bf16.gmra.mxu0 %v1429
      %v1998 = vpop.f32.mrf.mxu0
      %v1999 = vadd.f32 %v1838, %v1998
      %v2000 = vpop.f32.mrf.mxu0
      %v2001 = vpop.f32.mrf.mxu0
      %v2002 = vadd.f32 %v1841, %v2001
      %v2003 = vpop.f32.mrf.mxu0
      %2004 = vmatprep.mubr.bf16.mxu0 0
      %2005 = vmatmul.mubr.bf16.gmra.mxu0 %v1432
      %v2006 = vpop.f32.mrf.mxu0
      %v2007 = vadd.f32 %v1846, %v2006
      %v2008 = vpop.f32.mrf.mxu0
      %v2009 = vpop.f32.mrf.mxu0
      %v2010 = vadd.f32 %v1849, %v2009
      %v2011 = vpop.f32.mrf.mxu0
      %2012 = vmatprep.mubr.bf16.mxu0 0
      %2013 = vmatmul.mubr.bf16.gmra.mxu0 %v1435
      %v2014 = vpop.f32.mrf.mxu0
      %v2015 = vadd.f32 %v1854, %v2014
      %v2016 = vpop.f32.mrf.mxu0
      %v2017 = vpop.f32.mrf.mxu0
      %v2018 = vadd.f32 %v1857, %v2017
      %v2019 = vpop.f32.mrf.mxu0
      %2020 = vmatprep.mubr.bf16.mxu0 0
      %2021 = vmatmul.mubr.bf16.gmra.mxu0 %v1438
      %v2022 = vpop.f32.mrf.mxu0
      %v2023 = vadd.f32 %v1862, %v2022
      %v2024 = vpop.f32.mrf.mxu0
      %v2025 = vpop.f32.mrf.mxu0
      %v2026 = vadd.f32 %v1865, %v2025
      %v2027 = vpop.f32.mrf.mxu0
      %2028 = vmatprep.mubr.bf16.mxu0 0
      %2029 = vmatmul.mubr.bf16.gmra.mxu0 %v1441
      %v2030 = vpop.f32.mrf.mxu0
      %v2031 = vadd.f32 %v1870, %v2030
      %v2032 = vpop.f32.mrf.mxu0
      %v2033 = vpop.f32.mrf.mxu0
      %v2034 = vadd.f32 %v1873, %v2033
      %v2035 = vpop.f32.mrf.mxu0
      %2036 = vmatprep.mubr.bf16.mxu0 0
      %2037 = vmatmul.mubr.bf16.gmra.mxu0 %v1444
      %v2038 = vpop.f32.mrf.mxu0
      %v2039 = vadd.f32 %v1878, %v2038
      %v2040 = vpop.f32.mrf.mxu0
      %v2041 = vpop.f32.mrf.mxu0
      %v2042 = vadd.f32 %v1881, %v2041
      %v2043 = vpop.f32.mrf.mxu0
      %2044 = vmatprep.mubr.bf16.mxu0 0
      %2045 = vmatmul.mubr.bf16.gmra.mxu0 %v1447
      %v2046 = vpop.f32.mrf.mxu0
      %v2047 = vadd.f32 %v1886, %v2046
      %v2048 = vpop.f32.mrf.mxu0
      %v2049 = vpop.f32.mrf.mxu0
      %v2050 = vadd.f32 %v1889, %v2049
      %v2051 = vpop.f32.mrf.mxu0
      %2052 = vmatprep.mubr.bf16.mxu0 0
      %2053 = vmatmul.mubr.bf16.gmra.mxu0 %v1450
      %v2054 = vpop.f32.mrf.mxu0
      %v2055 = vadd.f32 %v1894, %v2054
      %v2056 = vpop.f32.mrf.mxu0
      %v2057 = vpop.f32.mrf.mxu0
      %v2058 = vadd.f32 %v1897, %v2057
      %v2059 = vpop.f32.mrf.mxu0
      %2060 = vmatprep.mubr.bf16.mxu0 0
      %2061 = vmatmul.mubr.bf16.gmra.mxu0 %v1453
      %v2062 = vpop.f32.mrf.mxu0
      %v2063 = vadd.f32 %v1902, %v2062
      %v2064 = vpop.f32.mrf.mxu0
      %v2065 = vpop.f32.mrf.mxu0
      %v2066 = vadd.f32 %v1905, %v2065
      %v2067 = vpop.f32.mrf.mxu0
      %2068 = vmatprep.mubr.bf16.mxu0 0
      %2069 = vmatmul.mubr.bf16.gmra.mxu0 %v1456
      %v2070 = vpop.f32.mrf.mxu0
      %v2071 = vadd.f32 %v1910, %v2070
      %v2072 = vpop.f32.mrf.mxu0
      %v2073 = vpop.f32.mrf.mxu0
      %v2074 = vadd.f32 %v1913, %v2073
      %v2075 = vpop.f32.mrf.mxu0
      %2076 = vmatprep.mubr.bf16.mxu0 0
      %2077 = vmatmul.mubr.bf16.gmra.mxu0 %v1459
      %v2078 = vpop.f32.mrf.mxu0
      %v2079 = vadd.f32 %v1918, %v2078
      %v2080 = vpop.f32.mrf.mxu0
      %v2081 = vpop.f32.mrf.mxu0
      %v2082 = vadd.f32 %v1921, %v2081
      %v2083 = vpop.f32.mrf.mxu0
      %2084 = vmatprep.mubr.bf16.mxu0 0
      %2085 = vmatmul.mubr.bf16.gmra.mxu0 %v1462
      %v2086 = vpop.f32.mrf.mxu0
      %v2087 = vadd.f32 %v1926, %v2086
      %v2088 = vpop.f32.mrf.mxu0
      %v2089 = vpop.f32.mrf.mxu0
      %v2090 = vadd.f32 %v1929, %v2089
      %v2091 = vpop.f32.mrf.mxu0
      %2092 = vmatprep.mubr.bf16.mxu0 0
      %2093 = vmatmul.mubr.bf16.gmra.mxu0 %v1465
      %v2094 = vpop.f32.mrf.mxu0
      %v2095 = vadd.f32 %v1934, %v2094
      %v2096 = vpop.f32.mrf.mxu0
      %v2097 = vpop.f32.mrf.mxu0
      %v2098 = vadd.f32 %v1937, %v2097
      %v2099 = vpop.f32.mrf.mxu0
      %2100 = vmatprep.mubr.bf16.mxu0 0
      %2101 = vmatmul.mubr.bf16.gmra.mxu0 %v1468
      %v2102 = vpop.f32.mrf.mxu0
      %v2103 = vadd.f32 %v1942, %v2102
      %v2104 = vpop.f32.mrf.mxu0
      %v2105 = vpop.f32.mrf.mxu0
      %v2106 = vadd.f32 %v1945, %v2105
      %v2107 = vpop.f32.mrf.mxu0
      %2108 = vmatprep.mubr.bf16.mxu0 0
      %2109 = vmatmul.mubr.bf16.gmra.mxu0 %v1471
      %v2110 = vpop.f32.mrf.mxu0
      %v2111 = vadd.f32 %v1950, %v2110
      %v2112 = vpop.f32.mrf.mxu0
      %v2113 = vpop.f32.mrf.mxu0
      %v2114 = vadd.f32 %v1953, %v2113
      %v2115 = vpop.f32.mrf.mxu0
      %2116 = vdwg.mxu0
      %v2117 = vadd.f32 %v304, %v1991
      %v2118 = vadd.f32 %v305, %v1994
      %v2119 = vadd.f32 %v306, %v1999
      %v2120 = vadd.f32 %v307, %v2002
      %v2121 = vadd.f32 %v308, %v2007
      %v2122 = vadd.f32 %v309, %v2010
      %v2123 = vadd.f32 %v310, %v2015
      %v2124 = vadd.f32 %v311, %v2018
      %v2125 = vadd.f32 %v312, %v2023
      %v2126 = vadd.f32 %v313, %v2026
      %v2127 = vadd.f32 %v314, %v2031
      %v2128 = vadd.f32 %v315, %v2034
      %v2129 = vadd.f32 %v316, %v2039
      %v2130 = vadd.f32 %v317, %v2042
      %v2131 = vadd.f32 %v318, %v2047
      %v2132 = vadd.f32 %v319, %v2050
      %v2133 = vadd.f32 %v320, %v2055
      %v2134 = vadd.f32 %v321, %v2058
      %v2135 = vadd.f32 %v322, %v2063
      %v2136 = vadd.f32 %v323, %v2066
      %v2137 = vadd.f32 %v324, %v2071
      %v2138 = vadd.f32 %v325, %v2074
      %v2139 = vadd.f32 %v326, %v2079
      %v2140 = vadd.f32 %v327, %v2082
      %v2141 = vadd.f32 %v328, %v2087
      %v2142 = vadd.f32 %v329, %v2090
      %v2143 = vadd.f32 %v330, %v2095
      %v2144 = vadd.f32 %v331, %v2098
      %v2145 = vadd.f32 %v332, %v2103
      %v2146 = vadd.f32 %v333, %v2106
      %v2147 = vadd.f32 %v334, %v2111
      %v2148 = vadd.f32 %v335, %v2114
      %2149 = vst [vmem:[#allocation2] sm:$0xff] %v2117
      %2150 = vst [vmem:[#allocation2 + $0x8] sm:$0xff] %v2118
      %2151 = vst [vmem:[#allocation2 + $0x10] sm:$0xff] %v2119
      %2152 = vst [vmem:[#allocation2 + $0x18] sm:$0xff] %v2120
      %2153 = vst [vmem:[#allocation2 + $0x20] sm:$0xff] %v2121
      %2154 = vst [vmem:[#allocation2 + $0x28] sm:$0xff] %v2122
      %2155 = vst [vmem:[#allocation2 + $0x30] sm:$0xff] %v2123
      %2156 = vst [vmem:[#allocation2 + $0x38] sm:$0xff] %v2124
      %2157 = vst [vmem:[#allocation2 + $0x40] sm:$0xff] %v2125
      %2158 = vst [vmem:[#allocation2 + $0x48] sm:$0xff] %v2126
      %2159 = vst [vmem:[#allocation2 + $0x50] sm:$0xff] %v2127
      %2160 = vst [vmem:[#allocation2 + $0x58] sm:$0xff] %v2128
      %2161 = vst [vmem:[#allocation2 + $0x60] sm:$0xff] %v2129
      %2162 = vst [vmem:[#allocation2 + $0x68] sm:$0xff] %v2130
      %2163 = vst [vmem:[#allocation2 + $0x70] sm:$0xff] %v2131
      %2164 = vst [vmem:[#allocation2 + $0x78] sm:$0xff] %v2132
      %2165 = vst [vmem:[#allocation2 + $0x80] sm:$0xff] %v2133
      %2166 = vst [vmem:[#allocation2 + $0x88] sm:$0xff] %v2134
      %2167 = vst [vmem:[#allocation2 + $0x90] sm:$0xff] %v2135
      %2168 = vst [vmem:[#allocation2 + $0x98] sm:$0xff] %v2136
      %2169 = vst [vmem:[#allocation2 + $0xa0] sm:$0xff] %v2137
      %2170 = vst [vmem:[#allocation2 + $0xa8] sm:$0xff] %v2138
      %2171 = vst [vmem:[#allocation2 + $0xb0] sm:$0xff] %v2139
      %2172 = vst [vmem:[#allocation2 + $0xb8] sm:$0xff] %v2140
      %2173 = vst [vmem:[#allocation2 + $0xc0] sm:$0xff] %v2141
      %2174 = vst [vmem:[#allocation2 + $0xc8] sm:$0xff] %v2142
      %2175 = vst [vmem:[#allocation2 + $0xd0] sm:$0xff] %v2143
      %2176 = vst [vmem:[#allocation2 + $0xd8] sm:$0xff] %v2144
      %2177 = vst [vmem:[#allocation2 + $0xe0] sm:$0xff] %v2145
      %2178 = vst [vmem:[#allocation2 + $0xe8] sm:$0xff] %v2146
      %2179 = vst [vmem:[#allocation2 + $0xf0] sm:$0xff] %v2147
      %2180 = vst [vmem:[#allocation2 + $0xf8] sm:$0xff] %v2148
      // Predicated region
      $region37: #{simplenet_forward.7} parent=31 // pred_check
        %p2181 = pneg %p268
      $region38: #{simplenet_forward.7} parent=31 // pred_check_branch
        %2183 = sbr.rel (%p2181) target = $region40
      $region39: #{simplenet_forward.7} parent=31 // pred_region
        %v2184 = vld [vmem:[#allocation2] sm:$0xff]
        %v2185 = vld [vmem:[#allocation2 + $0x8] sm:$0xff]
        %v2186 = vld [vmem:[#allocation2 + $0x10] sm:$0xff]
        %v2187 = vld [vmem:[#allocation2 + $0x18] sm:$0xff]
        %v2188 = vld [vmem:[#allocation2 + $0x20] sm:$0xff]
        %v2189 = vld [vmem:[#allocation2 + $0x28] sm:$0xff]
        %v2190 = vld [vmem:[#allocation2 + $0x30] sm:$0xff]
        %v2191 = vld [vmem:[#allocation2 + $0x38] sm:$0xff]
        %v2192 = vld [vmem:[#allocation2 + $0x40] sm:$0xff]
        %v2193 = vld [vmem:[#allocation2 + $0x48] sm:$0xff]
        %v2194 = vld [vmem:[#allocation2 + $0x50] sm:$0xff]
        %v2195 = vld [vmem:[#allocation2 + $0x58] sm:$0xff]
        %v2196 = vld [vmem:[#allocation2 + $0x60] sm:$0xff]
        %v2197 = vld [vmem:[#allocation2 + $0x68] sm:$0xff]
        %v2198 = vld [vmem:[#allocation2 + $0x70] sm:$0xff]
        %v2199 = vld [vmem:[#allocation2 + $0x78] sm:$0xff]
        %v2200 = vld [vmem:[#allocation2 + $0x80] sm:$0xff]
        %v2201 = vld [vmem:[#allocation2 + $0x88] sm:$0xff]
        %v2202 = vld [vmem:[#allocation2 + $0x90] sm:$0xff]
        %v2203 = vld [vmem:[#allocation2 + $0x98] sm:$0xff]
        %v2204 = vld [vmem:[#allocation2 + $0xa0] sm:$0xff]
        %v2205 = vld [vmem:[#allocation2 + $0xa8] sm:$0xff]
        %v2206 = vld [vmem:[#allocation2 + $0xb0] sm:$0xff]
        %v2207 = vld [vmem:[#allocation2 + $0xb8] sm:$0xff]
        %v2208 = vld [vmem:[#allocation2 + $0xc0] sm:$0xff]
        %v2209 = vld [vmem:[#allocation2 + $0xc8] sm:$0xff]
        %v2210 = vld [vmem:[#allocation2 + $0xd0] sm:$0xff]
        %v2211 = vld [vmem:[#allocation2 + $0xd8] sm:$0xff]
        %v2212 = vld [vmem:[#allocation2 + $0xe0] sm:$0xff]
        %v2213 = vld [vmem:[#allocation2 + $0xe8] sm:$0xff]
        %v2214 = vld [vmem:[#allocation2 + $0xf0] sm:$0xff]
        %v2215 = vld [vmem:[#allocation2 + $0xf8] sm:$0xff]
        %v2216 = vld [vmem:[%s257] sm:$0x1]
        %v2218 = vlaneseq
        %v2219 = vshrl.u32 %v2218, 7
        %v2220 = vsub.s32 0, %v2219
        %v2221 = vrot.slane %v2216, %v2220
        %v2223 = vadd.f32 %v2184, %v2221
        %v2224 = vadd.f32 %v2185, %v2221
        %v2225 = vadd.f32 %v2186, %v2221
        %v2226 = vadd.f32 %v2187, %v2221
        %v2227 = vadd.f32 %v2188, %v2221
        %v2228 = vadd.f32 %v2189, %v2221
        %v2229 = vadd.f32 %v2190, %v2221
        %v2230 = vadd.f32 %v2191, %v2221
        %v2231 = vadd.f32 %v2192, %v2221
        %v2232 = vadd.f32 %v2193, %v2221
        %v2233 = vadd.f32 %v2194, %v2221
        %v2234 = vadd.f32 %v2195, %v2221
        %v2235 = vadd.f32 %v2196, %v2221
        %v2236 = vadd.f32 %v2197, %v2221
        %v2237 = vadd.f32 %v2198, %v2221
        %v2238 = vadd.f32 %v2199, %v2221
        %v2239 = vadd.f32 %v2200, %v2221
        %v2240 = vadd.f32 %v2201, %v2221
        %v2241 = vadd.f32 %v2202, %v2221
        %v2242 = vadd.f32 %v2203, %v2221
        %v2243 = vadd.f32 %v2204, %v2221
        %v2244 = vadd.f32 %v2205, %v2221
        %v2245 = vadd.f32 %v2206, %v2221
        %v2246 = vadd.f32 %v2207, %v2221
        %v2247 = vadd.f32 %v2208, %v2221
        %v2248 = vadd.f32 %v2209, %v2221
        %v2249 = vadd.f32 %v2210, %v2221
        %v2250 = vadd.f32 %v2211, %v2221
        %v2251 = vadd.f32 %v2212, %v2221
        %v2252 = vadd.f32 %v2213, %v2221
        %v2253 = vadd.f32 %v2214, %v2221
        %v2254 = vadd.f32 %v2215, %v2221
        %v2255 = vmax.f32 %v2223, 0.0
        %v2256 = vmax.f32 %v2224, 0.0
        %v2257 = vmax.f32 %v2225, 0.0
        %v2258 = vmax.f32 %v2226, 0.0
        %v2259 = vmax.f32 %v2227, 0.0
        %v2260 = vmax.f32 %v2228, 0.0
        %v2261 = vmax.f32 %v2229, 0.0
        %v2262 = vmax.f32 %v2230, 0.0
        %v2263 = vmax.f32 %v2231, 0.0
        %v2264 = vmax.f32 %v2232, 0.0
        %v2265 = vmax.f32 %v2233, 0.0
        %v2266 = vmax.f32 %v2234, 0.0
        %v2267 = vmax.f32 %v2235, 0.0
        %v2268 = vmax.f32 %v2236, 0.0
        %v2269 = vmax.f32 %v2237, 0.0
        %v2270 = vmax.f32 %v2238, 0.0
        %v2271 = vmax.f32 %v2239, 0.0
        %v2272 = vmax.f32 %v2240, 0.0
        %v2273 = vmax.f32 %v2241, 0.0
        %v2274 = vmax.f32 %v2242, 0.0
        %v2275 = vmax.f32 %v2243, 0.0
        %v2276 = vmax.f32 %v2244, 0.0
        %v2277 = vmax.f32 %v2245, 0.0
        %v2278 = vmax.f32 %v2246, 0.0
        %v2279 = vmax.f32 %v2247, 0.0
        %v2280 = vmax.f32 %v2248, 0.0
        %v2281 = vmax.f32 %v2249, 0.0
        %v2282 = vmax.f32 %v2250, 0.0
        %v2283 = vmax.f32 %v2251, 0.0
        %v2284 = vmax.f32 %v2252, 0.0
        %v2285 = vmax.f32 %v2253, 0.0
        %v2286 = vmax.f32 %v2254, 0.0
        %v2287 = vand.u32 2147483647, %v2223
        %v2288 = vand.u32 2147483647, %v2224
        %v2289 = vand.u32 2147483647, %v2225
        %v2290 = vand.u32 2147483647, %v2226
        %v2291 = vand.u32 2147483647, %v2227
        %v2292 = vand.u32 2147483647, %v2228
        %v2293 = vand.u32 2147483647, %v2229
        %v2294 = vand.u32 2147483647, %v2230
        %v2295 = vand.u32 2147483647, %v2231
        %v2296 = vand.u32 2147483647, %v2232
        %v2297 = vand.u32 2147483647, %v2233
        %v2298 = vand.u32 2147483647, %v2234
        %v2299 = vand.u32 2147483647, %v2235
        %v2300 = vand.u32 2147483647, %v2236
        %v2301 = vand.u32 2147483647, %v2237
        %v2302 = vand.u32 2147483647, %v2238
        %v2303 = vand.u32 2147483647, %v2239
        %v2304 = vand.u32 2147483647, %v2240
        %v2305 = vand.u32 2147483647, %v2241
        %v2306 = vand.u32 2147483647, %v2242
        %v2307 = vand.u32 2147483647, %v2243
        %v2308 = vand.u32 2147483647, %v2244
        %v2309 = vand.u32 2147483647, %v2245
        %v2310 = vand.u32 2147483647, %v2246
        %v2311 = vand.u32 2147483647, %v2247
        %v2312 = vand.u32 2147483647, %v2248
        %v2313 = vand.u32 2147483647, %v2249
        %v2314 = vand.u32 2147483647, %v2250
        %v2315 = vand.u32 2147483647, %v2251
        %v2316 = vand.u32 2147483647, %v2252
        %v2317 = vand.u32 2147483647, %v2253
        %v2318 = vand.u32 2147483647, %v2254
        %v2319 = vsub.f32 0.0, %v2287
        %v2320 = vsub.f32 0.0, %v2288
        %v2321 = vsub.f32 0.0, %v2289
        %v2322 = vsub.f32 0.0, %v2290
        %v2323 = vsub.f32 0.0, %v2291
        %v2324 = vsub.f32 0.0, %v2292
        %v2325 = vsub.f32 0.0, %v2293
        %v2326 = vsub.f32 0.0, %v2294
        %v2327 = vsub.f32 0.0, %v2295
        %v2328 = vsub.f32 0.0, %v2296
        %v2329 = vsub.f32 0.0, %v2297
        %v2330 = vsub.f32 0.0, %v2298
        %v2331 = vsub.f32 0.0, %v2299
        %v2332 = vsub.f32 0.0, %v2300
        %v2333 = vsub.f32 0.0, %v2301
        %v2334 = vsub.f32 0.0, %v2302
        %v2335 = vsub.f32 0.0, %v2303
        %v2336 = vsub.f32 0.0, %v2304
        %v2337 = vsub.f32 0.0, %v2305
        %v2338 = vsub.f32 0.0, %v2306
        %v2339 = vsub.f32 0.0, %v2307
        %v2340 = vsub.f32 0.0, %v2308
        %v2341 = vsub.f32 0.0, %v2309
        %v2342 = vsub.f32 0.0, %v2310
        %v2343 = vsub.f32 0.0, %v2311
        %v2344 = vsub.f32 0.0, %v2312
        %v2345 = vsub.f32 0.0, %v2313
        %v2346 = vsub.f32 0.0, %v2314
        %v2347 = vsub.f32 0.0, %v2315
        %v2348 = vsub.f32 0.0, %v2316
        %v2349 = vsub.f32 0.0, %v2317
        %v2350 = vsub.f32 0.0, %v2318
        %v2351 = vmul.f32 %v2319, 1.442695
        %v2352 = vpow.pop %v2351
        %v2353 = vmul.f32 %v2320, 1.442695
        %v2354 = vpow.pop %v2353
        %v2355 = vmul.f32 %v2321, 1.442695
        %v2356 = vpow.pop %v2355
        %v2357 = vmul.f32 %v2322, 1.442695
        %v2358 = vpow.pop %v2357
        %v2359 = vmul.f32 %v2323, 1.442695
        %v2360 = vpow.pop %v2359
        %v2361 = vmul.f32 %v2324, 1.442695
        %v2362 = vpow.pop %v2361
        %v2363 = vmul.f32 %v2325, 1.442695
        %v2364 = vpow.pop %v2363
        %v2365 = vmul.f32 %v2326, 1.442695
        %v2366 = vpow.pop %v2365
        %v2367 = vmul.f32 %v2327, 1.442695
        %v2368 = vpow.pop %v2367
        %v2369 = vmul.f32 %v2328, 1.442695
        %v2370 = vpow.pop %v2369
        %v2371 = vmul.f32 %v2329, 1.442695
        %v2372 = vpow.pop %v2371
        %v2373 = vmul.f32 %v2330, 1.442695
        %v2374 = vpow.pop %v2373
        %v2375 = vmul.f32 %v2331, 1.442695
        %v2376 = vpow.pop %v2375
        %v2377 = vmul.f32 %v2332, 1.442695
        %v2378 = vpow.pop %v2377
        %v2379 = vmul.f32 %v2333, 1.442695
        %v2380 = vpow.pop %v2379
        %v2381 = vmul.f32 %v2334, 1.442695
        %v2382 = vpow.pop %v2381
        %v2383 = vmul.f32 %v2335, 1.442695
        %v2384 = vpow.pop %v2383
        %v2385 = vmul.f32 %v2336, 1.442695
        %v2386 = vpow.pop %v2385
        %v2387 = vmul.f32 %v2337, 1.442695
        %v2388 = vpow.pop %v2387
        %v2389 = vmul.f32 %v2338, 1.442695
        %v2390 = vpow.pop %v2389
        %v2391 = vmul.f32 %v2339, 1.442695
        %v2392 = vpow.pop %v2391
        %v2393 = vmul.f32 %v2340, 1.442695
        %v2394 = vpow.pop %v2393
        %v2395 = vmul.f32 %v2341, 1.442695
        %v2396 = vpow.pop %v2395
        %v2397 = vmul.f32 %v2342, 1.442695
        %v2398 = vpow.pop %v2397
        %v2399 = vmul.f32 %v2343, 1.442695
        %v2400 = vpow.pop %v2399
        %v2401 = vmul.f32 %v2344, 1.442695
        %v2402 = vpow.pop %v2401
        %v2403 = vmul.f32 %v2345, 1.442695
        %v2404 = vpow.pop %v2403
        %v2405 = vmul.f32 %v2346, 1.442695
        %v2406 = vpow.pop %v2405
        %v2407 = vmul.f32 %v2347, 1.442695
        %v2408 = vpow.pop %v2407
        %v2409 = vmul.f32 %v2348, 1.442695
        %v2410 = vpow.pop %v2409
        %v2411 = vmul.f32 %v2349, 1.442695
        %v2412 = vpow.pop %v2411
        %v2413 = vmul.f32 %v2350, 1.442695
        %v2414 = vpow.pop %v2413
        %v2415 = vadd.f32 %v2352, 1.0
        %v2416 = vlog2.pop %v2415
        %v2417 = vmul.f32 %v2416, 0.6931472
        %v2418 = vmul.f32 -0.5, %v2352
        %v2419 = vadd.f32 %v2418, 1.0
        %v2420 = vmul.f32 %v2419, %v2352
        %v2421 = vand.u32 2147483647, %v2352
        %vm2422 = vcmp.lt.f32.partialorder %v2421, 0.0004427343
        %v2423 = vsel %vm2422, %v2420, %v2417
        %v2424 = vadd.f32 %v2354, 1.0
        %v2425 = vlog2.pop %v2424
        %v2426 = vmul.f32 %v2425, 0.6931472
        %v2427 = vmul.f32 -0.5, %v2354
        %v2428 = vadd.f32 %v2427, 1.0
        %v2429 = vmul.f32 %v2428, %v2354
        %v2430 = vand.u32 2147483647, %v2354
        %vm2431 = vcmp.lt.f32.partialorder %v2430, 0.0004427343
        %v2432 = vsel %vm2431, %v2429, %v2426
        %v2433 = vadd.f32 %v2356, 1.0
        %v2434 = vlog2.pop %v2433
        %v2435 = vmul.f32 %v2434, 0.6931472
        %v2436 = vmul.f32 -0.5, %v2356
        %v2437 = vadd.f32 %v2436, 1.0
        %v2438 = vmul.f32 %v2437, %v2356
        %v2439 = vand.u32 2147483647, %v2356
        %vm2440 = vcmp.lt.f32.partialorder %v2439, 0.0004427343
        %v2441 = vsel %vm2440, %v2438, %v2435
        %v2442 = vadd.f32 %v2358, 1.0
        %v2443 = vlog2.pop %v2442
        %v2444 = vmul.f32 %v2443, 0.6931472
        %v2445 = vmul.f32 -0.5, %v2358
        %v2446 = vadd.f32 %v2445, 1.0
        %v2447 = vmul.f32 %v2446, %v2358
        %v2448 = vand.u32 2147483647, %v2358
        %vm2449 = vcmp.lt.f32.partialorder %v2448, 0.0004427343
        %v2450 = vsel %vm2449, %v2447, %v2444
        %v2451 = vadd.f32 %v2360, 1.0
        %v2452 = vlog2.pop %v2451
        %v2453 = vmul.f32 %v2452, 0.6931472
        %v2454 = vmul.f32 -0.5, %v2360
        %v2455 = vadd.f32 %v2454, 1.0
        %v2456 = vmul.f32 %v2455, %v2360
        %v2457 = vand.u32 2147483647, %v2360
        %vm2458 = vcmp.lt.f32.partialorder %v2457, 0.0004427343
        %v2459 = vsel %vm2458, %v2456, %v2453
        %v2460 = vadd.f32 %v2362, 1.0
        %v2461 = vlog2.pop %v2460
        %v2462 = vmul.f32 %v2461, 0.6931472
        %v2463 = vmul.f32 -0.5, %v2362
        %v2464 = vadd.f32 %v2463, 1.0
        %v2465 = vmul.f32 %v2464, %v2362
        %v2466 = vand.u32 2147483647, %v2362
        %vm2467 = vcmp.lt.f32.partialorder %v2466, 0.0004427343
        %v2468 = vsel %vm2467, %v2465, %v2462
        %v2469 = vadd.f32 %v2364, 1.0
        %v2470 = vlog2.pop %v2469
        %v2471 = vmul.f32 %v2470, 0.6931472
        %v2472 = vmul.f32 -0.5, %v2364
        %v2473 = vadd.f32 %v2472, 1.0
        %v2474 = vmul.f32 %v2473, %v2364
        %v2475 = vand.u32 2147483647, %v2364
        %vm2476 = vcmp.lt.f32.partialorder %v2475, 0.0004427343
        %v2477 = vsel %vm2476, %v2474, %v2471
        %v2478 = vadd.f32 %v2366, 1.0
        %v2479 = vlog2.pop %v2478
        %v2480 = vmul.f32 %v2479, 0.6931472
        %v2481 = vmul.f32 -0.5, %v2366
        %v2482 = vadd.f32 %v2481, 1.0
        %v2483 = vmul.f32 %v2482, %v2366
        %v2484 = vand.u32 2147483647, %v2366
        %vm2485 = vcmp.lt.f32.partialorder %v2484, 0.0004427343
        %v2486 = vsel %vm2485, %v2483, %v2480
        %v2487 = vadd.f32 %v2368, 1.0
        %v2488 = vlog2.pop %v2487
        %v2489 = vmul.f32 %v2488, 0.6931472
        %v2490 = vmul.f32 -0.5, %v2368
        %v2491 = vadd.f32 %v2490, 1.0
        %v2492 = vmul.f32 %v2491, %v2368
        %v2493 = vand.u32 2147483647, %v2368
        %vm2494 = vcmp.lt.f32.partialorder %v2493, 0.0004427343
        %v2495 = vsel %vm2494, %v2492, %v2489
        %v2496 = vadd.f32 %v2370, 1.0
        %v2497 = vlog2.pop %v2496
        %v2498 = vmul.f32 %v2497, 0.6931472
        %v2499 = vmul.f32 -0.5, %v2370
        %v2500 = vadd.f32 %v2499, 1.0
        %v2501 = vmul.f32 %v2500, %v2370
        %v2502 = vand.u32 2147483647, %v2370
        %vm2503 = vcmp.lt.f32.partialorder %v2502, 0.0004427343
        %v2504 = vsel %vm2503, %v2501, %v2498
        %v2505 = vadd.f32 %v2372, 1.0
        %v2506 = vlog2.pop %v2505
        %v2507 = vmul.f32 %v2506, 0.6931472
        %v2508 = vmul.f32 -0.5, %v2372
        %v2509 = vadd.f32 %v2508, 1.0
        %v2510 = vmul.f32 %v2509, %v2372
        %v2511 = vand.u32 2147483647, %v2372
        %vm2512 = vcmp.lt.f32.partialorder %v2511, 0.0004427343
        %v2513 = vsel %vm2512, %v2510, %v2507
        %v2514 = vadd.f32 %v2374, 1.0
        %v2515 = vlog2.pop %v2514
        %v2516 = vmul.f32 %v2515, 0.6931472
        %v2517 = vmul.f32 -0.5, %v2374
        %v2518 = vadd.f32 %v2517, 1.0
        %v2519 = vmul.f32 %v2518, %v2374
        %v2520 = vand.u32 2147483647, %v2374
        %vm2521 = vcmp.lt.f32.partialorder %v2520, 0.0004427343
        %v2522 = vsel %vm2521, %v2519, %v2516
        %v2523 = vadd.f32 %v2376, 1.0
        %v2524 = vlog2.pop %v2523
        %v2525 = vmul.f32 %v2524, 0.6931472
        %v2526 = vmul.f32 -0.5, %v2376
        %v2527 = vadd.f32 %v2526, 1.0
        %v2528 = vmul.f32 %v2527, %v2376
        %v2529 = vand.u32 2147483647, %v2376
        %vm2530 = vcmp.lt.f32.partialorder %v2529, 0.0004427343
        %v2531 = vsel %vm2530, %v2528, %v2525
        %v2532 = vadd.f32 %v2378, 1.0
        %v2533 = vlog2.pop %v2532
        %v2534 = vmul.f32 %v2533, 0.6931472
        %v2535 = vmul.f32 -0.5, %v2378
        %v2536 = vadd.f32 %v2535, 1.0
        %v2537 = vmul.f32 %v2536, %v2378
        %v2538 = vand.u32 2147483647, %v2378
        %vm2539 = vcmp.lt.f32.partialorder %v2538, 0.0004427343
        %v2540 = vsel %vm2539, %v2537, %v2534
        %v2541 = vadd.f32 %v2380, 1.0
        %v2542 = vlog2.pop %v2541
        %v2543 = vmul.f32 %v2542, 0.6931472
        %v2544 = vmul.f32 -0.5, %v2380
        %v2545 = vadd.f32 %v2544, 1.0
        %v2546 = vmul.f32 %v2545, %v2380
        %v2547 = vand.u32 2147483647, %v2380
        %vm2548 = vcmp.lt.f32.partialorder %v2547, 0.0004427343
        %v2549 = vsel %vm2548, %v2546, %v2543
        %v2550 = vadd.f32 %v2382, 1.0
        %v2551 = vlog2.pop %v2550
        %v2552 = vmul.f32 %v2551, 0.6931472
        %v2553 = vmul.f32 -0.5, %v2382
        %v2554 = vadd.f32 %v2553, 1.0
        %v2555 = vmul.f32 %v2554, %v2382
        %v2556 = vand.u32 2147483647, %v2382
        %vm2557 = vcmp.lt.f32.partialorder %v2556, 0.0004427343
        %v2558 = vsel %vm2557, %v2555, %v2552
        %v2559 = vadd.f32 %v2384, 1.0
        %v2560 = vlog2.pop %v2559
        %v2561 = vmul.f32 %v2560, 0.6931472
        %v2562 = vmul.f32 -0.5, %v2384
        %v2563 = vadd.f32 %v2562, 1.0
        %v2564 = vmul.f32 %v2563, %v2384
        %v2565 = vand.u32 2147483647, %v2384
        %vm2566 = vcmp.lt.f32.partialorder %v2565, 0.0004427343
        %v2567 = vsel %vm2566, %v2564, %v2561
        %v2568 = vadd.f32 %v2386, 1.0
        %v2569 = vlog2.pop %v2568
        %v2570 = vmul.f32 %v2569, 0.6931472
        %v2571 = vmul.f32 -0.5, %v2386
        %v2572 = vadd.f32 %v2571, 1.0
        %v2573 = vmul.f32 %v2572, %v2386
        %v2574 = vand.u32 2147483647, %v2386
        %vm2575 = vcmp.lt.f32.partialorder %v2574, 0.0004427343
        %v2576 = vsel %vm2575, %v2573, %v2570
        %v2577 = vadd.f32 %v2388, 1.0
        %v2578 = vlog2.pop %v2577
        %v2579 = vmul.f32 %v2578, 0.6931472
        %v2580 = vmul.f32 -0.5, %v2388
        %v2581 = vadd.f32 %v2580, 1.0
        %v2582 = vmul.f32 %v2581, %v2388
        %v2583 = vand.u32 2147483647, %v2388
        %vm2584 = vcmp.lt.f32.partialorder %v2583, 0.0004427343
        %v2585 = vsel %vm2584, %v2582, %v2579
        %v2586 = vadd.f32 %v2390, 1.0
        %v2587 = vlog2.pop %v2586
        %v2588 = vmul.f32 %v2587, 0.6931472
        %v2589 = vmul.f32 -0.5, %v2390
        %v2590 = vadd.f32 %v2589, 1.0
        %v2591 = vmul.f32 %v2590, %v2390
        %v2592 = vand.u32 2147483647, %v2390
        %vm2593 = vcmp.lt.f32.partialorder %v2592, 0.0004427343
        %v2594 = vsel %vm2593, %v2591, %v2588
        %v2595 = vadd.f32 %v2392, 1.0
        %v2596 = vlog2.pop %v2595
        %v2597 = vmul.f32 %v2596, 0.6931472
        %v2598 = vmul.f32 -0.5, %v2392
        %v2599 = vadd.f32 %v2598, 1.0
        %v2600 = vmul.f32 %v2599, %v2392
        %v2601 = vand.u32 2147483647, %v2392
        %vm2602 = vcmp.lt.f32.partialorder %v2601, 0.0004427343
        %v2603 = vsel %vm2602, %v2600, %v2597
        %v2604 = vadd.f32 %v2394, 1.0
        %v2605 = vlog2.pop %v2604
        %v2606 = vmul.f32 %v2605, 0.6931472
        %v2607 = vmul.f32 -0.5, %v2394
        %v2608 = vadd.f32 %v2607, 1.0
        %v2609 = vmul.f32 %v2608, %v2394
        %v2610 = vand.u32 2147483647, %v2394
        %vm2611 = vcmp.lt.f32.partialorder %v2610, 0.0004427343
        %v2612 = vsel %vm2611, %v2609, %v2606
        %v2613 = vadd.f32 %v2396, 1.0
        %v2614 = vlog2.pop %v2613
        %v2615 = vmul.f32 %v2614, 0.6931472
        %v2616 = vmul.f32 -0.5, %v2396
        %v2617 = vadd.f32 %v2616, 1.0
        %v2618 = vmul.f32 %v2617, %v2396
        %v2619 = vand.u32 2147483647, %v2396
        %vm2620 = vcmp.lt.f32.partialorder %v2619, 0.0004427343
        %v2621 = vsel %vm2620, %v2618, %v2615
        %v2622 = vadd.f32 %v2398, 1.0
        %v2623 = vlog2.pop %v2622
        %v2624 = vmul.f32 %v2623, 0.6931472
        %v2625 = vmul.f32 -0.5, %v2398
        %v2626 = vadd.f32 %v2625, 1.0
        %v2627 = vmul.f32 %v2626, %v2398
        %v2628 = vand.u32 2147483647, %v2398
        %vm2629 = vcmp.lt.f32.partialorder %v2628, 0.0004427343
        %v2630 = vsel %vm2629, %v2627, %v2624
        %v2631 = vadd.f32 %v2400, 1.0
        %v2632 = vlog2.pop %v2631
        %v2633 = vmul.f32 %v2632, 0.6931472
        %v2634 = vmul.f32 -0.5, %v2400
        %v2635 = vadd.f32 %v2634, 1.0
        %v2636 = vmul.f32 %v2635, %v2400
        %v2637 = vand.u32 2147483647, %v2400
        %vm2638 = vcmp.lt.f32.partialorder %v2637, 0.0004427343
        %v2639 = vsel %vm2638, %v2636, %v2633
        %v2640 = vadd.f32 %v2402, 1.0
        %v2641 = vlog2.pop %v2640
        %v2642 = vmul.f32 %v2641, 0.6931472
        %v2643 = vmul.f32 -0.5, %v2402
        %v2644 = vadd.f32 %v2643, 1.0
        %v2645 = vmul.f32 %v2644, %v2402
        %v2646 = vand.u32 2147483647, %v2402
        %vm2647 = vcmp.lt.f32.partialorder %v2646, 0.0004427343
        %v2648 = vsel %vm2647, %v2645, %v2642
        %v2649 = vadd.f32 %v2404, 1.0
        %v2650 = vlog2.pop %v2649
        %v2651 = vmul.f32 %v2650, 0.6931472
        %v2652 = vmul.f32 -0.5, %v2404
        %v2653 = vadd.f32 %v2652, 1.0
        %v2654 = vmul.f32 %v2653, %v2404
        %v2655 = vand.u32 2147483647, %v2404
        %vm2656 = vcmp.lt.f32.partialorder %v2655, 0.0004427343
        %v2657 = vsel %vm2656, %v2654, %v2651
        %v2658 = vadd.f32 %v2406, 1.0
        %v2659 = vlog2.pop %v2658
        %v2660 = vmul.f32 %v2659, 0.6931472
        %v2661 = vmul.f32 -0.5, %v2406
        %v2662 = vadd.f32 %v2661, 1.0
        %v2663 = vmul.f32 %v2662, %v2406
        %v2664 = vand.u32 2147483647, %v2406
        %vm2665 = vcmp.lt.f32.partialorder %v2664, 0.0004427343
        %v2666 = vsel %vm2665, %v2663, %v2660
        %v2667 = vadd.f32 %v2408, 1.0
        %v2668 = vlog2.pop %v2667
        %v2669 = vmul.f32 %v2668, 0.6931472
        %v2670 = vmul.f32 -0.5, %v2408
        %v2671 = vadd.f32 %v2670, 1.0
        %v2672 = vmul.f32 %v2671, %v2408
        %v2673 = vand.u32 2147483647, %v2408
        %vm2674 = vcmp.lt.f32.partialorder %v2673, 0.0004427343
        %v2675 = vsel %vm2674, %v2672, %v2669
        %v2676 = vadd.f32 %v2410, 1.0
        %v2677 = vlog2.pop %v2676
        %v2678 = vmul.f32 %v2677, 0.6931472
        %v2679 = vmul.f32 -0.5, %v2410
        %v2680 = vadd.f32 %v2679, 1.0
        %v2681 = vmul.f32 %v2680, %v2410
        %v2682 = vand.u32 2147483647, %v2410
        %vm2683 = vcmp.lt.f32.partialorder %v2682, 0.0004427343
        %v2684 = vsel %vm2683, %v2681, %v2678
        %v2685 = vadd.f32 %v2412, 1.0
        %v2686 = vlog2.pop %v2685
        %v2687 = vmul.f32 %v2686, 0.6931472
        %v2688 = vmul.f32 -0.5, %v2412
        %v2689 = vadd.f32 %v2688, 1.0
        %v2690 = vmul.f32 %v2689, %v2412
        %v2691 = vand.u32 2147483647, %v2412
        %vm2692 = vcmp.lt.f32.partialorder %v2691, 0.0004427343
        %v2693 = vsel %vm2692, %v2690, %v2687
        %v2694 = vadd.f32 %v2414, 1.0
        %v2695 = vlog2.pop %v2694
        %v2696 = vmul.f32 %v2695, 0.6931472
        %v2697 = vmul.f32 -0.5, %v2414
        %v2698 = vadd.f32 %v2697, 1.0
        %v2699 = vmul.f32 %v2698, %v2414
        %v2700 = vand.u32 2147483647, %v2414
        %vm2701 = vcmp.lt.f32.partialorder %v2700, 0.0004427343
        %v2702 = vsel %vm2701, %v2699, %v2696
        %v2703 = vadd.f32 %v2255, %v2423
        %v2704 = vadd.f32 %v2256, %v2432
        %v2705 = vadd.f32 %v2257, %v2441
        %v2706 = vadd.f32 %v2258, %v2450
        %v2707 = vadd.f32 %v2259, %v2459
        %v2708 = vadd.f32 %v2260, %v2468
        %v2709 = vadd.f32 %v2261, %v2477
        %v2710 = vadd.f32 %v2262, %v2486
        %v2711 = vadd.f32 %v2263, %v2495
        %v2712 = vadd.f32 %v2264, %v2504
        %v2713 = vadd.f32 %v2265, %v2513
        %v2714 = vadd.f32 %v2266, %v2522
        %v2715 = vadd.f32 %v2267, %v2531
        %v2716 = vadd.f32 %v2268, %v2540
        %v2717 = vadd.f32 %v2269, %v2549
        %v2718 = vadd.f32 %v2270, %v2558
        %v2719 = vadd.f32 %v2271, %v2567
        %v2720 = vadd.f32 %v2272, %v2576
        %v2721 = vadd.f32 %v2273, %v2585
        %v2722 = vadd.f32 %v2274, %v2594
        %v2723 = vadd.f32 %v2275, %v2603
        %v2724 = vadd.f32 %v2276, %v2612
        %v2725 = vadd.f32 %v2277, %v2621
        %v2726 = vadd.f32 %v2278, %v2630
        %v2727 = vadd.f32 %v2279, %v2639
        %v2728 = vadd.f32 %v2280, %v2648
        %v2729 = vadd.f32 %v2281, %v2657
        %v2730 = vadd.f32 %v2282, %v2666
        %v2731 = vadd.f32 %v2283, %v2675
        %v2732 = vadd.f32 %v2284, %v2684
        %v2733 = vadd.f32 %v2285, %v2693
        %v2734 = vadd.f32 %v2286, %v2702
        %2735 = vst [vmem:[%s265] sm:$0xff] %v2703
        %2736 = vst [vmem:[%s265 + $0x8] sm:$0xff] %v2704
        %2737 = vst [vmem:[%s265 + $0x10] sm:$0xff] %v2705
        %2738 = vst [vmem:[%s265 + $0x18] sm:$0xff] %v2706
        %2739 = vst [vmem:[%s265 + $0x20] sm:$0xff] %v2707
        %2740 = vst [vmem:[%s265 + $0x28] sm:$0xff] %v2708
        %2741 = vst [vmem:[%s265 + $0x30] sm:$0xff] %v2709
        %2742 = vst [vmem:[%s265 + $0x38] sm:$0xff] %v2710
        %2743 = vst [vmem:[%s265 + $0x40] sm:$0xff] %v2711
        %2744 = vst [vmem:[%s265 + $0x48] sm:$0xff] %v2712
        %2745 = vst [vmem:[%s265 + $0x50] sm:$0xff] %v2713
        %2746 = vst [vmem:[%s265 + $0x58] sm:$0xff] %v2714
        %2747 = vst [vmem:[%s265 + $0x60] sm:$0xff] %v2715
        %2748 = vst [vmem:[%s265 + $0x68] sm:$0xff] %v2716
        %2749 = vst [vmem:[%s265 + $0x70] sm:$0xff] %v2717
        %2750 = vst [vmem:[%s265 + $0x78] sm:$0xff] %v2718
        %2751 = vst [vmem:[%s265 + $0x80] sm:$0xff] %v2719
        %2752 = vst [vmem:[%s265 + $0x88] sm:$0xff] %v2720
        %2753 = vst [vmem:[%s265 + $0x90] sm:$0xff] %v2721
        %2754 = vst [vmem:[%s265 + $0x98] sm:$0xff] %v2722
        %2755 = vst [vmem:[%s265 + $0xa0] sm:$0xff] %v2723
        %2756 = vst [vmem:[%s265 + $0xa8] sm:$0xff] %v2724
        %2757 = vst [vmem:[%s265 + $0xb0] sm:$0xff] %v2725
        %2758 = vst [vmem:[%s265 + $0xb8] sm:$0xff] %v2726
        %2759 = vst [vmem:[%s265 + $0xc0] sm:$0xff] %v2727
        %2760 = vst [vmem:[%s265 + $0xc8] sm:$0xff] %v2728
        %2761 = vst [vmem:[%s265 + $0xd0] sm:$0xff] %v2729
        %2762 = vst [vmem:[%s265 + $0xd8] sm:$0xff] %v2730
        %2763 = vst [vmem:[%s265 + $0xe0] sm:$0xff] %v2731
        %2764 = vst [vmem:[%s265 + $0xe8] sm:$0xff] %v2732
        %2765 = vst [vmem:[%s265 + $0xf0] sm:$0xff] %v2733
        %2766 = vst [vmem:[%s265 + $0xf8] sm:$0xff] %v2734
      $region40: #{simplenet_forward.7} parent=31 // pred_fallthru
        _
      %s2767 = smul.u32 32, %s19
      %p2768 = scmp.lt.s32.totalorder %s2767, 63
      %s2769 = scalar_select %p2768, %s2767, 63
      %p2770 = scmp.lt.s32.totalorder %s20, 0
      %s2771 = scalar_select %p2770, %s20, 0
      %s2772 = sadd.s32 %s2771, %s2769
      %s2773 = smul.addr %s2772, 8
      %s2774 = scalar_lea.vmem %s3, %s2773
      // Predicated region
      $region41: #{simplenet_forward.7} parent=31 // pred_check
        %p2775 = pneg %p135
      $region42: #{simplenet_forward.7} parent=31 // pred_check_branch
        %2777 = sbr.rel (%p2775) target = $region44
      $region43: #{simplenet_forward.7} parent=31 // pred_region
        %s2778 = smul.u32 32, %s19
      $region44: #{simplenet_forward.7} parent=31 // pred_fallthru
        _
    $region32: #{simplenet_forward.7} parent=5 // pred_fallthru
      _
    %p2779 = scmp.le.s32.totalorder 2, %s9
    // Predicated region
    $region45: #{simplenet_forward.7} parent=5 // pred_check
      %p2780 = pneg %p2779
    $region46: #{simplenet_forward.7} parent=5 // pred_check_branch
      %2782 = sbr.rel (%p2780) target = $region48
    $region47: #{simplenet_forward.7} parent=5 // pred_region
      %s2783 = ssub.s32 %s9, 2
      // Predicated region
      $region49: #{simplenet_forward.7} parent=47 // pred_check
        %p2784 = pneg %p141
      $region50: #{simplenet_forward.7} parent=47 // pred_check_branch
        %2786 = sbr.rel (%p2784) target = $region52
      $region51: #{simplenet_forward.7} parent=47 // pred_region
        %s2787 = smul.u32 32, %s22
        %p2788 = scmp.lt.s32.totalorder %s2787, 63
        %s2789 = scalar_select %p2788, %s2787, 63
        %p2790 = scmp.lt.s32.totalorder %s23, 0
        %s2791 = scalar_select %p2790, %s23, 0
        %s2792 = sadd.s32 %s2791, %s2789
        %s2793 = smul.addr %s2792, 8
        %s2794 = scalar_lea.vmem %s3, %s2793
      $region52: #{simplenet_forward.7} parent=47 // pred_fallthru
        _
    $region48: #{simplenet_forward.7} parent=5 // pred_fallthru
      _
  $region6: #{simplenet_forward.7} parent=0 // loop_footer
    %s13 = sadd.s32 1, %s9
  $region7: #{simplenet_forward.7} parent=0 // loop_footer_branch
    %8 = sbr.rel target = $region3
  $region8: #{simplenet_forward.7} parent=0 // loop_exit
    _

</llo_original>
